<compile_context>
chip_gen: v7x
topology: tpu7x:2x2x1
jax: 0.10.0
libtpu: 0.0.40
codegen_flags: <defaults>
</compile_context>

<pallas_src>
import functools

import jax
import jax.numpy as jnp
from jax.experimental import pallas as pl
from jax.experimental.pallas import tpu as pltpu

SUBLANE = 8     # row / K-block padding granularity

# ----------------------------------------------------------------------------
# Static graph schema (matches the PyTorch module)
# ----------------------------------------------------------------------------
EDGE_TYPES = (
    ("task", "depends_on", "task", "max"),
    ("task", "rev_depends_on", "task", "add"),
    ("task", "mapped_to", "pe", "add"),
    ("pe", "rev_mapped_to", "task", "add"),
    ("router", "link", "router", "add"),
    ("router", "interface", "pe", "add"),
    ("pe", "rev_interface", "router", "add"),
)
EDGE_AGGR = {(s, r, d): a for (s, r, d, a) in EDGE_TYPES}
# Order below fixes the K-block order of the packed weights AND the in-kernel
# message concatenation order -- they must stay in sync.
DST_GROUPS = {
    "task": (("task", "depends_on", "task"),
             ("task", "rev_depends_on", "task"),
             ("pe", "rev_mapped_to", "task")),
    "pe": (("task", "mapped_to", "pe"),
           ("router", "interface", "pe")),
    "router": (("router", "link", "router"),
               ("pe", "rev_interface", "router")),
}


def _round_up(n, m):
    return ((n + m - 1) // m) * m


def _pad2(a, rows, cols):
    return jnp.pad(a, ((0, rows - a.shape[0]), (0, cols - a.shape[1])))


# ----------------------------------------------------------------------------
# Fused Pallas kernel: all conv layers + MLP head, everything VMEM-resident
# ----------------------------------------------------------------------------
def _fused_hetero_gnn_kernel(
        num_layers, n_t, n_p, n_r,
        # stacked node features, (n_t + n_p + n_r, fw)
        x_all_ref,
        # max-aggr adjacency (n_t, n_t) and per-source stacked add-aggr
        # adjacencies: (n_t+n_p, n_t), (n_t+n_r, n_p), (n_p+n_r, n_r)
        adj_dep_ref, adj_src_t_ref, adj_src_p_ref, adj_src_r_ref,
        # packed conv weights (L, 10*fw, fw) and biases (L, 3, fw)
        w_conv_ref, b_conv_ref,
        # MLP head weights (3, fw, fw) and biases (3, 1, fw)
        w_mlp_ref, b_mlp_ref,
        # output slab (n_t + n_p + n_r, fw)
        out_ref):
    f32 = jnp.float32
    fw = x_all_ref.shape[1]
    kt, kp = 4 * fw, 3 * fw          # task conv K, pe/router conv K

    xt = x_all_ref[0:n_t, :]
    xp = x_all_ref[n_t:n_t + n_p, :]
    xr = x_all_ref[n_t + n_p:n_t + n_p + n_r, :]

    adj_dep = adj_dep_ref[...]
    adj_src_t = adj_src_t_ref[...]
    adj_src_p = adj_src_p_ref[...]
    adj_src_r = adj_src_r_ref[...]

    def max_aggr(adj, xs):
        # Running 2-D select/max over source rows: no (n_dst, n_src, f) 3-D
        # temporaries, no cross-sublane axis=1 reductions -- plain VPU work.
        # Relies on padded adjacency rows/cols being exactly zero (guaranteed
        # by build_adjacencies: scatter-add onto zeros with real indices only).
        n_dst, n_src = adj.shape
        run = jnp.full((n_dst, xs.shape[1]), -jnp.inf, f32)
        for j in range(n_src):                       # static unroll (tiny)
            row = xs[j:j + 1, :]                     # (1, fw) source row
            sel = adj[:, j:j + 1] > 0.0              # (n_dst, 1) neighbour mask
            run = jnp.maximum(run, jnp.where(sel, row, -jnp.inf))
        return jnp.where(run == -jnp.inf, 0.0, run)  # no-neighbour rows -> 0

    def conv_out(msgs, w, b):
        # One wide-K MXU matmul per (layer, dst type):
        #   concat([msg_e..., x_dst]) @ vstack([W_rel_e..., sum_e W_root_e]) + sum_e b_rel_e
        k = jnp.concatenate(msgs, axis=1)
        return jnp.maximum(jnp.dot(k, w, preferred_element_type=f32) + b, 0.0)

    for l in range(num_layers):                      # static unroll (depth 2)
        w_l = w_conv_ref[l]                          # (10*fw, fw)
        b_l = b_conv_ref[l]                          # (3, fw)

        # "add" aggregations fused per SOURCE type: 3 matmuls instead of 6.
        m_src_t = jnp.dot(adj_src_t, xt, preferred_element_type=f32)  # (n_t+n_p, fw)
        m_src_p = jnp.dot(adj_src_p, xp, preferred_element_type=f32)  # (n_t+n_r, fw)
        m_src_r = jnp.dot(adj_src_r, xr, preferred_element_type=f32)  # (n_p+n_r, fw)
        msg_dep = max_aggr(adj_dep, xt)              # (task, depends_on, task) "max"

        msg_rdep, msg_map = m_src_t[0:n_t], m_src_t[n_t:n_t + n_p]
        msg_rmap, msg_rifc = m_src_p[0:n_t], m_src_p[n_t:n_t + n_r]
        msg_ifc, msg_link = m_src_r[0:n_p], m_src_r[n_p:n_p + n_r]

        new_t = conv_out([msg_dep, msg_rdep, msg_rmap, xt],
                         w_l[0:kt, :], b_l[0:1, :])
        new_p = conv_out([msg_map, msg_ifc, xp],
                         w_l[kt:kt + kp, :], b_l[1:2, :])
        new_r = conv_out([msg_link, msg_rifc, xr],
                         w_l[kt + kp:kt + 2 * kp, :], b_l[2:3, :])
        xt, xp, xr = new_t, new_p, new_r

    # MLP head on the already VMEM-resident task features.
    # TODO(synk): PyG MLP default batch_norm treated as identity (eval mode).
    h = jnp.maximum(jnp.dot(xt, w_mlp_ref[0], preferred_element_type=f32) + b_mlp_ref[0], 0.0)
    h = jnp.maximum(jnp.dot(h, w_mlp_ref[1], preferred_element_type=f32) + b_mlp_ref[1], 0.0)
    t_out = jnp.dot(h, w_mlp_ref[2], preferred_element_type=f32) + b_mlp_ref[2]

    # Sublane-aligned full-width stores into a single output slab.
    out_ref[0:n_t, :] = t_out
    out_ref[n_t:n_t + n_p, :] = xp
    out_ref[n_t + n_p:n_t + n_p + n_r, :] = xr


# ----------------------------------------------------------------------------
# Parameters (deterministic synthetic init, shapes follow the PyTorch __init__)
# ----------------------------------------------------------------------------
def init_params(key, hidden, num_layers, f_task, proj=16):
    params = {}
    key, k_pe, k_r = jax.random.split(key, 3)
    params["pe_embedding"] = jax.random.normal(k_pe, (9, proj), jnp.float32)
    params["router_embedding"] = jax.random.normal(k_r, (9, proj), jnp.float32)

    in_dims = {"task": f_task, "pe": proj, "router": proj}
    convs = []
    for l in range(num_layers):
        layer = {}
        for (src, rel, dst, _aggr) in EDGE_TYPES:
            key, k1, k2, k3 = jax.random.split(key, 4)
            d_src = in_dims[src] if l == 0 else hidden
            d_dst = in_dims[dst] if l == 0 else hidden
            layer[(src, rel, dst)] = {
                "w_rel": jax.random.uniform(k1, (d_src, hidden), jnp.float32, -0.1, 0.1),
                "b_rel": jax.random.uniform(k2, (1, hidden), jnp.float32, -0.1, 0.1),
                "w_root": jax.random.uniform(k3, (d_dst, hidden), jnp.float32, -0.1, 0.1),
            }
        convs.append(layer)
    params["convs"] = convs

    mlp_dims = [hidden, hidden // 2, hidden // 2, 2]
    mlp = []
    for i in range(3):
        key, kw, kb = jax.random.split(key, 3)
        mlp.append({
            "w": jax.random.uniform(kw, (mlp_dims[i], mlp_dims[i + 1]), jnp.float32, -0.1, 0.1),
            "b": jax.random.uniform(kb, (1, mlp_dims[i + 1]), jnp.float32, -0.1, 0.1),
        })
    params["mlp"] = mlp
    return params


# ----------------------------------------------------------------------------
# One-time packing (hoisted out of the per-forward hot path)
# ----------------------------------------------------------------------------
def pack_params(params, fw):
    """Pack all conv weights into (L, 10*fw, fw) / biases (L, 3, fw), MLP into
    (3, fw, fw) / (3, 1, fw).  Block order == DST_GROUPS order."""
    ws, bs = [], []
    for layer in params["convs"]:
        w_blocks, b_rows = [], []
        for dst, ets in DST_GROUPS.items():           # task, pe, router
            for et in ets:
                w_blocks.append(_pad2(layer[et]["w_rel"], fw, fw))
            w_root_sum = sum(layer[et]["w_root"] for et in ets)  # sum_e x@W_e == x@sum_e W_e
            w_blocks.append(_pad2(w_root_sum, fw, fw))
            b_rows.append(_pad2(sum(layer[et]["b_rel"] for et in ets), 1, fw))
        ws.append(jnp.concatenate(w_blocks, axis=0))   # (10*fw, fw)
        bs.append(jnp.concatenate(b_rows, axis=0))     # (3, fw)
    return {
        "w_conv": jnp.stack(ws),                                          # (L, 10*fw, fw)
        "b_conv": jnp.stack(bs),                                          # (L, 3, fw)
        "w_mlp": jnp.stack([_pad2(p["w"], fw, fw) for p in params["mlp"]]),  # (3, fw, fw)
        "b_mlp": jnp.stack([_pad2(p["b"], 1, fw) for p in params["mlp"]]),   # (3, 1, fw)
    }


def build_adjacencies(edge_index_dict, n_pad):
    """Densify edge lists into zero-padded edge-count matrices and stack the
    'add'-aggregated ones per SOURCE node type.  Runs ONCE per static topology."""
    def dense(et):
        src, _rel, dst = et
        ei = edge_index_dict[et]   # (2, E): row0 = src idx, row1 = dst idx
        a = jnp.zeros((n_pad[dst], n_pad[src]), jnp.float32)
        return a.at[ei[1], ei[0]].add(1.0)   # padded rows/cols stay exactly zero

    adj_dep = dense(("task", "depends_on", "task"))
    adj_src_task = jnp.concatenate([dense(("task", "rev_depends_on", "task")),
                                    dense(("task", "mapped_to", "pe"))], axis=0)
    adj_src_pe = jnp.concatenate([dense(("pe", "rev_mapped_to", "task")),
                                  dense(("pe", "rev_interface", "router"))], axis=0)
    adj_src_router = jnp.concatenate([dense(("router", "interface", "pe")),
                                      dense(("router", "link", "router"))], axis=0)
    return adj_dep, adj_src_task, adj_src_pe, adj_src_router


# ----------------------------------------------------------------------------
# Forward pass: one fused pallas_call, then cheap slicing of the output slab
# ----------------------------------------------------------------------------
def hetero_gnn_forward(params, packed, adjs, x_task, batch_size, hidden, num_layers, fw):
    xt = x_task
    xp = jnp.tile(params["pe_embedding"], (batch_size, 1))
    xr = jnp.tile(params["router_embedding"], (batch_size, 1))

    n_task, n_pe, n_router = xt.shape[0], xp.shape[0], xr.shape[0]
    nt_p = _round_up(n_task, SUBLANE)
    np_p = _round_up(n_pe, SUBLANE)
    nr_p = _round_up(n_router, SUBLANE)
    total = nt_p + np_p + nr_p

    x_all = jnp.concatenate(
        [_pad2(xt, nt_p, fw), _pad2(xp, np_p, fw), _pad2(xr, nr_p, fw)], axis=0)

    adj_dep, adj_src_t, adj_src_p, adj_src_r = adjs
    args = (x_all, adj_dep, adj_src_t, adj_src_p, adj_src_r,
            packed["w_conv"], packed["b_conv"], packed["w_mlp"], packed["b_mlp"])

    # Advisory cost estimate so XLA can schedule around this us-scale call.
    def mm(m, k, n):
        return 2 * m * k * n
    flops = num_layers * (mm(nt_p + np_p, nt_p, fw) + mm(nt_p + nr_p, np_p, fw)
                          + mm(np_p + nr_p, nr_p, fw)
                          + mm(nt_p, 4 * fw, fw) + mm(np_p, 3 * fw, fw)
                          + mm(nr_p, 3 * fw, fw))
    flops += 3 * mm(nt_p, fw, fw)
    bytes_accessed = int(sum(a.size * a.dtype.itemsize for a in args)) + total * fw * 4

    kernel = functools.partial(_fused_hetero_gnn_kernel, num_layers, nt_p, np_p, nr_p)
    slab = pl.pallas_call(
        kernel,
        out_shape=jax.ShapeDtypeStruct((total, fw), jnp.float32),
        # no grid: single invocation, whole problem resident in VMEM
        in_specs=[pl.BlockSpec(memory_space=pltpu.MemorySpace.VMEM) for _ in args],
        out_specs=pl.BlockSpec(memory_space=pltpu.MemorySpace.VMEM),
        cost_estimate=pl.CostEstimate(flops=int(flops), transcendentals=0,
                                      bytes_accessed=bytes_accessed),
    )(*args)

    return {
        "task": slab[:n_task, :2],
        "pe": slab[nt_p:nt_p + n_pe, :hidden],
        "router": slab[nt_p + np_p:nt_p + np_p + n_router, :hidden],
    }


# ----------------------------------------------------------------------------
# Pure-JAX reference (unpadded, per-edge-type accumulation) for validation
# ----------------------------------------------------------------------------
def _dot_hi(a, b):
    return jnp.dot(a, b, precision=jax.lax.Precision.HIGHEST)


def hetero_gnn_reference(params, x_task, edge_index_dict, batch_size):
    x = {
        "task": x_task,
        "pe": jnp.tile(params["pe_embedding"], (batch_size, 1)),
        "router": jnp.tile(params["router_embedding"], (batch_size, 1)),
    }
    nn = {k: v.shape[0] for k, v in x.items()}
    for layer in params["convs"]:
        new_x = {}
        for dst, ets in DST_GROUPS.items():
            hidden = layer[ets[0]]["w_rel"].shape[1]
            acc = jnp.zeros((nn[dst], hidden), jnp.float32)
            for et in ets:
                src = et[0]
                ei = edge_index_dict[et]
                p = layer[et]
                adj = (jnp.zeros((nn[dst], nn[src]), jnp.float32)
                       .at[ei[1], ei[0]].add(1.0))
                if EDGE_AGGR[et] == "add":
                    msg = _dot_hi(adj, x[src])
                else:  # max
                    mask = adj > 0
                    masked = jnp.where(mask[:, :, None], x[src][None, :, :], -jnp.inf)
                    msg = jnp.max(masked, axis=1)
                    msg = jnp.where(jnp.any(mask, axis=1, keepdims=True), msg, 0.0)
                acc = acc + _dot_hi(msg, p["w_rel"]) + p["b_rel"] + _dot_hi(x[dst], p["w_root"])
            new_x[dst] = jax.nn.relu(acc)
        x = new_x
    h = x["task"]
    for i, p in enumerate(params["mlp"]):
        h = _dot_hi(h, p["w"]) + p["b"]
        if i < 2:
            h = jax.nn.relu(h)
    x["task"] = h
    return x


# ----------------------------------------------------------------------------
# Demo
# ----------------------------------------------------------------------------
if __name__ == "__main__":
    hidden_channels = 32
    num_mpn_layers = 2
    batch_size = 2
    n_task, f_task = 24, 8
    proj = 16
    n_pe = 9 * batch_size
    n_router = 9 * batch_size

    root = jax.random.PRNGKey(0)
    k_params, k_x, k_edges = jax.random.split(root, 3)
    params = init_params(k_params, hidden_channels, num_mpn_layers, f_task, proj)
    x_task = jax.random.normal(k_x, (n_task, f_task), jnp.float32)

    ks = jax.random.split(k_edges, 6)
    dep_src = jax.random.randint(ks[0], (40,), 0, n_task)
    dep_dst = jax.random.randint(ks[1], (40,), 0, n_task)
    map_dst = jax.random.randint(ks[2], (n_task,), 0, n_pe)
    link_src = jax.random.randint(ks[3], (30,), 0, n_router)
    link_dst = jax.random.randint(ks[4], (30,), 0, n_router)
    ifc_src = jax.random.randint(ks[5], (n_pe,), 0, n_router)
    task_ids = jnp.arange(n_task)
    pe_ids = jnp.arange(n_pe)

    edge_index_dict = {
        ("task", "depends_on", "task"): jnp.stack([dep_src, dep_dst]),
        ("task", "rev_depends_on", "task"): jnp.stack([dep_dst, dep_src]),
        ("task", "mapped_to", "pe"): jnp.stack([task_ids, map_dst]),
        ("pe", "rev_mapped_to", "task"): jnp.stack([map_dst, task_ids]),
        ("router", "link", "router"): jnp.stack([link_src, link_dst]),
        ("router", "interface", "pe"): jnp.stack([ifc_src, pe_ids]),
        ("pe", "rev_interface", "router"): jnp.stack([pe_ids, ifc_src]),
    }

    # One-time (per static topology / per checkpoint) preprocessing, hoisted
    # out of the per-forward hot path.
    fw = _round_up(max(f_task, proj, hidden_channels), SUBLANE)   # 32 lanes
    n_nodes_pad = {
        "task": _round_up(n_task, SUBLANE),
        "pe": _round_up(n_pe, SUBLANE),
        "router": _round_up(n_router, SUBLANE),
    }
    adjs = build_adjacencies(edge_index_dict, n_nodes_pad)
    packed = pack_params(params, fw)

    out = hetero_gnn_forward(params, packed, adjs, x_task,
                             batch_size, hidden_channels, num_mpn_layers, fw)
    jax.block_until_ready(out)

    assert out["task"].shape == (n_task, 2)
    assert out["pe"].shape == (n_pe, hidden_channels)
    assert out["router"].shape == (n_router, hidden_channels)
    assert all(bool(jnp.all(jnp.isfinite(v))) for v in out.values())

    ref = hetero_gnn_reference(params, x_task, edge_index_dict, batch_size)
    # Tolerance absorbs MXU f32 matmul pass decomposition vs the HIGHEST
    # precision pure-JAX reference.
    for k in ("task", "pe", "router"):
        assert bool(jnp.allclose(out[k], ref[k], atol=5e-3, rtol=5e-3)), (
            f"mismatch on '{k}': max abs err "
            f"{float(jnp.max(jnp.abs(out[k] - ref[k])))}")

    print("KERNEL_OK")
</pallas_src>

<mosaic_0001>
module attributes {stable_mosaic.version = 11 : i64} {
  func.func @_fused_hetero_gnn_kernel(%arg0: memref<72x32xf32, #tpu.memory_space<vmem>>, %arg1: memref<24x24xf32, #tpu.memory_space<vmem>>, %arg2: memref<48x24xf32, #tpu.memory_space<vmem>>, %arg3: memref<48x24xf32, #tpu.memory_space<vmem>>, %arg4: memref<48x24xf32, #tpu.memory_space<vmem>>, %arg5: memref<2x320x32xf32, #tpu.memory_space<vmem>>, %arg6: memref<2x3x32xf32, #tpu.memory_space<vmem>>, %arg7: memref<3x32x32xf32, #tpu.memory_space<vmem>>, %arg8: memref<3x1x32xf32, #tpu.memory_space<vmem>>, %arg9: memref<72x32xf32, #tpu.memory_space<vmem>>) attributes {dimension_semantics = [], scalar_prefetch = 0 : i64, scratch_operands = 0 : i64, tpu.core_type = #tpu.core_type<tc>} {
    %c0 = arith.constant 0 : index
    %c0_0 = arith.constant 0 : index
    %0 = vector.load %arg0[%c0, %c0_0] : memref<72x32xf32, #tpu.memory_space<vmem>>, vector<24x32xf32>
    %c24 = arith.constant 24 : index
    %c0_1 = arith.constant 0 : index
    %1 = vector.load %arg0[%c24, %c0_1] : memref<72x32xf32, #tpu.memory_space<vmem>>, vector<24x32xf32>
    %c48 = arith.constant 48 : index
    %c0_2 = arith.constant 0 : index
    %2 = vector.load %arg0[%c48, %c0_2] : memref<72x32xf32, #tpu.memory_space<vmem>>, vector<24x32xf32>
    %c0_3 = arith.constant 0 : index
    %c0_4 = arith.constant 0 : index
    %3 = vector.load %arg1[%c0_3, %c0_4] : memref<24x24xf32, #tpu.memory_space<vmem>>, vector<24x24xf32>
    %c0_5 = arith.constant 0 : index
    %c0_6 = arith.constant 0 : index
    %4 = vector.load %arg2[%c0_5, %c0_6] : memref<48x24xf32, #tpu.memory_space<vmem>>, vector<48x24xf32>
    %c0_7 = arith.constant 0 : index
    %c0_8 = arith.constant 0 : index
    %5 = vector.load %arg3[%c0_7, %c0_8] : memref<48x24xf32, #tpu.memory_space<vmem>>, vector<48x24xf32>
    %c0_9 = arith.constant 0 : index
    %c0_10 = arith.constant 0 : index
    %6 = vector.load %arg4[%c0_9, %c0_10] : memref<48x24xf32, #tpu.memory_space<vmem>>, vector<48x24xf32>
    %c0_11 = arith.constant 0 : index
    %c0_12 = arith.constant 0 : index
    %c0_13 = arith.constant 0 : index
    %7 = vector.load %arg5[%c0_11, %c0_12, %c0_13] : memref<2x320x32xf32, #tpu.memory_space<vmem>>, vector<1x320x32xf32>
    %8 = vector.shape_cast %7 : vector<1x320x32xf32> to vector<320x32xf32>
    %c0_14 = arith.constant 0 : index
    %c0_15 = arith.constant 0 : index
    %c0_16 = arith.constant 0 : index
    %9 = vector.load %arg6[%c0_14, %c0_15, %c0_16] : memref<2x3x32xf32, #tpu.memory_space<vmem>>, vector<1x3x32xf32>
    %10 = vector.shape_cast %9 : vector<1x3x32xf32> to vector<3x32xf32>
    %cst = arith.constant dense<0.000000e+00> : vector<48x32xf32>
    %11 = tpu.matmul %4, %0, %cst {dimension_numbers = #tpu.dot_dimension_numbers<[1], [0], [0], [1], [0, 0, 1, 1], [], []>} : vector<48x24xf32>, vector<24x32xf32>, vector<48x32xf32> -> vector<48x32xf32>
    %cst_17 = arith.constant dense<0.000000e+00> : vector<48x32xf32>
    %12 = tpu.matmul %5, %1, %cst_17 {dimension_numbers = #tpu.dot_dimension_numbers<[1], [0], [0], [1], [0, 0, 1, 1], [], []>} : vector<48x24xf32>, vector<24x32xf32>, vector<48x32xf32> -> vector<48x32xf32>
    %cst_18 = arith.constant dense<0.000000e+00> : vector<48x32xf32>
    %13 = tpu.matmul %6, %2, %cst_18 {dimension_numbers = #tpu.dot_dimension_numbers<[1], [0], [0], [1], [0, 0, 1, 1], [], []>} : vector<48x24xf32>, vector<24x32xf32>, vector<48x32xf32> -> vector<48x32xf32>
    %cst_19 = arith.constant 0xFF800000 : f32
    %14 = vector.broadcast %cst_19 : f32 to vector<24x32xf32>
    %15 = vector.extract_strided_slice %0 {offsets = [0, 0], sizes = [1, 32], strides = [1, 1]} : vector<24x32xf32> to vector<1x32xf32>
    %16 = vector.extract_strided_slice %3 {offsets = [0, 0], sizes = [24, 1], strides = [1, 1]} : vector<24x24xf32> to vector<24x1xf32>
    %cst_20 = arith.constant 0.000000e+00 : f32
    %17 = vector.broadcast %cst_20 : f32 to vector<24x1xf32>
    %18 = arith.cmpf ogt, %16, %17 : vector<24x1xf32>
    %cst_21 = arith.constant 0xFF800000 : f32
    %19 = vector.shape_cast %18 : vector<24x1xi1> to vector<24x1xi1>
    %20 = vector.broadcast %19 : vector<24x1xi1> to vector<24x32xi1>
    %21 = vector.shape_cast %15 : vector<1x32xf32> to vector<1x32xf32>
    %22 = vector.broadcast %21 : vector<1x32xf32> to vector<24x32xf32>
    %23 = vector.broadcast %cst_21 : f32 to vector<24x32xf32>
    %24 = arith.select %20, %22, %23 : vector<24x32xi1>, vector<24x32xf32>
    %25 = arith.maximumf %14, %24 : vector<24x32xf32>
    %26 = vector.extract_strided_slice %0 {offsets = [1, 0], sizes = [1, 32], strides = [1, 1]} : vector<24x32xf32> to vector<1x32xf32>
    %27 = vector.extract_strided_slice %3 {offsets = [0, 1], sizes = [24, 1], strides = [1, 1]} : vector<24x24xf32> to vector<24x1xf32>
    %cst_22 = arith.constant 0.000000e+00 : f32
    %28 = vector.broadcast %cst_22 : f32 to vector<24x1xf32>
    %29 = arith.cmpf ogt, %27, %28 : vector<24x1xf32>
    %cst_23 = arith.constant 0xFF800000 : f32
    %30 = vector.shape_cast %29 : vector<24x1xi1> to vector<24x1xi1>
    %31 = vector.broadcast %30 : vector<24x1xi1> to vector<24x32xi1>
    %32 = vector.shape_cast %26 : vector<1x32xf32> to vector<1x32xf32>
    %33 = vector.broadcast %32 : vector<1x32xf32> to vector<24x32xf32>
    %34 = vector.broadcast %cst_23 : f32 to vector<24x32xf32>
    %35 = arith.select %31, %33, %34 : vector<24x32xi1>, vector<24x32xf32>
    %36 = arith.maximumf %25, %35 : vector<24x32xf32>
    %37 = vector.extract_strided_slice %0 {offsets = [2, 0], sizes = [1, 32], strides = [1, 1]} : vector<24x32xf32> to vector<1x32xf32>
    %38 = vector.extract_strided_slice %3 {offsets = [0, 2], sizes = [24, 1], strides = [1, 1]} : vector<24x24xf32> to vector<24x1xf32>
    %cst_24 = arith.constant 0.000000e+00 : f32
    %39 = vector.broadcast %cst_24 : f32 to vector<24x1xf32>
    %40 = arith.cmpf ogt, %38, %39 : vector<24x1xf32>
    %cst_25 = arith.constant 0xFF800000 : f32
    %41 = vector.shape_cast %40 : vector<24x1xi1> to vector<24x1xi1>
    %42 = vector.broadcast %41 : vector<24x1xi1> to vector<24x32xi1>
    %43 = vector.shape_cast %37 : vector<1x32xf32> to vector<1x32xf32>
    %44 = vector.broadcast %43 : vector<1x32xf32> to vector<24x32xf32>
    %45 = vector.broadcast %cst_25 : f32 to vector<24x32xf32>
    %46 = arith.select %42, %44, %45 : vector<24x32xi1>, vector<24x32xf32>
    %47 = arith.maximumf %36, %46 : vector<24x32xf32>
    %48 = vector.extract_strided_slice %0 {offsets = [3, 0], sizes = [1, 32], strides = [1, 1]} : vector<24x32xf32> to vector<1x32xf32>
    %49 = vector.extract_strided_slice %3 {offsets = [0, 3], sizes = [24, 1], strides = [1, 1]} : vector<24x24xf32> to vector<24x1xf32>
    %cst_26 = arith.constant 0.000000e+00 : f32
    %50 = vector.broadcast %cst_26 : f32 to vector<24x1xf32>
    %51 = arith.cmpf ogt, %49, %50 : vector<24x1xf32>
    %cst_27 = arith.constant 0xFF800000 : f32
    %52 = vector.shape_cast %51 : vector<24x1xi1> to vector<24x1xi1>
    %53 = vector.broadcast %52 : vector<24x1xi1> to vector<24x32xi1>
    %54 = vector.shape_cast %48 : vector<1x32xf32> to vector<1x32xf32>
    %55 = vector.broadcast %54 : vector<1x32xf32> to vector<24x32xf32>
    %56 = vector.broadcast %cst_27 : f32 to vector<24x32xf32>
    %57 = arith.select %53, %55, %56 : vector<24x32xi1>, vector<24x32xf32>
    %58 = arith.maximumf %47, %57 : vector<24x32xf32>
    %59 = vector.extract_strided_slice %0 {offsets = [4, 0], sizes = [1, 32], strides = [1, 1]} : vector<24x32xf32> to vector<1x32xf32>
    %60 = vector.extract_strided_slice %3 {offsets = [0, 4], sizes = [24, 1], strides = [1, 1]} : vector<24x24xf32> to vector<24x1xf32>
    %cst_28 = arith.constant 0.000000e+00 : f32
    %61 = vector.broadcast %cst_28 : f32 to vector<24x1xf32>
    %62 = arith.cmpf ogt, %60, %61 : vector<24x1xf32>
    %cst_29 = arith.constant 0xFF800000 : f32
    %63 = vector.shape_cast %62 : vector<24x1xi1> to vector<24x1xi1>
    %64 = vector.broadcast %63 : vector<24x1xi1> to vector<24x32xi1>
    %65 = vector.shape_cast %59 : vector<1x32xf32> to vector<1x32xf32>
    %66 = vector.broadcast %65 : vector<1x32xf32> to vector<24x32xf32>
    %67 = vector.broadcast %cst_29 : f32 to vector<24x32xf32>
    %68 = arith.select %64, %66, %67 : vector<24x32xi1>, vector<24x32xf32>
    %69 = arith.maximumf %58, %68 : vector<24x32xf32>
    %70 = vector.extract_strided_slice %0 {offsets = [5, 0], sizes = [1, 32], strides = [1, 1]} : vector<24x32xf32> to vector<1x32xf32>
    %71 = vector.extract_strided_slice %3 {offsets = [0, 5], sizes = [24, 1], strides = [1, 1]} : vector<24x24xf32> to vector<24x1xf32>
    %cst_30 = arith.constant 0.000000e+00 : f32
    %72 = vector.broadcast %cst_30 : f32 to vector<24x1xf32>
    %73 = arith.cmpf ogt, %71, %72 : vector<24x1xf32>
    %cst_31 = arith.constant 0xFF800000 : f32
    %74 = vector.shape_cast %73 : vector<24x1xi1> to vector<24x1xi1>
    %75 = vector.broadcast %74 : vector<24x1xi1> to vector<24x32xi1>
    %76 = vector.shape_cast %70 : vector<1x32xf32> to vector<1x32xf32>
    %77 = vector.broadcast %76 : vector<1x32xf32> to vector<24x32xf32>
    %78 = vector.broadcast %cst_31 : f32 to vector<24x32xf32>
    %79 = arith.select %75, %77, %78 : vector<24x32xi1>, vector<24x32xf32>
    %80 = arith.maximumf %69, %79 : vector<24x32xf32>
    %81 = vector.extract_strided_slice %0 {offsets = [6, 0], sizes = [1, 32], strides = [1, 1]} : vector<24x32xf32> to vector<1x32xf32>
    %82 = vector.extract_strided_slice %3 {offsets = [0, 6], sizes = [24, 1], strides = [1, 1]} : vector<24x24xf32> to vector<24x1xf32>
    %cst_32 = arith.constant 0.000000e+00 : f32
    %83 = vector.broadcast %cst_32 : f32 to vector<24x1xf32>
    %84 = arith.cmpf ogt, %82, %83 : vector<24x1xf32>
    %cst_33 = arith.constant 0xFF800000 : f32
    %85 = vector.shape_cast %84 : vector<24x1xi1> to vector<24x1xi1>
    %86 = vector.broadcast %85 : vector<24x1xi1> to vector<24x32xi1>
    %87 = vector.shape_cast %81 : vector<1x32xf32> to vector<1x32xf32>
    %88 = vector.broadcast %87 : vector<1x32xf32> to vector<24x32xf32>
    %89 = vector.broadcast %cst_33 : f32 to vector<24x32xf32>
    %90 = arith.select %86, %88, %89 : vector<24x32xi1>, vector<24x32xf32>
    %91 = arith.maximumf %80, %90 : vector<24x32xf32>
    %92 = vector.extract_strided_slice %0 {offsets = [7, 0], sizes = [1, 32], strides = [1, 1]} : vector<24x32xf32> to vector<1x32xf32>
    %93 = vector.extract_strided_slice %3 {offsets = [0, 7], sizes = [24, 1], strides = [1, 1]} : vector<24x24xf32> to vector<24x1xf32>
    %cst_34 = arith.constant 0.000000e+00 : f32
    %94 = vector.broadcast %cst_34 : f32 to vector<24x1xf32>
    %95 = arith.cmpf ogt, %93, %94 : vector<24x1xf32>
    %cst_35 = arith.constant 0xFF800000 : f32
    %96 = vector.shape_cast %95 : vector<24x1xi1> to vector<24x1xi1>
    %97 = vector.broadcast %96 : vector<24x1xi1> to vector<24x32xi1>
    %98 = vector.shape_cast %92 : vector<1x32xf32> to vector<1x32xf32>
    %99 = vector.broadcast %98 : vector<1x32xf32> to vector<24x32xf32>
    %100 = vector.broadcast %cst_35 : f32 to vector<24x32xf32>
    %101 = arith.select %97, %99, %100 : vector<24x32xi1>, vector<24x32xf32>
    %102 = arith.maximumf %91, %101 : vector<24x32xf32>
    %103 = vector.extract_strided_slice %0 {offsets = [8, 0], sizes = [1, 32], strides = [1, 1]} : vector<24x32xf32> to vector<1x32xf32>
    %104 = vector.extract_strided_slice %3 {offsets = [0, 8], sizes = [24, 1], strides = [1, 1]} : vector<24x24xf32> to vector<24x1xf32>
    %cst_36 = arith.constant 0.000000e+00 : f32
    %105 = vector.broadcast %cst_36 : f32 to vector<24x1xf32>
    %106 = arith.cmpf ogt, %104, %105 : vector<24x1xf32>
    %cst_37 = arith.constant 0xFF800000 : f32
    %107 = vector.shape_cast %106 : vector<24x1xi1> to vector<24x1xi1>
    %108 = vector.broadcast %107 : vector<24x1xi1> to vector<24x32xi1>
    %109 = vector.shape_cast %103 : vector<1x32xf32> to vector<1x32xf32>
    %110 = vector.broadcast %109 : vector<1x32xf32> to vector<24x32xf32>
    %111 = vector.broadcast %cst_37 : f32 to vector<24x32xf32>
    %112 = arith.select %108, %110, %111 : vector<24x32xi1>, vector<24x32xf32>
    %113 = arith.maximumf %102, %112 : vector<24x32xf32>
    %114 = vector.extract_strided_slice %0 {offsets = [9, 0], sizes = [1, 32], strides = [1, 1]} : vector<24x32xf32> to vector<1x32xf32>
    %115 = vector.extract_strided_slice %3 {offsets = [0, 9], sizes = [24, 1], strides = [1, 1]} : vector<24x24xf32> to vector<24x1xf32>
    %cst_38 = arith.constant 0.000000e+00 : f32
    %116 = vector.broadcast %cst_38 : f32 to vector<24x1xf32>
    %117 = arith.cmpf ogt, %115, %116 : vector<24x1xf32>
    %cst_39 = arith.constant 0xFF800000 : f32
    %118 = vector.shape_cast %117 : vector<24x1xi1> to vector<24x1xi1>
    %119 = vector.broadcast %118 : vector<24x1xi1> to vector<24x32xi1>
    %120 = vector.shape_cast %114 : vector<1x32xf32> to vector<1x32xf32>
    %121 = vector.broadcast %120 : vector<1x32xf32> to vector<24x32xf32>
    %122 = vector.broadcast %cst_39 : f32 to vector<24x32xf32>
    %123 = arith.select %119, %121, %122 : vector<24x32xi1>, vector<24x32xf32>
    %124 = arith.maximumf %113, %123 : vector<24x32xf32>
    %125 = vector.extract_strided_slice %0 {offsets = [10, 0], sizes = [1, 32], strides = [1, 1]} : vector<24x32xf32> to vector<1x32xf32>
    %126 = vector.extract_strided_slice %3 {offsets = [0, 10], sizes = [24, 1], strides = [1, 1]} : vector<24x24xf32> to vector<24x1xf32>
    %cst_40 = arith.constant 0.000000e+00 : f32
    %127 = vector.broadcast %cst_40 : f32 to vector<24x1xf32>
    %128 = arith.cmpf ogt, %126, %127 : vector<24x1xf32>
    %cst_41 = arith.constant 0xFF800000 : f32
    %129 = vector.shape_cast %128 : vector<24x1xi1> to vector<24x1xi1>
    %130 = vector.broadcast %129 : vector<24x1xi1> to vector<24x32xi1>
    %131 = vector.shape_cast %125 : vector<1x32xf32> to vector<1x32xf32>
    %132 = vector.broadcast %131 : vector<1x32xf32> to vector<24x32xf32>
    %133 = vector.broadcast %cst_41 : f32 to vector<24x32xf32>
    %134 = arith.select %130, %132, %133 : vector<24x32xi1>, vector<24x32xf32>
    %135 = arith.maximumf %124, %134 : vector<24x32xf32>
    %136 = vector.extract_strided_slice %0 {offsets = [11, 0], sizes = [1, 32], strides = [1, 1]} : vector<24x32xf32> to vector<1x32xf32>
    %137 = vector.extract_strided_slice %3 {offsets = [0, 11], sizes = [24, 1], strides = [1, 1]} : vector<24x24xf32> to vector<24x1xf32>
    %cst_42 = arith.constant 0.000000e+00 : f32
    %138 = vector.broadcast %cst_42 : f32 to vector<24x1xf32>
    %139 = arith.cmpf ogt, %137, %138 : vector<24x1xf32>
    %cst_43 = arith.constant 0xFF800000 : f32
    %140 = vector.shape_cast %139 : vector<24x1xi1> to vector<24x1xi1>
    %141 = vector.broadcast %140 : vector<24x1xi1> to vector<24x32xi1>
    %142 = vector.shape_cast %136 : vector<1x32xf32> to vector<1x32xf32>
    %143 = vector.broadcast %142 : vector<1x32xf32> to vector<24x32xf32>
    %144 = vector.broadcast %cst_43 : f32 to vector<24x32xf32>
    %145 = arith.select %141, %143, %144 : vector<24x32xi1>, vector<24x32xf32>
    %146 = arith.maximumf %135, %145 : vector<24x32xf32>
    %147 = vector.extract_strided_slice %0 {offsets = [12, 0], sizes = [1, 32], strides = [1, 1]} : vector<24x32xf32> to vector<1x32xf32>
    %148 = vector.extract_strided_slice %3 {offsets = [0, 12], sizes = [24, 1], strides = [1, 1]} : vector<24x24xf32> to vector<24x1xf32>
    %cst_44 = arith.constant 0.000000e+00 : f32
    %149 = vector.broadcast %cst_44 : f32 to vector<24x1xf32>
    %150 = arith.cmpf ogt, %148, %149 : vector<24x1xf32>
    %cst_45 = arith.constant 0xFF800000 : f32
    %151 = vector.shape_cast %150 : vector<24x1xi1> to vector<24x1xi1>
    %152 = vector.broadcast %151 : vector<24x1xi1> to vector<24x32xi1>
    %153 = vector.shape_cast %147 : vector<1x32xf32> to vector<1x32xf32>
    %154 = vector.broadcast %153 : vector<1x32xf32> to vector<24x32xf32>
    %155 = vector.broadcast %cst_45 : f32 to vector<24x32xf32>
    %156 = arith.select %152, %154, %155 : vector<24x32xi1>, vector<24x32xf32>
    %157 = arith.maximumf %146, %156 : vector<24x32xf32>
    %158 = vector.extract_strided_slice %0 {offsets = [13, 0], sizes = [1, 32], strides = [1, 1]} : vector<24x32xf32> to vector<1x32xf32>
    %159 = vector.extract_strided_slice %3 {offsets = [0, 13], sizes = [24, 1], strides = [1, 1]} : vector<24x24xf32> to vector<24x1xf32>
    %cst_46 = arith.constant 0.000000e+00 : f32
    %160 = vector.broadcast %cst_46 : f32 to vector<24x1xf32>
    %161 = arith.cmpf ogt, %159, %160 : vector<24x1xf32>
    %cst_47 = arith.constant 0xFF800000 : f32
    %162 = vector.shape_cast %161 : vector<24x1xi1> to vector<24x1xi1>
    %163 = vector.broadcast %162 : vector<24x1xi1> to vector<24x32xi1>
    %164 = vector.shape_cast %158 : vector<1x32xf32> to vector<1x32xf32>
    %165 = vector.broadcast %164 : vector<1x32xf32> to vector<24x32xf32>
    %166 = vector.broadcast %cst_47 : f32 to vector<24x32xf32>
    %167 = arith.select %163, %165, %166 : vector<24x32xi1>, vector<24x32xf32>
    %168 = arith.maximumf %157, %167 : vector<24x32xf32>
    %169 = vector.extract_strided_slice %0 {offsets = [14, 0], sizes = [1, 32], strides = [1, 1]} : vector<24x32xf32> to vector<1x32xf32>
    %170 = vector.extract_strided_slice %3 {offsets = [0, 14], sizes = [24, 1], strides = [1, 1]} : vector<24x24xf32> to vector<24x1xf32>
    %cst_48 = arith.constant 0.000000e+00 : f32
    %171 = vector.broadcast %cst_48 : f32 to vector<24x1xf32>
    %172 = arith.cmpf ogt, %170, %171 : vector<24x1xf32>
    %cst_49 = arith.constant 0xFF800000 : f32
    %173 = vector.shape_cast %172 : vector<24x1xi1> to vector<24x1xi1>
    %174 = vector.broadcast %173 : vector<24x1xi1> to vector<24x32xi1>
    %175 = vector.shape_cast %169 : vector<1x32xf32> to vector<1x32xf32>
    %176 = vector.broadcast %175 : vector<1x32xf32> to vector<24x32xf32>
    %177 = vector.broadcast %cst_49 : f32 to vector<24x32xf32>
    %178 = arith.select %174, %176, %177 : vector<24x32xi1>, vector<24x32xf32>
    %179 = arith.maximumf %168, %178 : vector<24x32xf32>
    %180 = vector.extract_strided_slice %0 {offsets = [15, 0], sizes = [1, 32], strides = [1, 1]} : vector<24x32xf32> to vector<1x32xf32>
    %181 = vector.extract_strided_slice %3 {offsets = [0, 15], sizes = [24, 1], strides = [1, 1]} : vector<24x24xf32> to vector<24x1xf32>
    %cst_50 = arith.constant 0.000000e+00 : f32
    %182 = vector.broadcast %cst_50 : f32 to vector<24x1xf32>
    %183 = arith.cmpf ogt, %181, %182 : vector<24x1xf32>
    %cst_51 = arith.constant 0xFF800000 : f32
    %184 = vector.shape_cast %183 : vector<24x1xi1> to vector<24x1xi1>
    %185 = vector.broadcast %184 : vector<24x1xi1> to vector<24x32xi1>
    %186 = vector.shape_cast %180 : vector<1x32xf32> to vector<1x32xf32>
    %187 = vector.broadcast %186 : vector<1x32xf32> to vector<24x32xf32>
    %188 = vector.broadcast %cst_51 : f32 to vector<24x32xf32>
    %189 = arith.select %185, %187, %188 : vector<24x32xi1>, vector<24x32xf32>
    %190 = arith.maximumf %179, %189 : vector<24x32xf32>
    %191 = vector.extract_strided_slice %0 {offsets = [16, 0], sizes = [1, 32], strides = [1, 1]} : vector<24x32xf32> to vector<1x32xf32>
    %192 = vector.extract_strided_slice %3 {offsets = [0, 16], sizes = [24, 1], strides = [1, 1]} : vector<24x24xf32> to vector<24x1xf32>
    %cst_52 = arith.constant 0.000000e+00 : f32
    %193 = vector.broadcast %cst_52 : f32 to vector<24x1xf32>
    %194 = arith.cmpf ogt, %192, %193 : vector<24x1xf32>
    %cst_53 = arith.constant 0xFF800000 : f32
    %195 = vector.shape_cast %194 : vector<24x1xi1> to vector<24x1xi1>
    %196 = vector.broadcast %195 : vector<24x1xi1> to vector<24x32xi1>
    %197 = vector.shape_cast %191 : vector<1x32xf32> to vector<1x32xf32>
    %198 = vector.broadcast %197 : vector<1x32xf32> to vector<24x32xf32>
    %199 = vector.broadcast %cst_53 : f32 to vector<24x32xf32>
    %200 = arith.select %196, %198, %199 : vector<24x32xi1>, vector<24x32xf32>
    %201 = arith.maximumf %190, %200 : vector<24x32xf32>
    %202 = vector.extract_strided_slice %0 {offsets = [17, 0], sizes = [1, 32], strides = [1, 1]} : vector<24x32xf32> to vector<1x32xf32>
    %203 = vector.extract_strided_slice %3 {offsets = [0, 17], sizes = [24, 1], strides = [1, 1]} : vector<24x24xf32> to vector<24x1xf32>
    %cst_54 = arith.constant 0.000000e+00 : f32
    %204 = vector.broadcast %cst_54 : f32 to vector<24x1xf32>
    %205 = arith.cmpf ogt, %203, %204 : vector<24x1xf32>
    %cst_55 = arith.constant 0xFF800000 : f32
    %206 = vector.shape_cast %205 : vector<24x1xi1> to vector<24x1xi1>
    %207 = vector.broadcast %206 : vector<24x1xi1> to vector<24x32xi1>
    %208 = vector.shape_cast %202 : vector<1x32xf32> to vector<1x32xf32>
    %209 = vector.broadcast %208 : vector<1x32xf32> to vector<24x32xf32>
    %210 = vector.broadcast %cst_55 : f32 to vector<24x32xf32>
    %211 = arith.select %207, %209, %210 : vector<24x32xi1>, vector<24x32xf32>
    %212 = arith.maximumf %201, %211 : vector<24x32xf32>
    %213 = vector.extract_strided_slice %0 {offsets = [18, 0], sizes = [1, 32], strides = [1, 1]} : vector<24x32xf32> to vector<1x32xf32>
    %214 = vector.extract_strided_slice %3 {offsets = [0, 18], sizes = [24, 1], strides = [1, 1]} : vector<24x24xf32> to vector<24x1xf32>
    %cst_56 = arith.constant 0.000000e+00 : f32
    %215 = vector.broadcast %cst_56 : f32 to vector<24x1xf32>
    %216 = arith.cmpf ogt, %214, %215 : vector<24x1xf32>
    %cst_57 = arith.constant 0xFF800000 : f32
    %217 = vector.shape_cast %216 : vector<24x1xi1> to vector<24x1xi1>
    %218 = vector.broadcast %217 : vector<24x1xi1> to vector<24x32xi1>
    %219 = vector.shape_cast %213 : vector<1x32xf32> to vector<1x32xf32>
    %220 = vector.broadcast %219 : vector<1x32xf32> to vector<24x32xf32>
    %221 = vector.broadcast %cst_57 : f32 to vector<24x32xf32>
    %222 = arith.select %218, %220, %221 : vector<24x32xi1>, vector<24x32xf32>
    %223 = arith.maximumf %212, %222 : vector<24x32xf32>
    %224 = vector.extract_strided_slice %0 {offsets = [19, 0], sizes = [1, 32], strides = [1, 1]} : vector<24x32xf32> to vector<1x32xf32>
    %225 = vector.extract_strided_slice %3 {offsets = [0, 19], sizes = [24, 1], strides = [1, 1]} : vector<24x24xf32> to vector<24x1xf32>
    %cst_58 = arith.constant 0.000000e+00 : f32
    %226 = vector.broadcast %cst_58 : f32 to vector<24x1xf32>
    %227 = arith.cmpf ogt, %225, %226 : vector<24x1xf32>
    %cst_59 = arith.constant 0xFF800000 : f32
    %228 = vector.shape_cast %227 : vector<24x1xi1> to vector<24x1xi1>
    %229 = vector.broadcast %228 : vector<24x1xi1> to vector<24x32xi1>
    %230 = vector.shape_cast %224 : vector<1x32xf32> to vector<1x32xf32>
    %231 = vector.broadcast %230 : vector<1x32xf32> to vector<24x32xf32>
    %232 = vector.broadcast %cst_59 : f32 to vector<24x32xf32>
    %233 = arith.select %229, %231, %232 : vector<24x32xi1>, vector<24x32xf32>
    %234 = arith.maximumf %223, %233 : vector<24x32xf32>
    %235 = vector.extract_strided_slice %0 {offsets = [20, 0], sizes = [1, 32], strides = [1, 1]} : vector<24x32xf32> to vector<1x32xf32>
    %236 = vector.extract_strided_slice %3 {offsets = [0, 20], sizes = [24, 1], strides = [1, 1]} : vector<24x24xf32> to vector<24x1xf32>
    %cst_60 = arith.constant 0.000000e+00 : f32
    %237 = vector.broadcast %cst_60 : f32 to vector<24x1xf32>
    %238 = arith.cmpf ogt, %236, %237 : vector<24x1xf32>
    %cst_61 = arith.constant 0xFF800000 : f32
    %239 = vector.shape_cast %238 : vector<24x1xi1> to vector<24x1xi1>
    %240 = vector.broadcast %239 : vector<24x1xi1> to vector<24x32xi1>
    %241 = vector.shape_cast %235 : vector<1x32xf32> to vector<1x32xf32>
    %242 = vector.broadcast %241 : vector<1x32xf32> to vector<24x32xf32>
    %243 = vector.broadcast %cst_61 : f32 to vector<24x32xf32>
    %244 = arith.select %240, %242, %243 : vector<24x32xi1>, vector<24x32xf32>
    %245 = arith.maximumf %234, %244 : vector<24x32xf32>
    %246 = vector.extract_strided_slice %0 {offsets = [21, 0], sizes = [1, 32], strides = [1, 1]} : vector<24x32xf32> to vector<1x32xf32>
    %247 = vector.extract_strided_slice %3 {offsets = [0, 21], sizes = [24, 1], strides = [1, 1]} : vector<24x24xf32> to vector<24x1xf32>
    %cst_62 = arith.constant 0.000000e+00 : f32
    %248 = vector.broadcast %cst_62 : f32 to vector<24x1xf32>
    %249 = arith.cmpf ogt, %247, %248 : vector<24x1xf32>
    %cst_63 = arith.constant 0xFF800000 : f32
    %250 = vector.shape_cast %249 : vector<24x1xi1> to vector<24x1xi1>
    %251 = vector.broadcast %250 : vector<24x1xi1> to vector<24x32xi1>
    %252 = vector.shape_cast %246 : vector<1x32xf32> to vector<1x32xf32>
    %253 = vector.broadcast %252 : vector<1x32xf32> to vector<24x32xf32>
    %254 = vector.broadcast %cst_63 : f32 to vector<24x32xf32>
    %255 = arith.select %251, %253, %254 : vector<24x32xi1>, vector<24x32xf32>
    %256 = arith.maximumf %245, %255 : vector<24x32xf32>
    %257 = vector.extract_strided_slice %0 {offsets = [22, 0], sizes = [1, 32], strides = [1, 1]} : vector<24x32xf32> to vector<1x32xf32>
    %258 = vector.extract_strided_slice %3 {offsets = [0, 22], sizes = [24, 1], strides = [1, 1]} : vector<24x24xf32> to vector<24x1xf32>
    %cst_64 = arith.constant 0.000000e+00 : f32
    %259 = vector.broadcast %cst_64 : f32 to vector<24x1xf32>
    %260 = arith.cmpf ogt, %258, %259 : vector<24x1xf32>
    %cst_65 = arith.constant 0xFF800000 : f32
    %261 = vector.shape_cast %260 : vector<24x1xi1> to vector<24x1xi1>
    %262 = vector.broadcast %261 : vector<24x1xi1> to vector<24x32xi1>
    %263 = vector.shape_cast %257 : vector<1x32xf32> to vector<1x32xf32>
    %264 = vector.broadcast %263 : vector<1x32xf32> to vector<24x32xf32>
    %265 = vector.broadcast %cst_65 : f32 to vector<24x32xf32>
    %266 = arith.select %262, %264, %265 : vector<24x32xi1>, vector<24x32xf32>
    %267 = arith.maximumf %256, %266 : vector<24x32xf32>
    %268 = vector.extract_strided_slice %0 {offsets = [23, 0], sizes = [1, 32], strides = [1, 1]} : vector<24x32xf32> to vector<1x32xf32>
    %269 = vector.extract_strided_slice %3 {offsets = [0, 23], sizes = [24, 1], strides = [1, 1]} : vector<24x24xf32> to vector<24x1xf32>
    %cst_66 = arith.constant 0.000000e+00 : f32
    %270 = vector.broadcast %cst_66 : f32 to vector<24x1xf32>
    %271 = arith.cmpf ogt, %269, %270 : vector<24x1xf32>
    %cst_67 = arith.constant 0xFF800000 : f32
    %272 = vector.shape_cast %271 : vector<24x1xi1> to vector<24x1xi1>
    %273 = vector.broadcast %272 : vector<24x1xi1> to vector<24x32xi1>
    %274 = vector.shape_cast %268 : vector<1x32xf32> to vector<1x32xf32>
    %275 = vector.broadcast %274 : vector<1x32xf32> to vector<24x32xf32>
    %276 = vector.broadcast %cst_67 : f32 to vector<24x32xf32>
    %277 = arith.select %273, %275, %276 : vector<24x32xi1>, vector<24x32xf32>
    %278 = arith.maximumf %267, %277 : vector<24x32xf32>
    %cst_68 = arith.constant 0xFF800000 : f32
    %279 = vector.broadcast %cst_68 : f32 to vector<24x32xf32>
    %280 = arith.cmpf oeq, %278, %279 : vector<24x32xf32>
    %cst_69 = arith.constant 0.000000e+00 : f32
    %281 = vector.broadcast %cst_69 : f32 to vector<24x32xf32>
    %282 = arith.select %280, %281, %278 : vector<24x32xi1>, vector<24x32xf32>
    %283 = vector.extract_strided_slice %11 {offsets = [0, 0], sizes = [24, 32], strides = [1, 1]} : vector<48x32xf32> to vector<24x32xf32>
    %284 = vector.extract_strided_slice %11 {offsets = [24, 0], sizes = [24, 32], strides = [1, 1]} : vector<48x32xf32> to vector<24x32xf32>
    %285 = vector.extract_strided_slice %12 {offsets = [0, 0], sizes = [24, 32], strides = [1, 1]} : vector<48x32xf32> to vector<24x32xf32>
    %286 = vector.extract_strided_slice %12 {offsets = [24, 0], sizes = [24, 32], strides = [1, 1]} : vector<48x32xf32> to vector<24x32xf32>
    %287 = vector.extract_strided_slice %13 {offsets = [0, 0], sizes = [24, 32], strides = [1, 1]} : vector<48x32xf32> to vector<24x32xf32>
    %288 = vector.extract_strided_slice %13 {offsets = [24, 0], sizes = [24, 32], strides = [1, 1]} : vector<48x32xf32> to vector<24x32xf32>
    %289 = vector.extract_strided_slice %8 {offsets = [0, 0], sizes = [128, 32], strides = [1, 1]} : vector<320x32xf32> to vector<128x32xf32>
    %290 = vector.extract_strided_slice %10 {offsets = [0, 0], sizes = [1, 32], strides = [1, 1]} : vector<3x32xf32> to vector<1x32xf32>
    %291 = tpu.concatenate %282, %283, %285, %0 in 1 : vector<24x32xf32>, vector<24x32xf32>, vector<24x32xf32>, vector<24x32xf32> -> vector<24x128xf32>
    %cst_70 = arith.constant dense<0.000000e+00> : vector<24x32xf32>
    %292 = tpu.matmul %291, %289, %cst_70 {dimension_numbers = #tpu.dot_dimension_numbers<[1], [0], [0], [1], [0, 0, 1, 1], [], []>} : vector<24x128xf32>, vector<128x32xf32>, vector<24x32xf32> -> vector<24x32xf32>
    %293 = vector.broadcast %290 : vector<1x32xf32> to vector<24x32xf32>
    %294 = arith.addf %292, %293 : vector<24x32xf32>
    %cst_71 = arith.constant 0.000000e+00 : f32
    %295 = vector.broadcast %cst_71 : f32 to vector<24x32xf32>
    %296 = arith.maximumf %294, %295 : vector<24x32xf32>
    %297 = vector.extract_strided_slice %8 {offsets = [128, 0], sizes = [96, 32], strides = [1, 1]} : vector<320x32xf32> to vector<96x32xf32>
    %298 = vector.extract_strided_slice %10 {offsets = [1, 0], sizes = [1, 32], strides = [1, 1]} : vector<3x32xf32> to vector<1x32xf32>
    %299 = tpu.concatenate %284, %287, %1 in 1 : vector<24x32xf32>, vector<24x32xf32>, vector<24x32xf32> -> vector<24x96xf32>
    %cst_72 = arith.constant dense<0.000000e+00> : vector<24x32xf32>
    %300 = tpu.matmul %299, %297, %cst_72 {dimension_numbers = #tpu.dot_dimension_numbers<[1], [0], [0], [1], [0, 0, 1, 1], [], []>} : vector<24x96xf32>, vector<96x32xf32>, vector<24x32xf32> -> vector<24x32xf32>
    %301 = vector.broadcast %298 : vector<1x32xf32> to vector<24x32xf32>
    %302 = arith.addf %300, %301 : vector<24x32xf32>
    %cst_73 = arith.constant 0.000000e+00 : f32
    %303 = vector.broadcast %cst_73 : f32 to vector<24x32xf32>
    %304 = arith.maximumf %302, %303 : vector<24x32xf32>
    %305 = vector.extract_strided_slice %8 {offsets = [224, 0], sizes = [96, 32], strides = [1, 1]} : vector<320x32xf32> to vector<96x32xf32>
    %306 = vector.extract_strided_slice %10 {offsets = [2, 0], sizes = [1, 32], strides = [1, 1]} : vector<3x32xf32> to vector<1x32xf32>
    %307 = tpu.concatenate %288, %286, %2 in 1 : vector<24x32xf32>, vector<24x32xf32>, vector<24x32xf32> -> vector<24x96xf32>
    %cst_74 = arith.constant dense<0.000000e+00> : vector<24x32xf32>
    %308 = tpu.matmul %307, %305, %cst_74 {dimension_numbers = #tpu.dot_dimension_numbers<[1], [0], [0], [1], [0, 0, 1, 1], [], []>} : vector<24x96xf32>, vector<96x32xf32>, vector<24x32xf32> -> vector<24x32xf32>
    %309 = vector.broadcast %306 : vector<1x32xf32> to vector<24x32xf32>
    %310 = arith.addf %308, %309 : vector<24x32xf32>
    %cst_75 = arith.constant 0.000000e+00 : f32
    %311 = vector.broadcast %cst_75 : f32 to vector<24x32xf32>
    %312 = arith.maximumf %310, %311 : vector<24x32xf32>
    %c1 = arith.constant 1 : index
    %c0_76 = arith.constant 0 : index
    %c0_77 = arith.constant 0 : index
    %313 = vector.load %arg5[%c1, %c0_76, %c0_77] : memref<2x320x32xf32, #tpu.memory_space<vmem>>, vector<1x320x32xf32>
    %314 = vector.shape_cast %313 : vector<1x320x32xf32> to vector<320x32xf32>
    %c1_78 = arith.constant 1 : index
    %c0_79 = arith.constant 0 : index
    %c0_80 = arith.constant 0 : index
    %315 = vector.load %arg6[%c1_78, %c0_79, %c0_80] : memref<2x3x32xf32, #tpu.memory_space<vmem>>, vector<1x3x32xf32>
    %316 = vector.shape_cast %315 : vector<1x3x32xf32> to vector<3x32xf32>
    %cst_81 = arith.constant dense<0.000000e+00> : vector<48x32xf32>
    %317 = tpu.matmul %4, %296, %cst_81 {dimension_numbers = #tpu.dot_dimension_numbers<[1], [0], [0], [1], [0, 0, 1, 1], [], []>} : vector<48x24xf32>, vector<24x32xf32>, vector<48x32xf32> -> vector<48x32xf32>
    %cst_82 = arith.constant dense<0.000000e+00> : vector<48x32xf32>
    %318 = tpu.matmul %5, %304, %cst_82 {dimension_numbers = #tpu.dot_dimension_numbers<[1], [0], [0], [1], [0, 0, 1, 1], [], []>} : vector<48x24xf32>, vector<24x32xf32>, vector<48x32xf32> -> vector<48x32xf32>
    %cst_83 = arith.constant dense<0.000000e+00> : vector<48x32xf32>
    %319 = tpu.matmul %6, %312, %cst_83 {dimension_numbers = #tpu.dot_dimension_numbers<[1], [0], [0], [1], [0, 0, 1, 1], [], []>} : vector<48x24xf32>, vector<24x32xf32>, vector<48x32xf32> -> vector<48x32xf32>
    %cst_84 = arith.constant 0xFF800000 : f32
    %320 = vector.broadcast %cst_84 : f32 to vector<24x32xf32>
    %321 = vector.extract_strided_slice %296 {offsets = [0, 0], sizes = [1, 32], strides = [1, 1]} : vector<24x32xf32> to vector<1x32xf32>
    %322 = vector.extract_strided_slice %3 {offsets = [0, 0], sizes = [24, 1], strides = [1, 1]} : vector<24x24xf32> to vector<24x1xf32>
    %cst_85 = arith.constant 0.000000e+00 : f32
    %323 = vector.broadcast %cst_85 : f32 to vector<24x1xf32>
    %324 = arith.cmpf ogt, %322, %323 : vector<24x1xf32>
    %cst_86 = arith.constant 0xFF800000 : f32
    %325 = vector.shape_cast %324 : vector<24x1xi1> to vector<24x1xi1>
    %326 = vector.broadcast %325 : vector<24x1xi1> to vector<24x32xi1>
    %327 = vector.shape_cast %321 : vector<1x32xf32> to vector<1x32xf32>
    %328 = vector.broadcast %327 : vector<1x32xf32> to vector<24x32xf32>
    %329 = vector.broadcast %cst_86 : f32 to vector<24x32xf32>
    %330 = arith.select %326, %328, %329 : vector<24x32xi1>, vector<24x32xf32>
    %331 = arith.maximumf %320, %330 : vector<24x32xf32>
    %332 = vector.extract_strided_slice %296 {offsets = [1, 0], sizes = [1, 32], strides = [1, 1]} : vector<24x32xf32> to vector<1x32xf32>
    %333 = vector.extract_strided_slice %3 {offsets = [0, 1], sizes = [24, 1], strides = [1, 1]} : vector<24x24xf32> to vector<24x1xf32>
    %cst_87 = arith.constant 0.000000e+00 : f32
    %334 = vector.broadcast %cst_87 : f32 to vector<24x1xf32>
    %335 = arith.cmpf ogt, %333, %334 : vector<24x1xf32>
    %cst_88 = arith.constant 0xFF800000 : f32
    %336 = vector.shape_cast %335 : vector<24x1xi1> to vector<24x1xi1>
    %337 = vector.broadcast %336 : vector<24x1xi1> to vector<24x32xi1>
    %338 = vector.shape_cast %332 : vector<1x32xf32> to vector<1x32xf32>
    %339 = vector.broadcast %338 : vector<1x32xf32> to vector<24x32xf32>
    %340 = vector.broadcast %cst_88 : f32 to vector<24x32xf32>
    %341 = arith.select %337, %339, %340 : vector<24x32xi1>, vector<24x32xf32>
    %342 = arith.maximumf %331, %341 : vector<24x32xf32>
    %343 = vector.extract_strided_slice %296 {offsets = [2, 0], sizes = [1, 32], strides = [1, 1]} : vector<24x32xf32> to vector<1x32xf32>
    %344 = vector.extract_strided_slice %3 {offsets = [0, 2], sizes = [24, 1], strides = [1, 1]} : vector<24x24xf32> to vector<24x1xf32>
    %cst_89 = arith.constant 0.000000e+00 : f32
    %345 = vector.broadcast %cst_89 : f32 to vector<24x1xf32>
    %346 = arith.cmpf ogt, %344, %345 : vector<24x1xf32>
    %cst_90 = arith.constant 0xFF800000 : f32
    %347 = vector.shape_cast %346 : vector<24x1xi1> to vector<24x1xi1>
    %348 = vector.broadcast %347 : vector<24x1xi1> to vector<24x32xi1>
    %349 = vector.shape_cast %343 : vector<1x32xf32> to vector<1x32xf32>
    %350 = vector.broadcast %349 : vector<1x32xf32> to vector<24x32xf32>
    %351 = vector.broadcast %cst_90 : f32 to vector<24x32xf32>
    %352 = arith.select %348, %350, %351 : vector<24x32xi1>, vector<24x32xf32>
    %353 = arith.maximumf %342, %352 : vector<24x32xf32>
    %354 = vector.extract_strided_slice %296 {offsets = [3, 0], sizes = [1, 32], strides = [1, 1]} : vector<24x32xf32> to vector<1x32xf32>
    %355 = vector.extract_strided_slice %3 {offsets = [0, 3], sizes = [24, 1], strides = [1, 1]} : vector<24x24xf32> to vector<24x1xf32>
    %cst_91 = arith.constant 0.000000e+00 : f32
    %356 = vector.broadcast %cst_91 : f32 to vector<24x1xf32>
    %357 = arith.cmpf ogt, %355, %356 : vector<24x1xf32>
    %cst_92 = arith.constant 0xFF800000 : f32
    %358 = vector.shape_cast %357 : vector<24x1xi1> to vector<24x1xi1>
    %359 = vector.broadcast %358 : vector<24x1xi1> to vector<24x32xi1>
    %360 = vector.shape_cast %354 : vector<1x32xf32> to vector<1x32xf32>
    %361 = vector.broadcast %360 : vector<1x32xf32> to vector<24x32xf32>
    %362 = vector.broadcast %cst_92 : f32 to vector<24x32xf32>
    %363 = arith.select %359, %361, %362 : vector<24x32xi1>, vector<24x32xf32>
    %364 = arith.maximumf %353, %363 : vector<24x32xf32>
    %365 = vector.extract_strided_slice %296 {offsets = [4, 0], sizes = [1, 32], strides = [1, 1]} : vector<24x32xf32> to vector<1x32xf32>
    %366 = vector.extract_strided_slice %3 {offsets = [0, 4], sizes = [24, 1], strides = [1, 1]} : vector<24x24xf32> to vector<24x1xf32>
    %cst_93 = arith.constant 0.000000e+00 : f32
    %367 = vector.broadcast %cst_93 : f32 to vector<24x1xf32>
    %368 = arith.cmpf ogt, %366, %367 : vector<24x1xf32>
    %cst_94 = arith.constant 0xFF800000 : f32
    %369 = vector.shape_cast %368 : vector<24x1xi1> to vector<24x1xi1>
    %370 = vector.broadcast %369 : vector<24x1xi1> to vector<24x32xi1>
    %371 = vector.shape_cast %365 : vector<1x32xf32> to vector<1x32xf32>
    %372 = vector.broadcast %371 : vector<1x32xf32> to vector<24x32xf32>
    %373 = vector.broadcast %cst_94 : f32 to vector<24x32xf32>
    %374 = arith.select %370, %372, %373 : vector<24x32xi1>, vector<24x32xf32>
    %375 = arith.maximumf %364, %374 : vector<24x32xf32>
    %376 = vector.extract_strided_slice %296 {offsets = [5, 0], sizes = [1, 32], strides = [1, 1]} : vector<24x32xf32> to vector<1x32xf32>
    %377 = vector.extract_strided_slice %3 {offsets = [0, 5], sizes = [24, 1], strides = [1, 1]} : vector<24x24xf32> to vector<24x1xf32>
    %cst_95 = arith.constant 0.000000e+00 : f32
    %378 = vector.broadcast %cst_95 : f32 to vector<24x1xf32>
    %379 = arith.cmpf ogt, %377, %378 : vector<24x1xf32>
    %cst_96 = arith.constant 0xFF800000 : f32
    %380 = vector.shape_cast %379 : vector<24x1xi1> to vector<24x1xi1>
    %381 = vector.broadcast %380 : vector<24x1xi1> to vector<24x32xi1>
    %382 = vector.shape_cast %376 : vector<1x32xf32> to vector<1x32xf32>
    %383 = vector.broadcast %382 : vector<1x32xf32> to vector<24x32xf32>
    %384 = vector.broadcast %cst_96 : f32 to vector<24x32xf32>
    %385 = arith.select %381, %383, %384 : vector<24x32xi1>, vector<24x32xf32>
    %386 = arith.maximumf %375, %385 : vector<24x32xf32>
    %387 = vector.extract_strided_slice %296 {offsets = [6, 0], sizes = [1, 32], strides = [1, 1]} : vector<24x32xf32> to vector<1x32xf32>
    %388 = vector.extract_strided_slice %3 {offsets = [0, 6], sizes = [24, 1], strides = [1, 1]} : vector<24x24xf32> to vector<24x1xf32>
    %cst_97 = arith.constant 0.000000e+00 : f32
    %389 = vector.broadcast %cst_97 : f32 to vector<24x1xf32>
    %390 = arith.cmpf ogt, %388, %389 : vector<24x1xf32>
    %cst_98 = arith.constant 0xFF800000 : f32
    %391 = vector.shape_cast %390 : vector<24x1xi1> to vector<24x1xi1>
    %392 = vector.broadcast %391 : vector<24x1xi1> to vector<24x32xi1>
    %393 = vector.shape_cast %387 : vector<1x32xf32> to vector<1x32xf32>
    %394 = vector.broadcast %393 : vector<1x32xf32> to vector<24x32xf32>
    %395 = vector.broadcast %cst_98 : f32 to vector<24x32xf32>
    %396 = arith.select %392, %394, %395 : vector<24x32xi1>, vector<24x32xf32>
    %397 = arith.maximumf %386, %396 : vector<24x32xf32>
    %398 = vector.extract_strided_slice %296 {offsets = [7, 0], sizes = [1, 32], strides = [1, 1]} : vector<24x32xf32> to vector<1x32xf32>
    %399 = vector.extract_strided_slice %3 {offsets = [0, 7], sizes = [24, 1], strides = [1, 1]} : vector<24x24xf32> to vector<24x1xf32>
    %cst_99 = arith.constant 0.000000e+00 : f32
    %400 = vector.broadcast %cst_99 : f32 to vector<24x1xf32>
    %401 = arith.cmpf ogt, %399, %400 : vector<24x1xf32>
    %cst_100 = arith.constant 0xFF800000 : f32
    %402 = vector.shape_cast %401 : vector<24x1xi1> to vector<24x1xi1>
    %403 = vector.broadcast %402 : vector<24x1xi1> to vector<24x32xi1>
    %404 = vector.shape_cast %398 : vector<1x32xf32> to vector<1x32xf32>
    %405 = vector.broadcast %404 : vector<1x32xf32> to vector<24x32xf32>
    %406 = vector.broadcast %cst_100 : f32 to vector<24x32xf32>
    %407 = arith.select %403, %405, %406 : vector<24x32xi1>, vector<24x32xf32>
    %408 = arith.maximumf %397, %407 : vector<24x32xf32>
    %409 = vector.extract_strided_slice %296 {offsets = [8, 0], sizes = [1, 32], strides = [1, 1]} : vector<24x32xf32> to vector<1x32xf32>
    %410 = vector.extract_strided_slice %3 {offsets = [0, 8], sizes = [24, 1], strides = [1, 1]} : vector<24x24xf32> to vector<24x1xf32>
    %cst_101 = arith.constant 0.000000e+00 : f32
    %411 = vector.broadcast %cst_101 : f32 to vector<24x1xf32>
    %412 = arith.cmpf ogt, %410, %411 : vector<24x1xf32>
    %cst_102 = arith.constant 0xFF800000 : f32
    %413 = vector.shape_cast %412 : vector<24x1xi1> to vector<24x1xi1>
    %414 = vector.broadcast %413 : vector<24x1xi1> to vector<24x32xi1>
    %415 = vector.shape_cast %409 : vector<1x32xf32> to vector<1x32xf32>
    %416 = vector.broadcast %415 : vector<1x32xf32> to vector<24x32xf32>
    %417 = vector.broadcast %cst_102 : f32 to vector<24x32xf32>
    %418 = arith.select %414, %416, %417 : vector<24x32xi1>, vector<24x32xf32>
    %419 = arith.maximumf %408, %418 : vector<24x32xf32>
    %420 = vector.extract_strided_slice %296 {offsets = [9, 0], sizes = [1, 32], strides = [1, 1]} : vector<24x32xf32> to vector<1x32xf32>
    %421 = vector.extract_strided_slice %3 {offsets = [0, 9], sizes = [24, 1], strides = [1, 1]} : vector<24x24xf32> to vector<24x1xf32>
    %cst_103 = arith.constant 0.000000e+00 : f32
    %422 = vector.broadcast %cst_103 : f32 to vector<24x1xf32>
    %423 = arith.cmpf ogt, %421, %422 : vector<24x1xf32>
    %cst_104 = arith.constant 0xFF800000 : f32
    %424 = vector.shape_cast %423 : vector<24x1xi1> to vector<24x1xi1>
    %425 = vector.broadcast %424 : vector<24x1xi1> to vector<24x32xi1>
    %426 = vector.shape_cast %420 : vector<1x32xf32> to vector<1x32xf32>
    %427 = vector.broadcast %426 : vector<1x32xf32> to vector<24x32xf32>
    %428 = vector.broadcast %cst_104 : f32 to vector<24x32xf32>
    %429 = arith.select %425, %427, %428 : vector<24x32xi1>, vector<24x32xf32>
    %430 = arith.maximumf %419, %429 : vector<24x32xf32>
    %431 = vector.extract_strided_slice %296 {offsets = [10, 0], sizes = [1, 32], strides = [1, 1]} : vector<24x32xf32> to vector<1x32xf32>
    %432 = vector.extract_strided_slice %3 {offsets = [0, 10], sizes = [24, 1], strides = [1, 1]} : vector<24x24xf32> to vector<24x1xf32>
    %cst_105 = arith.constant 0.000000e+00 : f32
    %433 = vector.broadcast %cst_105 : f32 to vector<24x1xf32>
    %434 = arith.cmpf ogt, %432, %433 : vector<24x1xf32>
    %cst_106 = arith.constant 0xFF800000 : f32
    %435 = vector.shape_cast %434 : vector<24x1xi1> to vector<24x1xi1>
    %436 = vector.broadcast %435 : vector<24x1xi1> to vector<24x32xi1>
    %437 = vector.shape_cast %431 : vector<1x32xf32> to vector<1x32xf32>
    %438 = vector.broadcast %437 : vector<1x32xf32> to vector<24x32xf32>
    %439 = vector.broadcast %cst_106 : f32 to vector<24x32xf32>
    %440 = arith.select %436, %438, %439 : vector<24x32xi1>, vector<24x32xf32>
    %441 = arith.maximumf %430, %440 : vector<24x32xf32>
    %442 = vector.extract_strided_slice %296 {offsets = [11, 0], sizes = [1, 32], strides = [1, 1]} : vector<24x32xf32> to vector<1x32xf32>
    %443 = vector.extract_strided_slice %3 {offsets = [0, 11], sizes = [24, 1], strides = [1, 1]} : vector<24x24xf32> to vector<24x1xf32>
    %cst_107 = arith.constant 0.000000e+00 : f32
    %444 = vector.broadcast %cst_107 : f32 to vector<24x1xf32>
    %445 = arith.cmpf ogt, %443, %444 : vector<24x1xf32>
    %cst_108 = arith.constant 0xFF800000 : f32
    %446 = vector.shape_cast %445 : vector<24x1xi1> to vector<24x1xi1>
    %447 = vector.broadcast %446 : vector<24x1xi1> to vector<24x32xi1>
    %448 = vector.shape_cast %442 : vector<1x32xf32> to vector<1x32xf32>
    %449 = vector.broadcast %448 : vector<1x32xf32> to vector<24x32xf32>
    %450 = vector.broadcast %cst_108 : f32 to vector<24x32xf32>
    %451 = arith.select %447, %449, %450 : vector<24x32xi1>, vector<24x32xf32>
    %452 = arith.maximumf %441, %451 : vector<24x32xf32>
    %453 = vector.extract_strided_slice %296 {offsets = [12, 0], sizes = [1, 32], strides = [1, 1]} : vector<24x32xf32> to vector<1x32xf32>
    %454 = vector.extract_strided_slice %3 {offsets = [0, 12], sizes = [24, 1], strides = [1, 1]} : vector<24x24xf32> to vector<24x1xf32>
    %cst_109 = arith.constant 0.000000e+00 : f32
    %455 = vector.broadcast %cst_109 : f32 to vector<24x1xf32>
    %456 = arith.cmpf ogt, %454, %455 : vector<24x1xf32>
    %cst_110 = arith.constant 0xFF800000 : f32
    %457 = vector.shape_cast %456 : vector<24x1xi1> to vector<24x1xi1>
    %458 = vector.broadcast %457 : vector<24x1xi1> to vector<24x32xi1>
    %459 = vector.shape_cast %453 : vector<1x32xf32> to vector<1x32xf32>
    %460 = vector.broadcast %459 : vector<1x32xf32> to vector<24x32xf32>
    %461 = vector.broadcast %cst_110 : f32 to vector<24x32xf32>
    %462 = arith.select %458, %460, %461 : vector<24x32xi1>, vector<24x32xf32>
    %463 = arith.maximumf %452, %462 : vector<24x32xf32>
    %464 = vector.extract_strided_slice %296 {offsets = [13, 0], sizes = [1, 32], strides = [1, 1]} : vector<24x32xf32> to vector<1x32xf32>
    %465 = vector.extract_strided_slice %3 {offsets = [0, 13], sizes = [24, 1], strides = [1, 1]} : vector<24x24xf32> to vector<24x1xf32>
    %cst_111 = arith.constant 0.000000e+00 : f32
    %466 = vector.broadcast %cst_111 : f32 to vector<24x1xf32>
    %467 = arith.cmpf ogt, %465, %466 : vector<24x1xf32>
    %cst_112 = arith.constant 0xFF800000 : f32
    %468 = vector.shape_cast %467 : vector<24x1xi1> to vector<24x1xi1>
    %469 = vector.broadcast %468 : vector<24x1xi1> to vector<24x32xi1>
    %470 = vector.shape_cast %464 : vector<1x32xf32> to vector<1x32xf32>
    %471 = vector.broadcast %470 : vector<1x32xf32> to vector<24x32xf32>
    %472 = vector.broadcast %cst_112 : f32 to vector<24x32xf32>
    %473 = arith.select %469, %471, %472 : vector<24x32xi1>, vector<24x32xf32>
    %474 = arith.maximumf %463, %473 : vector<24x32xf32>
    %475 = vector.extract_strided_slice %296 {offsets = [14, 0], sizes = [1, 32], strides = [1, 1]} : vector<24x32xf32> to vector<1x32xf32>
    %476 = vector.extract_strided_slice %3 {offsets = [0, 14], sizes = [24, 1], strides = [1, 1]} : vector<24x24xf32> to vector<24x1xf32>
    %cst_113 = arith.constant 0.000000e+00 : f32
    %477 = vector.broadcast %cst_113 : f32 to vector<24x1xf32>
    %478 = arith.cmpf ogt, %476, %477 : vector<24x1xf32>
    %cst_114 = arith.constant 0xFF800000 : f32
    %479 = vector.shape_cast %478 : vector<24x1xi1> to vector<24x1xi1>
    %480 = vector.broadcast %479 : vector<24x1xi1> to vector<24x32xi1>
    %481 = vector.shape_cast %475 : vector<1x32xf32> to vector<1x32xf32>
    %482 = vector.broadcast %481 : vector<1x32xf32> to vector<24x32xf32>
    %483 = vector.broadcast %cst_114 : f32 to vector<24x32xf32>
    %484 = arith.select %480, %482, %483 : vector<24x32xi1>, vector<24x32xf32>
    %485 = arith.maximumf %474, %484 : vector<24x32xf32>
    %486 = vector.extract_strided_slice %296 {offsets = [15, 0], sizes = [1, 32], strides = [1, 1]} : vector<24x32xf32> to vector<1x32xf32>
    %487 = vector.extract_strided_slice %3 {offsets = [0, 15], sizes = [24, 1], strides = [1, 1]} : vector<24x24xf32> to vector<24x1xf32>
    %cst_115 = arith.constant 0.000000e+00 : f32
    %488 = vector.broadcast %cst_115 : f32 to vector<24x1xf32>
    %489 = arith.cmpf ogt, %487, %488 : vector<24x1xf32>
    %cst_116 = arith.constant 0xFF800000 : f32
    %490 = vector.shape_cast %489 : vector<24x1xi1> to vector<24x1xi1>
    %491 = vector.broadcast %490 : vector<24x1xi1> to vector<24x32xi1>
    %492 = vector.shape_cast %486 : vector<1x32xf32> to vector<1x32xf32>
    %493 = vector.broadcast %492 : vector<1x32xf32> to vector<24x32xf32>
    %494 = vector.broadcast %cst_116 : f32 to vector<24x32xf32>
    %495 = arith.select %491, %493, %494 : vector<24x32xi1>, vector<24x32xf32>
    %496 = arith.maximumf %485, %495 : vector<24x32xf32>
    %497 = vector.extract_strided_slice %296 {offsets = [16, 0], sizes = [1, 32], strides = [1, 1]} : vector<24x32xf32> to vector<1x32xf32>
    %498 = vector.extract_strided_slice %3 {offsets = [0, 16], sizes = [24, 1], strides = [1, 1]} : vector<24x24xf32> to vector<24x1xf32>
    %cst_117 = arith.constant 0.000000e+00 : f32
    %499 = vector.broadcast %cst_117 : f32 to vector<24x1xf32>
    %500 = arith.cmpf ogt, %498, %499 : vector<24x1xf32>
    %cst_118 = arith.constant 0xFF800000 : f32
    %501 = vector.shape_cast %500 : vector<24x1xi1> to vector<24x1xi1>
    %502 = vector.broadcast %501 : vector<24x1xi1> to vector<24x32xi1>
    %503 = vector.shape_cast %497 : vector<1x32xf32> to vector<1x32xf32>
    %504 = vector.broadcast %503 : vector<1x32xf32> to vector<24x32xf32>
    %505 = vector.broadcast %cst_118 : f32 to vector<24x32xf32>
    %506 = arith.select %502, %504, %505 : vector<24x32xi1>, vector<24x32xf32>
    %507 = arith.maximumf %496, %506 : vector<24x32xf32>
    %508 = vector.extract_strided_slice %296 {offsets = [17, 0], sizes = [1, 32], strides = [1, 1]} : vector<24x32xf32> to vector<1x32xf32>
    %509 = vector.extract_strided_slice %3 {offsets = [0, 17], sizes = [24, 1], strides = [1, 1]} : vector<24x24xf32> to vector<24x1xf32>
    %cst_119 = arith.constant 0.000000e+00 : f32
    %510 = vector.broadcast %cst_119 : f32 to vector<24x1xf32>
    %511 = arith.cmpf ogt, %509, %510 : vector<24x1xf32>
    %cst_120 = arith.constant 0xFF800000 : f32
    %512 = vector.shape_cast %511 : vector<24x1xi1> to vector<24x1xi1>
    %513 = vector.broadcast %512 : vector<24x1xi1> to vector<24x32xi1>
    %514 = vector.shape_cast %508 : vector<1x32xf32> to vector<1x32xf32>
    %515 = vector.broadcast %514 : vector<1x32xf32> to vector<24x32xf32>
    %516 = vector.broadcast %cst_120 : f32 to vector<24x32xf32>
    %517 = arith.select %513, %515, %516 : vector<24x32xi1>, vector<24x32xf32>
    %518 = arith.maximumf %507, %517 : vector<24x32xf32>
    %519 = vector.extract_strided_slice %296 {offsets = [18, 0], sizes = [1, 32], strides = [1, 1]} : vector<24x32xf32> to vector<1x32xf32>
    %520 = vector.extract_strided_slice %3 {offsets = [0, 18], sizes = [24, 1], strides = [1, 1]} : vector<24x24xf32> to vector<24x1xf32>
    %cst_121 = arith.constant 0.000000e+00 : f32
    %521 = vector.broadcast %cst_121 : f32 to vector<24x1xf32>
    %522 = arith.cmpf ogt, %520, %521 : vector<24x1xf32>
    %cst_122 = arith.constant 0xFF800000 : f32
    %523 = vector.shape_cast %522 : vector<24x1xi1> to vector<24x1xi1>
    %524 = vector.broadcast %523 : vector<24x1xi1> to vector<24x32xi1>
    %525 = vector.shape_cast %519 : vector<1x32xf32> to vector<1x32xf32>
    %526 = vector.broadcast %525 : vector<1x32xf32> to vector<24x32xf32>
    %527 = vector.broadcast %cst_122 : f32 to vector<24x32xf32>
    %528 = arith.select %524, %526, %527 : vector<24x32xi1>, vector<24x32xf32>
    %529 = arith.maximumf %518, %528 : vector<24x32xf32>
    %530 = vector.extract_strided_slice %296 {offsets = [19, 0], sizes = [1, 32], strides = [1, 1]} : vector<24x32xf32> to vector<1x32xf32>
    %531 = vector.extract_strided_slice %3 {offsets = [0, 19], sizes = [24, 1], strides = [1, 1]} : vector<24x24xf32> to vector<24x1xf32>
    %cst_123 = arith.constant 0.000000e+00 : f32
    %532 = vector.broadcast %cst_123 : f32 to vector<24x1xf32>
    %533 = arith.cmpf ogt, %531, %532 : vector<24x1xf32>
    %cst_124 = arith.constant 0xFF800000 : f32
    %534 = vector.shape_cast %533 : vector<24x1xi1> to vector<24x1xi1>
    %535 = vector.broadcast %534 : vector<24x1xi1> to vector<24x32xi1>
    %536 = vector.shape_cast %530 : vector<1x32xf32> to vector<1x32xf32>
    %537 = vector.broadcast %536 : vector<1x32xf32> to vector<24x32xf32>
    %538 = vector.broadcast %cst_124 : f32 to vector<24x32xf32>
    %539 = arith.select %535, %537, %538 : vector<24x32xi1>, vector<24x32xf32>
    %540 = arith.maximumf %529, %539 : vector<24x32xf32>
    %541 = vector.extract_strided_slice %296 {offsets = [20, 0], sizes = [1, 32], strides = [1, 1]} : vector<24x32xf32> to vector<1x32xf32>
    %542 = vector.extract_strided_slice %3 {offsets = [0, 20], sizes = [24, 1], strides = [1, 1]} : vector<24x24xf32> to vector<24x1xf32>
    %cst_125 = arith.constant 0.000000e+00 : f32
    %543 = vector.broadcast %cst_125 : f32 to vector<24x1xf32>
    %544 = arith.cmpf ogt, %542, %543 : vector<24x1xf32>
    %cst_126 = arith.constant 0xFF800000 : f32
    %545 = vector.shape_cast %544 : vector<24x1xi1> to vector<24x1xi1>
    %546 = vector.broadcast %545 : vector<24x1xi1> to vector<24x32xi1>
    %547 = vector.shape_cast %541 : vector<1x32xf32> to vector<1x32xf32>
    %548 = vector.broadcast %547 : vector<1x32xf32> to vector<24x32xf32>
    %549 = vector.broadcast %cst_126 : f32 to vector<24x32xf32>
    %550 = arith.select %546, %548, %549 : vector<24x32xi1>, vector<24x32xf32>
    %551 = arith.maximumf %540, %550 : vector<24x32xf32>
    %552 = vector.extract_strided_slice %296 {offsets = [21, 0], sizes = [1, 32], strides = [1, 1]} : vector<24x32xf32> to vector<1x32xf32>
    %553 = vector.extract_strided_slice %3 {offsets = [0, 21], sizes = [24, 1], strides = [1, 1]} : vector<24x24xf32> to vector<24x1xf32>
    %cst_127 = arith.constant 0.000000e+00 : f32
    %554 = vector.broadcast %cst_127 : f32 to vector<24x1xf32>
    %555 = arith.cmpf ogt, %553, %554 : vector<24x1xf32>
    %cst_128 = arith.constant 0xFF800000 : f32
    %556 = vector.shape_cast %555 : vector<24x1xi1> to vector<24x1xi1>
    %557 = vector.broadcast %556 : vector<24x1xi1> to vector<24x32xi1>
    %558 = vector.shape_cast %552 : vector<1x32xf32> to vector<1x32xf32>
    %559 = vector.broadcast %558 : vector<1x32xf32> to vector<24x32xf32>
    %560 = vector.broadcast %cst_128 : f32 to vector<24x32xf32>
    %561 = arith.select %557, %559, %560 : vector<24x32xi1>, vector<24x32xf32>
    %562 = arith.maximumf %551, %561 : vector<24x32xf32>
    %563 = vector.extract_strided_slice %296 {offsets = [22, 0], sizes = [1, 32], strides = [1, 1]} : vector<24x32xf32> to vector<1x32xf32>
    %564 = vector.extract_strided_slice %3 {offsets = [0, 22], sizes = [24, 1], strides = [1, 1]} : vector<24x24xf32> to vector<24x1xf32>
    %cst_129 = arith.constant 0.000000e+00 : f32
    %565 = vector.broadcast %cst_129 : f32 to vector<24x1xf32>
    %566 = arith.cmpf ogt, %564, %565 : vector<24x1xf32>
    %cst_130 = arith.constant 0xFF800000 : f32
    %567 = vector.shape_cast %566 : vector<24x1xi1> to vector<24x1xi1>
    %568 = vector.broadcast %567 : vector<24x1xi1> to vector<24x32xi1>
    %569 = vector.shape_cast %563 : vector<1x32xf32> to vector<1x32xf32>
    %570 = vector.broadcast %569 : vector<1x32xf32> to vector<24x32xf32>
    %571 = vector.broadcast %cst_130 : f32 to vector<24x32xf32>
    %572 = arith.select %568, %570, %571 : vector<24x32xi1>, vector<24x32xf32>
    %573 = arith.maximumf %562, %572 : vector<24x32xf32>
    %574 = vector.extract_strided_slice %296 {offsets = [23, 0], sizes = [1, 32], strides = [1, 1]} : vector<24x32xf32> to vector<1x32xf32>
    %575 = vector.extract_strided_slice %3 {offsets = [0, 23], sizes = [24, 1], strides = [1, 1]} : vector<24x24xf32> to vector<24x1xf32>
    %cst_131 = arith.constant 0.000000e+00 : f32
    %576 = vector.broadcast %cst_131 : f32 to vector<24x1xf32>
    %577 = arith.cmpf ogt, %575, %576 : vector<24x1xf32>
    %cst_132 = arith.constant 0xFF800000 : f32
    %578 = vector.shape_cast %577 : vector<24x1xi1> to vector<24x1xi1>
    %579 = vector.broadcast %578 : vector<24x1xi1> to vector<24x32xi1>
    %580 = vector.shape_cast %574 : vector<1x32xf32> to vector<1x32xf32>
    %581 = vector.broadcast %580 : vector<1x32xf32> to vector<24x32xf32>
    %582 = vector.broadcast %cst_132 : f32 to vector<24x32xf32>
    %583 = arith.select %579, %581, %582 : vector<24x32xi1>, vector<24x32xf32>
    %584 = arith.maximumf %573, %583 : vector<24x32xf32>
    %cst_133 = arith.constant 0xFF800000 : f32
    %585 = vector.broadcast %cst_133 : f32 to vector<24x32xf32>
    %586 = arith.cmpf oeq, %584, %585 : vector<24x32xf32>
    %cst_134 = arith.constant 0.000000e+00 : f32
    %587 = vector.broadcast %cst_134 : f32 to vector<24x32xf32>
    %588 = arith.select %586, %587, %584 : vector<24x32xi1>, vector<24x32xf32>
    %589 = vector.extract_strided_slice %317 {offsets = [0, 0], sizes = [24, 32], strides = [1, 1]} : vector<48x32xf32> to vector<24x32xf32>
    %590 = vector.extract_strided_slice %317 {offsets = [24, 0], sizes = [24, 32], strides = [1, 1]} : vector<48x32xf32> to vector<24x32xf32>
    %591 = vector.extract_strided_slice %318 {offsets = [0, 0], sizes = [24, 32], strides = [1, 1]} : vector<48x32xf32> to vector<24x32xf32>
    %592 = vector.extract_strided_slice %318 {offsets = [24, 0], sizes = [24, 32], strides = [1, 1]} : vector<48x32xf32> to vector<24x32xf32>
    %593 = vector.extract_strided_slice %319 {offsets = [0, 0], sizes = [24, 32], strides = [1, 1]} : vector<48x32xf32> to vector<24x32xf32>
    %594 = vector.extract_strided_slice %319 {offsets = [24, 0], sizes = [24, 32], strides = [1, 1]} : vector<48x32xf32> to vector<24x32xf32>
    %595 = vector.extract_strided_slice %314 {offsets = [0, 0], sizes = [128, 32], strides = [1, 1]} : vector<320x32xf32> to vector<128x32xf32>
    %596 = vector.extract_strided_slice %316 {offsets = [0, 0], sizes = [1, 32], strides = [1, 1]} : vector<3x32xf32> to vector<1x32xf32>
    %597 = tpu.concatenate %588, %589, %591, %296 in 1 : vector<24x32xf32>, vector<24x32xf32>, vector<24x32xf32>, vector<24x32xf32> -> vector<24x128xf32>
    %cst_135 = arith.constant dense<0.000000e+00> : vector<24x32xf32>
    %598 = tpu.matmul %597, %595, %cst_135 {dimension_numbers = #tpu.dot_dimension_numbers<[1], [0], [0], [1], [0, 0, 1, 1], [], []>} : vector<24x128xf32>, vector<128x32xf32>, vector<24x32xf32> -> vector<24x32xf32>
    %599 = vector.broadcast %596 : vector<1x32xf32> to vector<24x32xf32>
    %600 = arith.addf %598, %599 : vector<24x32xf32>
    %cst_136 = arith.constant 0.000000e+00 : f32
    %601 = vector.broadcast %cst_136 : f32 to vector<24x32xf32>
    %602 = arith.maximumf %600, %601 : vector<24x32xf32>
    %603 = vector.extract_strided_slice %314 {offsets = [128, 0], sizes = [96, 32], strides = [1, 1]} : vector<320x32xf32> to vector<96x32xf32>
    %604 = vector.extract_strided_slice %316 {offsets = [1, 0], sizes = [1, 32], strides = [1, 1]} : vector<3x32xf32> to vector<1x32xf32>
    %605 = tpu.concatenate %590, %593, %304 in 1 : vector<24x32xf32>, vector<24x32xf32>, vector<24x32xf32> -> vector<24x96xf32>
    %cst_137 = arith.constant dense<0.000000e+00> : vector<24x32xf32>
    %606 = tpu.matmul %605, %603, %cst_137 {dimension_numbers = #tpu.dot_dimension_numbers<[1], [0], [0], [1], [0, 0, 1, 1], [], []>} : vector<24x96xf32>, vector<96x32xf32>, vector<24x32xf32> -> vector<24x32xf32>
    %607 = vector.broadcast %604 : vector<1x32xf32> to vector<24x32xf32>
    %608 = arith.addf %606, %607 : vector<24x32xf32>
    %cst_138 = arith.constant 0.000000e+00 : f32
    %609 = vector.broadcast %cst_138 : f32 to vector<24x32xf32>
    %610 = arith.maximumf %608, %609 : vector<24x32xf32>
    %611 = vector.extract_strided_slice %314 {offsets = [224, 0], sizes = [96, 32], strides = [1, 1]} : vector<320x32xf32> to vector<96x32xf32>
    %612 = vector.extract_strided_slice %316 {offsets = [2, 0], sizes = [1, 32], strides = [1, 1]} : vector<3x32xf32> to vector<1x32xf32>
    %613 = tpu.concatenate %594, %592, %312 in 1 : vector<24x32xf32>, vector<24x32xf32>, vector<24x32xf32> -> vector<24x96xf32>
    %cst_139 = arith.constant dense<0.000000e+00> : vector<24x32xf32>
    %614 = tpu.matmul %613, %611, %cst_139 {dimension_numbers = #tpu.dot_dimension_numbers<[1], [0], [0], [1], [0, 0, 1, 1], [], []>} : vector<24x96xf32>, vector<96x32xf32>, vector<24x32xf32> -> vector<24x32xf32>
    %615 = vector.broadcast %612 : vector<1x32xf32> to vector<24x32xf32>
    %616 = arith.addf %614, %615 : vector<24x32xf32>
    %cst_140 = arith.constant 0.000000e+00 : f32
    %617 = vector.broadcast %cst_140 : f32 to vector<24x32xf32>
    %618 = arith.maximumf %616, %617 : vector<24x32xf32>
    %c0_141 = arith.constant 0 : index
    %c0_142 = arith.constant 0 : index
    %c0_143 = arith.constant 0 : index
    %619 = vector.load %arg7[%c0_141, %c0_142, %c0_143] : memref<3x32x32xf32, #tpu.memory_space<vmem>>, vector<1x32x32xf32>
    %620 = vector.shape_cast %619 : vector<1x32x32xf32> to vector<32x32xf32>
    %cst_144 = arith.constant dense<0.000000e+00> : vector<24x32xf32>
    %621 = tpu.matmul %602, %620, %cst_144 {dimension_numbers = #tpu.dot_dimension_numbers<[1], [0], [0], [1], [0, 0, 1, 1], [], []>} : vector<24x32xf32>, vector<32x32xf32>, vector<24x32xf32> -> vector<24x32xf32>
    %c0_145 = arith.constant 0 : index
    %c0_146 = arith.constant 0 : index
    %c0_147 = arith.constant 0 : index
    %622 = vector.load %arg8[%c0_145, %c0_146, %c0_147] : memref<3x1x32xf32, #tpu.memory_space<vmem>>, vector<1x1x32xf32>
    %623 = vector.shape_cast %622 : vector<1x1x32xf32> to vector<1x32xf32>
    %624 = vector.broadcast %623 : vector<1x32xf32> to vector<24x32xf32>
    %625 = arith.addf %621, %624 : vector<24x32xf32>
    %cst_148 = arith.constant 0.000000e+00 : f32
    %626 = vector.broadcast %cst_148 : f32 to vector<24x32xf32>
    %627 = arith.maximumf %625, %626 : vector<24x32xf32>
    %c1_149 = arith.constant 1 : index
    %c0_150 = arith.constant 0 : index
    %c0_151 = arith.constant 0 : index
    %628 = vector.load %arg7[%c1_149, %c0_150, %c0_151] : memref<3x32x32xf32, #tpu.memory_space<vmem>>, vector<1x32x32xf32>
    %629 = vector.shape_cast %628 : vector<1x32x32xf32> to vector<32x32xf32>
    %cst_152 = arith.constant dense<0.000000e+00> : vector<24x32xf32>
    %630 = tpu.matmul %627, %629, %cst_152 {dimension_numbers = #tpu.dot_dimension_numbers<[1], [0], [0], [1], [0, 0, 1, 1], [], []>} : vector<24x32xf32>, vector<32x32xf32>, vector<24x32xf32> -> vector<24x32xf32>
    %c1_153 = arith.constant 1 : index
    %c0_154 = arith.constant 0 : index
    %c0_155 = arith.constant 0 : index
    %631 = vector.load %arg8[%c1_153, %c0_154, %c0_155] : memref<3x1x32xf32, #tpu.memory_space<vmem>>, vector<1x1x32xf32>
    %632 = vector.shape_cast %631 : vector<1x1x32xf32> to vector<1x32xf32>
    %633 = vector.broadcast %632 : vector<1x32xf32> to vector<24x32xf32>
    %634 = arith.addf %630, %633 : vector<24x32xf32>
    %cst_156 = arith.constant 0.000000e+00 : f32
    %635 = vector.broadcast %cst_156 : f32 to vector<24x32xf32>
    %636 = arith.maximumf %634, %635 : vector<24x32xf32>
    %c2 = arith.constant 2 : index
    %c0_157 = arith.constant 0 : index
    %c0_158 = arith.constant 0 : index
    %637 = vector.load %arg7[%c2, %c0_157, %c0_158] : memref<3x32x32xf32, #tpu.memory_space<vmem>>, vector<1x32x32xf32>
    %638 = vector.shape_cast %637 : vector<1x32x32xf32> to vector<32x32xf32>
    %cst_159 = arith.constant dense<0.000000e+00> : vector<24x32xf32>
    %639 = tpu.matmul %636, %638, %cst_159 {dimension_numbers = #tpu.dot_dimension_numbers<[1], [0], [0], [1], [0, 0, 1, 1], [], []>} : vector<24x32xf32>, vector<32x32xf32>, vector<24x32xf32> -> vector<24x32xf32>
    %c2_160 = arith.constant 2 : index
    %c0_161 = arith.constant 0 : index
    %c0_162 = arith.constant 0 : index
    %640 = vector.load %arg8[%c2_160, %c0_161, %c0_162] : memref<3x1x32xf32, #tpu.memory_space<vmem>>, vector<1x1x32xf32>
    %641 = vector.shape_cast %640 : vector<1x1x32xf32> to vector<1x32xf32>
    %642 = vector.broadcast %641 : vector<1x32xf32> to vector<24x32xf32>
    %643 = arith.addf %639, %642 : vector<24x32xf32>
    %c0_163 = arith.constant 0 : index
    %c0_164 = arith.constant 0 : index
    %644 = vector.load %arg9[%c0_163, %c0_164] : memref<72x32xf32, #tpu.memory_space<vmem>>, vector<24x32xf32>
    tpu.vector_store %arg9[%c0_163, %c0_164], %643 {strides = array<i32>} : memref<72x32xf32, #tpu.memory_space<vmem>>, vector<24x32xf32>,
    %c24_165 = arith.constant 24 : index
    %c0_166 = arith.constant 0 : index
    %645 = vector.load %arg9[%c24_165, %c0_166] : memref<72x32xf32, #tpu.memory_space<vmem>>, vector<24x32xf32>
    tpu.vector_store %arg9[%c24_165, %c0_166], %610 {strides = array<i32>} : memref<72x32xf32, #tpu.memory_space<vmem>>, vector<24x32xf32>,
    %c48_167 = arith.constant 48 : index
    %c0_168 = arith.constant 0 : index
    %646 = vector.load %arg9[%c48_167, %c0_168] : memref<72x32xf32, #tpu.memory_space<vmem>>, vector<24x32xf32>
    tpu.vector_store %arg9[%c48_167, %c0_168], %618 {strides = array<i32>} : memref<72x32xf32, #tpu.memory_space<vmem>>, vector<24x32xf32>,
    return
  }
}

</mosaic_0001>

<llo_original>
// kernel: tpu_custom_call.1
$region0: #{tpu_custom_call.1}
  #allocation0 [shape = 'u32[]', space=smem, size = 0x4, offset = 0x4, fixed_abs, tag = 'smem constant byte address 0x4 - core index']
  #allocation1 [shape = 'u32[144,128]{1,0:T(1,128)}', space=vmem, size = 0x12000, scoped, tag = 'internal scratch']
  %s0 = inlined_call_operand.vmem [shape: f32[72,32], index: 0, kind: input, shape index: {}]
  %s1 = inlined_call_operand.vmem [shape: f32[24,24], index: 1, kind: input, shape index: {}]
  %s2 = inlined_call_operand.vmem [shape: f32[48,24], index: 2, kind: input, shape index: {}]
  %s3 = inlined_call_operand.vmem [shape: f32[48,24], index: 3, kind: input, shape index: {}]
  %s4 = inlined_call_operand.vmem [shape: f32[48,24], index: 4, kind: input, shape index: {}]
  %s5 = inlined_call_operand.vmem [shape: f32[2,320,32], index: 5, kind: input, shape index: {}]
  %s6 = inlined_call_operand.vmem [shape: f32[2,3,32], index: 6, kind: input, shape index: {}]
  %s7 = inlined_call_operand.vmem [shape: f32[3,32,32], index: 7, kind: input, shape index: {}]
  %s8 = inlined_call_operand.vmem [shape: f32[3,1,32], index: 8, kind: input, shape index: {}]
  %s9 = inlined_call_operand.vmem [shape: f32[72,32], index: 9, kind: output, shape index: {}]
  %s10 = sld [smem:[#allocation0]]
  $region46: #{tpu_custom_call.1} parent=0
    _
  %s12 = ssub.s32 1, %s10
  %s13 = scalar_select 0, %s12, %s10
  // Predicated region
  $region2: #{tpu_custom_call.1} parent=0 // pred_check
    _
  $region3: #{tpu_custom_call.1} parent=0 // pred_check_branch
    %15 = sbr.rel (0) target = $region5
  $region4: #{tpu_custom_call.1} parent=0 // pred_region
    _
  $region5: #{tpu_custom_call.1} parent=0 // pred_fallthru
    _
  // Predicated region
  $region6: #{tpu_custom_call.1} parent=0 // pred_check
    _
  $region7: #{tpu_custom_call.1} parent=0 // pred_check_branch
    %17 = sbr.rel (0) target = $region9
  $region8: #{tpu_custom_call.1} parent=0 // pred_region
    _
  $region9: #{tpu_custom_call.1} parent=0 // pred_fallthru
    _
  // Predicated region
  $region10: #{tpu_custom_call.1} parent=0 // pred_check
    _
  $region11: #{tpu_custom_call.1} parent=0 // pred_check_branch
    %19 = sbr.rel (0) target = $region13
  $region12: #{tpu_custom_call.1} parent=0 // pred_region
    _
  $region13: #{tpu_custom_call.1} parent=0 // pred_fallthru
    _
  // Predicated region
  $region14: #{tpu_custom_call.1} parent=0 // pred_check
    _
  $region15: #{tpu_custom_call.1} parent=0 // pred_check_branch
    %21 = sbr.rel (0) target = $region17
  $region16: #{tpu_custom_call.1} parent=0 // pred_region
    _
  $region17: #{tpu_custom_call.1} parent=0 // pred_fallthru
    _
  // Predicated region
  $region18: #{tpu_custom_call.1} parent=0 // pred_check
    _
  $region19: #{tpu_custom_call.1} parent=0 // pred_check_branch
    %23 = sbr.rel (0) target = $region21
  $region20: #{tpu_custom_call.1} parent=0 // pred_region
    _
  $region21: #{tpu_custom_call.1} parent=0 // pred_fallthru
    _
  // Predicated region
  $region22: #{tpu_custom_call.1} parent=0 // pred_check
    _
  $region23: #{tpu_custom_call.1} parent=0 // pred_check_branch
    %25 = sbr.rel (0) target = $region25
  $region24: #{tpu_custom_call.1} parent=0 // pred_region
    _
  $region25: #{tpu_custom_call.1} parent=0 // pred_fallthru
    _
  // Predicated region
  $region26: #{tpu_custom_call.1} parent=0 // pred_check
    _
  $region27: #{tpu_custom_call.1} parent=0 // pred_check_branch
    %27 = sbr.rel (0) target = $region29
  $region28: #{tpu_custom_call.1} parent=0 // pred_region
    _
  $region29: #{tpu_custom_call.1} parent=0 // pred_fallthru
    _
  // Predicated region
  $region30: #{tpu_custom_call.1} parent=0 // pred_check
    _
  $region31: #{tpu_custom_call.1} parent=0 // pred_check_branch
    %29 = sbr.rel (0) target = $region33
  $region32: #{tpu_custom_call.1} parent=0 // pred_region
    _
  $region33: #{tpu_custom_call.1} parent=0 // pred_fallthru
    _
  // Predicated region
  $region34: #{tpu_custom_call.1} parent=0 // pred_check
    _
  $region35: #{tpu_custom_call.1} parent=0 // pred_check_branch
    %31 = sbr.rel (0) target = $region37
  $region36: #{tpu_custom_call.1} parent=0 // pred_region
    _
  $region37: #{tpu_custom_call.1} parent=0 // pred_fallthru
    _
  %v32 = vld [vmem:[%s0] sm:$0xff]
  %v33 = vld [vmem:[%s0 + $0x8] sm:$0xff]
  %v34 = vld [vmem:[%s0 + $0x10] sm:$0xff]
  %v35 = vld [vmem:[%s0 + $0x18] sm:$0xff]
  %v36 = vld [vmem:[%s0 + $0x20] sm:$0xff]
  %v37 = vld [vmem:[%s0 + $0x28] sm:$0xff]
  %v38 = vld [vmem:[%s0 + $0x30] sm:$0xff]
  %v39 = vld [vmem:[%s0 + $0x38] sm:$0xff]
  %v40 = vld [vmem:[%s0 + $0x40] sm:$0xff]
  %v41 = vld [vmem:[%s1] sm:$0xff]
  %v42 = vld [vmem:[%s1 + $0x8] sm:$0xff]
  %v43 = vld [vmem:[%s1 + $0x10] sm:$0xff]
  %v44 = vld [vmem:[%s2] sm:$0xff]
  %v45 = vld [vmem:[%s2 + $0x8] sm:$0xff]
  %v46 = vld [vmem:[%s2 + $0x10] sm:$0xff]
  %v47 = vld [vmem:[%s2 + $0x18] sm:$0xff]
  %v48 = vld [vmem:[%s2 + $0x20] sm:$0xff]
  %v49 = vld [vmem:[%s2 + $0x28] sm:$0xff]
  %v50 = vld [vmem:[%s3] sm:$0xff]
  %v51 = vld [vmem:[%s3 + $0x8] sm:$0xff]
  %v52 = vld [vmem:[%s3 + $0x10] sm:$0xff]
  %v53 = vld [vmem:[%s3 + $0x18] sm:$0xff]
  %v54 = vld [vmem:[%s3 + $0x20] sm:$0xff]
  %v55 = vld [vmem:[%s3 + $0x28] sm:$0xff]
  %v56 = vld [vmem:[%s4] sm:$0xff]
  %v57 = vld [vmem:[%s4 + $0x8] sm:$0xff]
  %v58 = vld [vmem:[%s4 + $0x10] sm:$0xff]
  %v59 = vld [vmem:[%s4 + $0x18] sm:$0xff]
  %v60 = vld [vmem:[%s4 + $0x20] sm:$0xff]
  %v61 = vld [vmem:[%s4 + $0x28] sm:$0xff]
  %v62 = vld [vmem:[%s5] sm:$0xff]
  %v63 = vld [vmem:[%s5 + $0x8] sm:$0xff]
  %v64 = vld [vmem:[%s5 + $0x10] sm:$0xff]
  %v65 = vld [vmem:[%s5 + $0x18] sm:$0xff]
  %v66 = vld [vmem:[%s5 + $0x20] sm:$0xff]
  %v67 = vld [vmem:[%s5 + $0x28] sm:$0xff]
  %v68 = vld [vmem:[%s5 + $0x30] sm:$0xff]
  %v69 = vld [vmem:[%s5 + $0x38] sm:$0xff]
  %v70 = vld [vmem:[%s5 + $0x40] sm:$0xff]
  %v71 = vld [vmem:[%s5 + $0x48] sm:$0xff]
  %v72 = vld [vmem:[%s5 + $0x50] sm:$0xff]
  %v73 = vld [vmem:[%s5 + $0x58] sm:$0xff]
  %v74 = vld [vmem:[%s5 + $0x60] sm:$0xff]
  %v75 = vld [vmem:[%s5 + $0x68] sm:$0xff]
  %v76 = vld [vmem:[%s5 + $0x70] sm:$0xff]
  %v77 = vld [vmem:[%s5 + $0x78] sm:$0xff]
  %v78 = vld [vmem:[%s5 + $0x80] sm:$0xff]
  %v79 = vld [vmem:[%s5 + $0x88] sm:$0xff]
  %v80 = vld [vmem:[%s5 + $0x90] sm:$0xff]
  %v81 = vld [vmem:[%s5 + $0x98] sm:$0xff]
  %v82 = vld [vmem:[%s5 + $0xa0] sm:$0xff]
  %v83 = vld [vmem:[%s5 + $0xa8] sm:$0xff]
  %v84 = vld [vmem:[%s5 + $0xb0] sm:$0xff]
  %v85 = vld [vmem:[%s5 + $0xb8] sm:$0xff]
  %v86 = vld [vmem:[%s5 + $0xc0] sm:$0xff]
  %v87 = vld [vmem:[%s5 + $0xc8] sm:$0xff]
  %v88 = vld [vmem:[%s5 + $0xd0] sm:$0xff]
  %v89 = vld [vmem:[%s5 + $0xd8] sm:$0xff]
  %v90 = vld [vmem:[%s5 + $0xe0] sm:$0xff]
  %v91 = vld [vmem:[%s5 + $0xe8] sm:$0xff]
  %v92 = vld [vmem:[%s5 + $0xf0] sm:$0xff]
  %v93 = vld [vmem:[%s5 + $0xf8] sm:$0xff]
  %v94 = vld [vmem:[%s5 + $0x100] sm:$0xff]
  %v95 = vld [vmem:[%s5 + $0x108] sm:$0xff]
  %v96 = vld [vmem:[%s5 + $0x110] sm:$0xff]
  %v97 = vld [vmem:[%s5 + $0x118] sm:$0xff]
  %v98 = vld [vmem:[%s5 + $0x120] sm:$0xff]
  %v99 = vld [vmem:[%s5 + $0x128] sm:$0xff]
  %v100 = vld [vmem:[%s5 + $0x130] sm:$0xff]
  %v101 = vld [vmem:[%s5 + $0x138] sm:$0xff]
  %v102 = vld [vmem:[%s6] sm:$0x7]
  %vm103 = vcmask 195584
  %v105 = vsel %vm103, %v44, 0
  %v108 = vsel %vm103, %v45, 0
  %v111 = vsel %vm103, %v46, 0
  %v114 = vsel %vm103, %v47, 0
  %v117 = vsel %vm103, %v48, 0
  %v120 = vsel %vm103, %v49, 0
  %122 = vmatprep.subr.mxu0 0.0
  %123 = vmatpush1.msra.mxu0 %v32
  %124 = vmatprep.subr.mxu0 0.0
  %125 = vmatpush1.msra.mxu0 %v33
  %126 = vmatprep.subr.mxu0 0.0
  %127 = vmatpush1.msra.mxu0 %v34
  %128 = vmatprep.subr.mxu0 0.0
  %129 = vmatpush1.msra.mxu0 0.0
  %130 = vmatprep.subr.mxu0 0.0
  %131 = vmatpush1.msra.mxu0 0.0
  %132 = vmatprep.subr.mxu0 0.0
  %133 = vmatpush1.msra.mxu0 0.0
  %134 = vmatprep.subr.mxu0 0.0
  %135 = vmatpush1.msra.mxu0 0.0
  %136 = vmatprep.subr.mxu0 0.0
  %137 = vmatpush1.msra.mxu0 0.0
  %138 = vmatprep.subr.mxu0 0.0
  %139 = vmatpush1.msra.mxu0 0.0
  %140 = vmatprep.subr.mxu0 0.0
  %141 = vmatpush1.msra.mxu0 0.0
  %142 = vmatprep.subr.mxu0 0.0
  %143 = vmatpush1.msra.mxu0 0.0
  %144 = vmatprep.subr.mxu0 0.0
  %145 = vmatpush1.msra.mxu0 0.0
  %146 = vmatprep.subr.mxu0 0.0
  %147 = vmatpush1.msra.mxu0 0.0
  %148 = vmatprep.subr.mxu0 0.0
  %149 = vmatpush1.msra.mxu0 0.0
  %150 = vmatprep.subr.mxu0 0.0
  %151 = vmatpush1.msra.mxu0 0.0
  %152 = vmatprep.subr.mxu0 0.0
  %153 = vmatpush1.msra.mxu0 0.0
  %154 = vmatprep.subr.mxu0 0.0
  %155 = vmatpush1.msra.mxu0 0.0
  %156 = vmatprep.subr.mxu0 0.0
  %157 = vmatpush1.msra.mxu0 0.0
  %158 = vmatprep.subr.mxu0 0.0
  %159 = vmatpush1.msra.mxu0 0.0
  %160 = vmatprep.subr.mxu0 0.0
  %161 = vmatpush1.msra.mxu0 0.0
  %162 = vmatprep.subr.mxu0 0.0
  %163 = vmatpush1.msra.mxu0 0.0
  %164 = vmatprep.subr.mxu0 0.0
  %165 = vmatpush1.msra.mxu0 0.0
  %166 = vmatprep.subr.mxu0 0.0
  %167 = vmatpush1.msra.mxu0 0.0
  %168 = vmatprep.subr.mxu0 0.0
  %169 = vmatpush1.msra.mxu0 0.0
  %170 = vmatprep.subr.mxu0 0.0
  %171 = vmatpush1.msra.mxu0 0.0
  %172 = vmatprep.subr.mxu0 0.0
  %173 = vmatpush1.msra.mxu0 0.0
  %174 = vmatprep.subr.mxu0 0.0
  %175 = vmatpush1.msra.mxu0 0.0
  %176 = vmatprep.subr.mxu0 0.0
  %177 = vmatpush1.msra.mxu0 0.0
  %178 = vmatprep.subr.mxu0 0.0
  %179 = vmatpush1.msra.mxu0 0.0
  %180 = vmatprep.subr.mxu0 0.0
  %181 = vmatpush1.msra.mxu0 0.0
  %182 = vmatprep.subr.mxu0 0.0
  %183 = vmatpush1.msra.mxu0 0.0
  %184 = vmatprep.subr.mxu0 0.0
  %185 = vmatpush1.msra.mxu0 0.0
  %186 = vmatprep.mubr.f32.mxu0 0.0
  %187 = vmatmul.mubr.f32.gmra.mrb[0].mxu0 %v105
  %v188 = vpop.f32.mrb[0].mxu0
  %v189 = vadd.f32 0.0, %v188
  %v190 = vpop.f32.mrb[0].mxu0
  %191 = vmatprep.mubr.f32.mxu0 0.0
  %192 = vmatmul.mubr.f32.gmra.mrb[0].mxu0 %v108
  %v193 = vpop.f32.mrb[0].mxu0
  %v194 = vadd.f32 0.0, %v193
  %v195 = vpop.f32.mrb[0].mxu0
  %196 = vmatprep.mubr.f32.mxu0 0.0
  %197 = vmatmul.mubr.f32.gmra.mrb[0].mxu0 %v111
  %v198 = vpop.f32.mrb[0].mxu0
  %v199 = vadd.f32 0.0, %v198
  %v200 = vpop.f32.mrb[0].mxu0
  %201 = vmatprep.mubr.f32.mxu0 0.0
  %202 = vmatmul.mubr.f32.gmra.mrb[0].mxu0 %v114
  %v203 = vpop.f32.mrb[0].mxu0
  %v204 = vadd.f32 0.0, %v203
  %v205 = vpop.f32.mrb[0].mxu0
  %206 = vmatprep.mubr.f32.mxu0 0.0
  %207 = vmatmul.mubr.f32.gmra.mrb[0].mxu0 %v117
  %v208 = vpop.f32.mrb[0].mxu0
  %v209 = vadd.f32 0.0, %v208
  %v210 = vpop.f32.mrb[0].mxu0
  %211 = vmatprep.mubr.f32.mxu0 0.0
  %212 = vmatmul.mubr.f32.gmra.mrb[0].mxu0 %v120
  %v213 = vpop.f32.mrb[0].mxu0
  %v214 = vadd.f32 0.0, %v213
  %v215 = vpop.f32.mrb[0].mxu0
  %216 = vdwg.mxu0
  %v218 = vsel %vm103, %v50, 0
  %v221 = vsel %vm103, %v51, 0
  %v224 = vsel %vm103, %v52, 0
  %v227 = vsel %vm103, %v53, 0
  %v230 = vsel %vm103, %v54, 0
  %v233 = vsel %vm103, %v55, 0
  %235 = vmatprep.subr.mxu0 0.0
  %236 = vmatpush1.msra.mxu0 %v35
  %237 = vmatprep.subr.mxu0 0.0
  %238 = vmatpush1.msra.mxu0 %v36
  %239 = vmatprep.subr.mxu0 0.0
  %240 = vmatpush1.msra.mxu0 %v37
  %241 = vmatprep.subr.mxu0 0.0
  %242 = vmatpush1.msra.mxu0 0.0
  %243 = vmatprep.subr.mxu0 0.0
  %244 = vmatpush1.msra.mxu0 0.0
  %245 = vmatprep.subr.mxu0 0.0
  %246 = vmatpush1.msra.mxu0 0.0
  %247 = vmatprep.subr.mxu0 0.0
  %248 = vmatpush1.msra.mxu0 0.0
  %249 = vmatprep.subr.mxu0 0.0
  %250 = vmatpush1.msra.mxu0 0.0
  %251 = vmatprep.subr.mxu0 0.0
  %252 = vmatpush1.msra.mxu0 0.0
  %253 = vmatprep.subr.mxu0 0.0
  %254 = vmatpush1.msra.mxu0 0.0
  %255 = vmatprep.subr.mxu0 0.0
  %256 = vmatpush1.msra.mxu0 0.0
  %257 = vmatprep.subr.mxu0 0.0
  %258 = vmatpush1.msra.mxu0 0.0
  %259 = vmatprep.subr.mxu0 0.0
  %260 = vmatpush1.msra.mxu0 0.0
  %261 = vmatprep.subr.mxu0 0.0
  %262 = vmatpush1.msra.mxu0 0.0
  %263 = vmatprep.subr.mxu0 0.0
  %264 = vmatpush1.msra.mxu0 0.0
  %265 = vmatprep.subr.mxu0 0.0
  %266 = vmatpush1.msra.mxu0 0.0
  %267 = vmatprep.subr.mxu0 0.0
  %268 = vmatpush1.msra.mxu0 0.0
  %269 = vmatprep.subr.mxu0 0.0
  %270 = vmatpush1.msra.mxu0 0.0
  %271 = vmatprep.subr.mxu0 0.0
  %272 = vmatpush1.msra.mxu0 0.0
  %273 = vmatprep.subr.mxu0 0.0
  %274 = vmatpush1.msra.mxu0 0.0
  %275 = vmatprep.subr.mxu0 0.0
  %276 = vmatpush1.msra.mxu0 0.0
  %277 = vmatprep.subr.mxu0 0.0
  %278 = vmatpush1.msra.mxu0 0.0
  %279 = vmatprep.subr.mxu0 0.0
  %280 = vmatpush1.msra.mxu0 0.0
  %281 = vmatprep.subr.mxu0 0.0
  %282 = vmatpush1.msra.mxu0 0.0
  %283 = vmatprep.subr.mxu0 0.0
  %284 = vmatpush1.msra.mxu0 0.0
  %285 = vmatprep.subr.mxu0 0.0
  %286 = vmatpush1.msra.mxu0 0.0
  %287 = vmatprep.subr.mxu0 0.0
  %288 = vmatpush1.msra.mxu0 0.0
  %289 = vmatprep.subr.mxu0 0.0
  %290 = vmatpush1.msra.mxu0 0.0
  %291 = vmatprep.subr.mxu0 0.0
  %292 = vmatpush1.msra.mxu0 0.0
  %293 = vmatprep.subr.mxu0 0.0
  %294 = vmatpush1.msra.mxu0 0.0
  %295 = vmatprep.subr.mxu0 0.0
  %296 = vmatpush1.msra.mxu0 0.0
  %297 = vmatprep.subr.mxu0 0.0
  %298 = vmatpush1.msra.mxu0 0.0
  %299 = vmatprep.mubr.f32.mxu0 0.0
  %300 = vmatmul.mubr.f32.gmra.mrb[0].mxu0 %v218
  %v301 = vpop.f32.mrb[0].mxu0
  %v302 = vadd.f32 0.0, %v301
  %v303 = vpop.f32.mrb[0].mxu0
  %304 = vmatprep.mubr.f32.mxu0 0.0
  %305 = vmatmul.mubr.f32.gmra.mrb[0].mxu0 %v221
  %v306 = vpop.f32.mrb[0].mxu0
  %v307 = vadd.f32 0.0, %v306
  %v308 = vpop.f32.mrb[0].mxu0
  %309 = vmatprep.mubr.f32.mxu0 0.0
  %310 = vmatmul.mubr.f32.gmra.mrb[0].mxu0 %v224
  %v311 = vpop.f32.mrb[0].mxu0
  %v312 = vadd.f32 0.0, %v311
  %v313 = vpop.f32.mrb[0].mxu0
  %314 = vmatprep.mubr.f32.mxu0 0.0
  %315 = vmatmul.mubr.f32.gmra.mrb[0].mxu0 %v227
  %v316 = vpop.f32.mrb[0].mxu0
  %v317 = vadd.f32 0.0, %v316
  %v318 = vpop.f32.mrb[0].mxu0
  %319 = vmatprep.mubr.f32.mxu0 0.0
  %320 = vmatmul.mubr.f32.gmra.mrb[0].mxu0 %v230
  %v321 = vpop.f32.mrb[0].mxu0
  %v322 = vadd.f32 0.0, %v321
  %v323 = vpop.f32.mrb[0].mxu0
  %324 = vmatprep.mubr.f32.mxu0 0.0
  %325 = vmatmul.mubr.f32.gmra.mrb[0].mxu0 %v233
  %v326 = vpop.f32.mrb[0].mxu0
  %v327 = vadd.f32 0.0, %v326
  %v328 = vpop.f32.mrb[0].mxu0
  %329 = vdwg.mxu0
  %v331 = vsel %vm103, %v56, 0
  %v334 = vsel %vm103, %v57, 0
  %v337 = vsel %vm103, %v58, 0
  %v340 = vsel %vm103, %v59, 0
  %v343 = vsel %vm103, %v60, 0
  %v346 = vsel %vm103, %v61, 0
  %348 = vmatprep.subr.mxu0 0.0
  %349 = vmatpush1.msra.mxu0 %v38
  %350 = vmatprep.subr.mxu0 0.0
  %351 = vmatpush1.msra.mxu0 %v39
  %352 = vmatprep.subr.mxu0 0.0
  %353 = vmatpush1.msra.mxu0 %v40
  %354 = vmatprep.subr.mxu0 0.0
  %355 = vmatpush1.msra.mxu0 0.0
  %356 = vmatprep.subr.mxu0 0.0
  %357 = vmatpush1.msra.mxu0 0.0
  %358 = vmatprep.subr.mxu0 0.0
  %359 = vmatpush1.msra.mxu0 0.0
  %360 = vmatprep.subr.mxu0 0.0
  %361 = vmatpush1.msra.mxu0 0.0
  %362 = vmatprep.subr.mxu0 0.0
  %363 = vmatpush1.msra.mxu0 0.0
  %364 = vmatprep.subr.mxu0 0.0
  %365 = vmatpush1.msra.mxu0 0.0
  %366 = vmatprep.subr.mxu0 0.0
  %367 = vmatpush1.msra.mxu0 0.0
  %368 = vmatprep.subr.mxu0 0.0
  %369 = vmatpush1.msra.mxu0 0.0
  %370 = vmatprep.subr.mxu0 0.0
  %371 = vmatpush1.msra.mxu0 0.0
  %372 = vmatprep.subr.mxu0 0.0
  %373 = vmatpush1.msra.mxu0 0.0
  %374 = vmatprep.subr.mxu0 0.0
  %375 = vmatpush1.msra.mxu0 0.0
  %376 = vmatprep.subr.mxu0 0.0
  %377 = vmatpush1.msra.mxu0 0.0
  %378 = vmatprep.subr.mxu0 0.0
  %379 = vmatpush1.msra.mxu0 0.0
  %380 = vmatprep.subr.mxu0 0.0
  %381 = vmatpush1.msra.mxu0 0.0
  %382 = vmatprep.subr.mxu0 0.0
  %383 = vmatpush1.msra.mxu0 0.0
  %384 = vmatprep.subr.mxu0 0.0
  %385 = vmatpush1.msra.mxu0 0.0
  %386 = vmatprep.subr.mxu0 0.0
  %387 = vmatpush1.msra.mxu0 0.0
  %388 = vmatprep.subr.mxu0 0.0
  %389 = vmatpush1.msra.mxu0 0.0
  %390 = vmatprep.subr.mxu0 0.0
  %391 = vmatpush1.msra.mxu0 0.0
  %392 = vmatprep.subr.mxu0 0.0
  %393 = vmatpush1.msra.mxu0 0.0
  %394 = vmatprep.subr.mxu0 0.0
  %395 = vmatpush1.msra.mxu0 0.0
  %396 = vmatprep.subr.mxu0 0.0
  %397 = vmatpush1.msra.mxu0 0.0
  %398 = vmatprep.subr.mxu0 0.0
  %399 = vmatpush1.msra.mxu0 0.0
  %400 = vmatprep.subr.mxu0 0.0
  %401 = vmatpush1.msra.mxu0 0.0
  %402 = vmatprep.subr.mxu0 0.0
  %403 = vmatpush1.msra.mxu0 0.0
  %404 = vmatprep.subr.mxu0 0.0
  %405 = vmatpush1.msra.mxu0 0.0
  %406 = vmatprep.subr.mxu0 0.0
  %407 = vmatpush1.msra.mxu0 0.0
  %408 = vmatprep.subr.mxu0 0.0
  %409 = vmatpush1.msra.mxu0 0.0
  %410 = vmatprep.subr.mxu0 0.0
  %411 = vmatpush1.msra.mxu0 0.0
  %412 = vmatprep.mubr.f32.mxu0 0.0
  %413 = vmatmul.mubr.f32.gmra.mrb[0].mxu0 %v331
  %v414 = vpop.f32.mrb[0].mxu0
  %v415 = vadd.f32 0.0, %v414
  %v416 = vpop.f32.mrb[0].mxu0
  %417 = vmatprep.mubr.f32.mxu0 0.0
  %418 = vmatmul.mubr.f32.gmra.mrb[0].mxu0 %v334
  %v419 = vpop.f32.mrb[0].mxu0
  %v420 = vadd.f32 0.0, %v419
  %v421 = vpop.f32.mrb[0].mxu0
  %422 = vmatprep.mubr.f32.mxu0 0.0
  %423 = vmatmul.mubr.f32.gmra.mrb[0].mxu0 %v337
  %v424 = vpop.f32.mrb[0].mxu0
  %v425 = vadd.f32 0.0, %v424
  %v426 = vpop.f32.mrb[0].mxu0
  %427 = vmatprep.mubr.f32.mxu0 0.0
  %428 = vmatmul.mubr.f32.gmra.mrb[0].mxu0 %v340
  %v429 = vpop.f32.mrb[0].mxu0
  %v430 = vadd.f32 0.0, %v429
  %v431 = vpop.f32.mrb[0].mxu0
  %432 = vmatprep.mubr.f32.mxu0 0.0
  %433 = vmatmul.mubr.f32.gmra.mrb[0].mxu0 %v343
  %v434 = vpop.f32.mrb[0].mxu0
  %v435 = vadd.f32 0.0, %v434
  %v436 = vpop.f32.mrb[0].mxu0
  %437 = vmatprep.mubr.f32.mxu0 0.0
  %438 = vmatmul.mubr.f32.gmra.mrb[0].mxu0 %v346
  %v439 = vpop.f32.mrb[0].mxu0
  %v440 = vadd.f32 0.0, %v439
  %v441 = vpop.f32.mrb[0].mxu0
  %442 = vdwg.mxu0
  %vm443 = vcmp.gt.f32.partialorder %v41, 0.0
  %vm444 = vcmp.gt.f32.partialorder %v42, 0.0
  %vm445 = vcmp.gt.f32.partialorder %v43, 0.0
  %v446 = vsel %vm443, 1, 0
  %v447 = vsel %vm444, 1, 0
  %v448 = vsel %vm445, 1, 0
  %449 = vset.pattern.permute.xlu0 0
  %450 = vperm.xlu0 %449, %v446
  %v451 = vpop.permute.xlu0 %450
  %452 = vset.pattern.permute.xlu0 0
  %453 = vperm.xlu0 %452, %v447
  %v454 = vpop.permute.xlu0 %453
  %455 = vset.pattern.permute.xlu0 0
  %456 = vperm.xlu0 %455, %v448
  %v457 = vpop.permute.xlu0 %456
  %vm458 = vcmp.eq.s32.totalorder %v451, 1
  %vm459 = vcmp.eq.s32.totalorder %v454, 1
  %vm460 = vcmp.eq.s32.totalorder %v457, 1
  %v461 = vlaneseq
  %v462 = vshrl.u32 %v461, 7
  %v463 = vsub.s32 0, %v462
  %v464 = vrot.slane %v32, %v463
  %v465 = vsel %vm458, %v464, -inf
  %v466 = vsel %vm459, %v464, -inf
  %v467 = vsel %vm460, %v464, -inf
  %468 = vset.pattern.permute.xlu0 1
  %469 = vperm.xlu0 %468, %v446
  %v470 = vpop.permute.xlu0 %469
  %471 = vset.pattern.permute.xlu0 1
  %472 = vperm.xlu0 %471, %v447
  %v473 = vpop.permute.xlu0 %472
  %474 = vset.pattern.permute.xlu0 1
  %475 = vperm.xlu0 %474, %v448
  %v476 = vpop.permute.xlu0 %475
  %vm477 = vcmp.eq.s32.totalorder %v470, 1
  %vm478 = vcmp.eq.s32.totalorder %v473, 1
  %vm479 = vcmp.eq.s32.totalorder %v476, 1
  %v480 = vlaneseq
  %v481 = vshrl.u32 %v480, 7
  %v482 = vsub.s32 1, %v481
  %v483 = vrot.slane %v32, %v482
  %v484 = vsel %vm477, %v483, -inf
  %v485 = vsel %vm478, %v483, -inf
  %v486 = vsel %vm479, %v483, -inf
  %v487 = vmax.f32 %v465, %v484
  %v488 = vmax.f32 %v466, %v485
  %v489 = vmax.f32 %v467, %v486
  %490 = vset.pattern.permute.xlu0 2
  %491 = vperm.xlu0 %490, %v446
  %v492 = vpop.permute.xlu0 %491
  %493 = vset.pattern.permute.xlu0 2
  %494 = vperm.xlu0 %493, %v447
  %v495 = vpop.permute.xlu0 %494
  %496 = vset.pattern.permute.xlu0 2
  %497 = vperm.xlu0 %496, %v448
  %v498 = vpop.permute.xlu0 %497
  %vm499 = vcmp.eq.s32.totalorder %v492, 1
  %vm500 = vcmp.eq.s32.totalorder %v495, 1
  %vm501 = vcmp.eq.s32.totalorder %v498, 1
  %v502 = vlaneseq
  %v503 = vshrl.u32 %v502, 7
  %v504 = vsub.s32 2, %v503
  %v505 = vrot.slane %v32, %v504
  %v506 = vsel %vm499, %v505, -inf
  %v507 = vsel %vm500, %v505, -inf
  %v508 = vsel %vm501, %v505, -inf
  %v509 = vmax.f32 %v487, %v506
  %v510 = vmax.f32 %v488, %v507
  %v511 = vmax.f32 %v489, %v508
  %512 = vset.pattern.permute.xlu0 3
  %513 = vperm.xlu0 %512, %v446
  %v514 = vpop.permute.xlu0 %513
  %515 = vset.pattern.permute.xlu0 3
  %516 = vperm.xlu0 %515, %v447
  %v517 = vpop.permute.xlu0 %516
  %518 = vset.pattern.permute.xlu0 3
  %519 = vperm.xlu0 %518, %v448
  %v520 = vpop.permute.xlu0 %519
  %vm521 = vcmp.eq.s32.totalorder %v514, 1
  %vm522 = vcmp.eq.s32.totalorder %v517, 1
  %vm523 = vcmp.eq.s32.totalorder %v520, 1
  %v524 = vlaneseq
  %v525 = vshrl.u32 %v524, 7
  %v526 = vsub.s32 3, %v525
  %v527 = vrot.slane %v32, %v526
  %v528 = vsel %vm521, %v527, -inf
  %v529 = vsel %vm522, %v527, -inf
  %v530 = vsel %vm523, %v527, -inf
  %v531 = vmax.f32 %v509, %v528
  %v532 = vmax.f32 %v510, %v529
  %v533 = vmax.f32 %v511, %v530
  %534 = vset.pattern.permute.xlu0 4
  %535 = vperm.xlu0 %534, %v446
  %v536 = vpop.permute.xlu0 %535
  %537 = vset.pattern.permute.xlu0 4
  %538 = vperm.xlu0 %537, %v447
  %v539 = vpop.permute.xlu0 %538
  %540 = vset.pattern.permute.xlu0 4
  %541 = vperm.xlu0 %540, %v448
  %v542 = vpop.permute.xlu0 %541
  %vm543 = vcmp.eq.s32.totalorder %v536, 1
  %vm544 = vcmp.eq.s32.totalorder %v539, 1
  %vm545 = vcmp.eq.s32.totalorder %v542, 1
  %v546 = vlaneseq
  %v547 = vshrl.u32 %v546, 7
  %v548 = vsub.s32 4, %v547
  %v549 = vrot.slane %v32, %v548
  %v550 = vsel %vm543, %v549, -inf
  %v551 = vsel %vm544, %v549, -inf
  %v552 = vsel %vm545, %v549, -inf
  %v553 = vmax.f32 %v531, %v550
  %v554 = vmax.f32 %v532, %v551
  %v555 = vmax.f32 %v533, %v552
  %556 = vset.pattern.permute.xlu0 5
  %557 = vperm.xlu0 %556, %v446
  %v558 = vpop.permute.xlu0 %557
  %559 = vset.pattern.permute.xlu0 5
  %560 = vperm.xlu0 %559, %v447
  %v561 = vpop.permute.xlu0 %560
  %562 = vset.pattern.permute.xlu0 5
  %563 = vperm.xlu0 %562, %v448
  %v564 = vpop.permute.xlu0 %563
  %vm565 = vcmp.eq.s32.totalorder %v558, 1
  %vm566 = vcmp.eq.s32.totalorder %v561, 1
  %vm567 = vcmp.eq.s32.totalorder %v564, 1
  %v568 = vlaneseq
  %v569 = vshrl.u32 %v568, 7
  %v570 = vsub.s32 5, %v569
  %v571 = vrot.slane %v32, %v570
  %v572 = vsel %vm565, %v571, -inf
  %v573 = vsel %vm566, %v571, -inf
  %v574 = vsel %vm567, %v571, -inf
  %v575 = vmax.f32 %v553, %v572
  %v576 = vmax.f32 %v554, %v573
  %v577 = vmax.f32 %v555, %v574
  %578 = vset.pattern.permute.xlu0 6
  %579 = vperm.xlu0 %578, %v446
  %v580 = vpop.permute.xlu0 %579
  %581 = vset.pattern.permute.xlu0 6
  %582 = vperm.xlu0 %581, %v447
  %v583 = vpop.permute.xlu0 %582
  %584 = vset.pattern.permute.xlu0 6
  %585 = vperm.xlu0 %584, %v448
  %v586 = vpop.permute.xlu0 %585
  %vm587 = vcmp.eq.s32.totalorder %v580, 1
  %vm588 = vcmp.eq.s32.totalorder %v583, 1
  %vm589 = vcmp.eq.s32.totalorder %v586, 1
  %v590 = vlaneseq
  %v591 = vshrl.u32 %v590, 7
  %v592 = vsub.s32 6, %v591
  %v593 = vrot.slane %v32, %v592
  %v594 = vsel %vm587, %v593, -inf
  %v595 = vsel %vm588, %v593, -inf
  %v596 = vsel %vm589, %v593, -inf
  %v597 = vmax.f32 %v575, %v594
  %v598 = vmax.f32 %v576, %v595
  %v599 = vmax.f32 %v577, %v596
  %600 = vset.pattern.permute.xlu0 7
  %601 = vperm.xlu0 %600, %v446
  %v602 = vpop.permute.xlu0 %601
  %603 = vset.pattern.permute.xlu0 7
  %604 = vperm.xlu0 %603, %v447
  %v605 = vpop.permute.xlu0 %604
  %606 = vset.pattern.permute.xlu0 7
  %607 = vperm.xlu0 %606, %v448
  %v608 = vpop.permute.xlu0 %607
  %vm609 = vcmp.eq.s32.totalorder %v602, 1
  %vm610 = vcmp.eq.s32.totalorder %v605, 1
  %vm611 = vcmp.eq.s32.totalorder %v608, 1
  %v612 = vlaneseq
  %v613 = vshrl.u32 %v612, 7
  %v614 = vsub.s32 7, %v613
  %v615 = vrot.slane %v32, %v614
  %v616 = vsel %vm609, %v615, -inf
  %v617 = vsel %vm610, %v615, -inf
  %v618 = vsel %vm611, %v615, -inf
  %v619 = vmax.f32 %v597, %v616
  %v620 = vmax.f32 %v598, %v617
  %v621 = vmax.f32 %v599, %v618
  %622 = vset.pattern.permute.xlu0 8
  %623 = vperm.xlu0 %622, %v446
  %v624 = vpop.permute.xlu0 %623
  %625 = vset.pattern.permute.xlu0 8
  %626 = vperm.xlu0 %625, %v447
  %v627 = vpop.permute.xlu0 %626
  %628 = vset.pattern.permute.xlu0 8
  %629 = vperm.xlu0 %628, %v448
  %v630 = vpop.permute.xlu0 %629
  %vm631 = vcmp.eq.s32.totalorder %v624, 1
  %vm632 = vcmp.eq.s32.totalorder %v627, 1
  %vm633 = vcmp.eq.s32.totalorder %v630, 1
  %v634 = vlaneseq
  %v635 = vshrl.u32 %v634, 7
  %v636 = vsub.s32 0, %v635
  %v637 = vrot.slane %v33, %v636
  %v638 = vsel %vm631, %v637, -inf
  %v639 = vsel %vm632, %v637, -inf
  %v640 = vsel %vm633, %v637, -inf
  %v641 = vmax.f32 %v619, %v638
  %v642 = vmax.f32 %v620, %v639
  %v643 = vmax.f32 %v621, %v640
  %644 = vset.pattern.permute.xlu0 9
  %645 = vperm.xlu0 %644, %v446
  %v646 = vpop.permute.xlu0 %645
  %647 = vset.pattern.permute.xlu0 9
  %648 = vperm.xlu0 %647, %v447
  %v649 = vpop.permute.xlu0 %648
  %650 = vset.pattern.permute.xlu0 9
  %651 = vperm.xlu0 %650, %v448
  %v652 = vpop.permute.xlu0 %651
  %vm653 = vcmp.eq.s32.totalorder %v646, 1
  %vm654 = vcmp.eq.s32.totalorder %v649, 1
  %vm655 = vcmp.eq.s32.totalorder %v652, 1
  %v656 = vlaneseq
  %v657 = vshrl.u32 %v656, 7
  %v658 = vsub.s32 1, %v657
  %v659 = vrot.slane %v33, %v658
  %v660 = vsel %vm653, %v659, -inf
  %v661 = vsel %vm654, %v659, -inf
  %v662 = vsel %vm655, %v659, -inf
  %v663 = vmax.f32 %v641, %v660
  %v664 = vmax.f32 %v642, %v661
  %v665 = vmax.f32 %v643, %v662
  %666 = vset.pattern.permute.xlu0 10
  %667 = vperm.xlu0 %666, %v446
  %v668 = vpop.permute.xlu0 %667
  %669 = vset.pattern.permute.xlu0 10
  %670 = vperm.xlu0 %669, %v447
  %v671 = vpop.permute.xlu0 %670
  %672 = vset.pattern.permute.xlu0 10
  %673 = vperm.xlu0 %672, %v448
  %v674 = vpop.permute.xlu0 %673
  %vm675 = vcmp.eq.s32.totalorder %v668, 1
  %vm676 = vcmp.eq.s32.totalorder %v671, 1
  %vm677 = vcmp.eq.s32.totalorder %v674, 1
  %v678 = vlaneseq
  %v679 = vshrl.u32 %v678, 7
  %v680 = vsub.s32 2, %v679
  %v681 = vrot.slane %v33, %v680
  %v682 = vsel %vm675, %v681, -inf
  %v683 = vsel %vm676, %v681, -inf
  %v684 = vsel %vm677, %v681, -inf
  %v685 = vmax.f32 %v663, %v682
  %v686 = vmax.f32 %v664, %v683
  %v687 = vmax.f32 %v665, %v684
  %688 = vset.pattern.permute.xlu0 11
  %689 = vperm.xlu0 %688, %v446
  %v690 = vpop.permute.xlu0 %689
  %691 = vset.pattern.permute.xlu0 11
  %692 = vperm.xlu0 %691, %v447
  %v693 = vpop.permute.xlu0 %692
  %694 = vset.pattern.permute.xlu0 11
  %695 = vperm.xlu0 %694, %v448
  %v696 = vpop.permute.xlu0 %695
  %vm697 = vcmp.eq.s32.totalorder %v690, 1
  %vm698 = vcmp.eq.s32.totalorder %v693, 1
  %vm699 = vcmp.eq.s32.totalorder %v696, 1
  %v700 = vlaneseq
  %v701 = vshrl.u32 %v700, 7
  %v702 = vsub.s32 3, %v701
  %v703 = vrot.slane %v33, %v702
  %v704 = vsel %vm697, %v703, -inf
  %v705 = vsel %vm698, %v703, -inf
  %v706 = vsel %vm699, %v703, -inf
  %v707 = vmax.f32 %v685, %v704
  %v708 = vmax.f32 %v686, %v705
  %v709 = vmax.f32 %v687, %v706
  %710 = vset.pattern.permute.xlu0 12
  %711 = vperm.xlu0 %710, %v446
  %v712 = vpop.permute.xlu0 %711
  %713 = vset.pattern.permute.xlu0 12
  %714 = vperm.xlu0 %713, %v447
  %v715 = vpop.permute.xlu0 %714
  %716 = vset.pattern.permute.xlu0 12
  %717 = vperm.xlu0 %716, %v448
  %v718 = vpop.permute.xlu0 %717
  %vm719 = vcmp.eq.s32.totalorder %v712, 1
  %vm720 = vcmp.eq.s32.totalorder %v715, 1
  %vm721 = vcmp.eq.s32.totalorder %v718, 1
  %v722 = vlaneseq
  %v723 = vshrl.u32 %v722, 7
  %v724 = vsub.s32 4, %v723
  %v725 = vrot.slane %v33, %v724
  %v726 = vsel %vm719, %v725, -inf
  %v727 = vsel %vm720, %v725, -inf
  %v728 = vsel %vm721, %v725, -inf
  %v729 = vmax.f32 %v707, %v726
  %v730 = vmax.f32 %v708, %v727
  %v731 = vmax.f32 %v709, %v728
  %732 = vset.pattern.permute.xlu0 13
  %733 = vperm.xlu0 %732, %v446
  %v734 = vpop.permute.xlu0 %733
  %735 = vset.pattern.permute.xlu0 13
  %736 = vperm.xlu0 %735, %v447
  %v737 = vpop.permute.xlu0 %736
  %738 = vset.pattern.permute.xlu0 13
  %739 = vperm.xlu0 %738, %v448
  %v740 = vpop.permute.xlu0 %739
  %vm741 = vcmp.eq.s32.totalorder %v734, 1
  %vm742 = vcmp.eq.s32.totalorder %v737, 1
  %vm743 = vcmp.eq.s32.totalorder %v740, 1
  %v744 = vlaneseq
  %v745 = vshrl.u32 %v744, 7
  %v746 = vsub.s32 5, %v745
  %v747 = vrot.slane %v33, %v746
  %v748 = vsel %vm741, %v747, -inf
  %v749 = vsel %vm742, %v747, -inf
  %v750 = vsel %vm743, %v747, -inf
  %v751 = vmax.f32 %v729, %v748
  %v752 = vmax.f32 %v730, %v749
  %v753 = vmax.f32 %v731, %v750
  %754 = vset.pattern.permute.xlu0 14
  %755 = vperm.xlu0 %754, %v446
  %v756 = vpop.permute.xlu0 %755
  %757 = vset.pattern.permute.xlu0 14
  %758 = vperm.xlu0 %757, %v447
  %v759 = vpop.permute.xlu0 %758
  %760 = vset.pattern.permute.xlu0 14
  %761 = vperm.xlu0 %760, %v448
  %v762 = vpop.permute.xlu0 %761
  %vm763 = vcmp.eq.s32.totalorder %v756, 1
  %vm764 = vcmp.eq.s32.totalorder %v759, 1
  %vm765 = vcmp.eq.s32.totalorder %v762, 1
  %v766 = vlaneseq
  %v767 = vshrl.u32 %v766, 7
  %v768 = vsub.s32 6, %v767
  %v769 = vrot.slane %v33, %v768
  %v770 = vsel %vm763, %v769, -inf
  %v771 = vsel %vm764, %v769, -inf
  %v772 = vsel %vm765, %v769, -inf
  %v773 = vmax.f32 %v751, %v770
  %v774 = vmax.f32 %v752, %v771
  %v775 = vmax.f32 %v753, %v772
  %776 = vset.pattern.permute.xlu0 15
  %777 = vperm.xlu0 %776, %v446
  %v778 = vpop.permute.xlu0 %777
  %779 = vset.pattern.permute.xlu0 15
  %780 = vperm.xlu0 %779, %v447
  %v781 = vpop.permute.xlu0 %780
  %782 = vset.pattern.permute.xlu0 15
  %783 = vperm.xlu0 %782, %v448
  %v784 = vpop.permute.xlu0 %783
  %vm785 = vcmp.eq.s32.totalorder %v778, 1
  %vm786 = vcmp.eq.s32.totalorder %v781, 1
  %vm787 = vcmp.eq.s32.totalorder %v784, 1
  %v788 = vlaneseq
  %v789 = vshrl.u32 %v788, 7
  %v790 = vsub.s32 7, %v789
  %v791 = vrot.slane %v33, %v790
  %v792 = vsel %vm785, %v791, -inf
  %v793 = vsel %vm786, %v791, -inf
  %v794 = vsel %vm787, %v791, -inf
  %v795 = vmax.f32 %v773, %v792
  %v796 = vmax.f32 %v774, %v793
  %v797 = vmax.f32 %v775, %v794
  %798 = vset.pattern.permute.xlu0 16
  %799 = vperm.xlu0 %798, %v446
  %v800 = vpop.permute.xlu0 %799
  %801 = vset.pattern.permute.xlu0 16
  %802 = vperm.xlu0 %801, %v447
  %v803 = vpop.permute.xlu0 %802
  %804 = vset.pattern.permute.xlu0 16
  %805 = vperm.xlu0 %804, %v448
  %v806 = vpop.permute.xlu0 %805
  %vm807 = vcmp.eq.s32.totalorder %v800, 1
  %vm808 = vcmp.eq.s32.totalorder %v803, 1
  %vm809 = vcmp.eq.s32.totalorder %v806, 1
  %v810 = vlaneseq
  %v811 = vshrl.u32 %v810, 7
  %v812 = vsub.s32 0, %v811
  %v813 = vrot.slane %v34, %v812
  %v814 = vsel %vm807, %v813, -inf
  %v815 = vsel %vm808, %v813, -inf
  %v816 = vsel %vm809, %v813, -inf
  %v817 = vmax.f32 %v795, %v814
  %v818 = vmax.f32 %v796, %v815
  %v819 = vmax.f32 %v797, %v816
  %820 = vset.pattern.permute.xlu0 17
  %821 = vperm.xlu0 %820, %v446
  %v822 = vpop.permute.xlu0 %821
  %823 = vset.pattern.permute.xlu0 17
  %824 = vperm.xlu0 %823, %v447
  %v825 = vpop.permute.xlu0 %824
  %826 = vset.pattern.permute.xlu0 17
  %827 = vperm.xlu0 %826, %v448
  %v828 = vpop.permute.xlu0 %827
  %vm829 = vcmp.eq.s32.totalorder %v822, 1
  %vm830 = vcmp.eq.s32.totalorder %v825, 1
  %vm831 = vcmp.eq.s32.totalorder %v828, 1
  %v832 = vlaneseq
  %v833 = vshrl.u32 %v832, 7
  %v834 = vsub.s32 1, %v833
  %v835 = vrot.slane %v34, %v834
  %v836 = vsel %vm829, %v835, -inf
  %v837 = vsel %vm830, %v835, -inf
  %v838 = vsel %vm831, %v835, -inf
  %v839 = vmax.f32 %v817, %v836
  %v840 = vmax.f32 %v818, %v837
  %v841 = vmax.f32 %v819, %v838
  %842 = vset.pattern.permute.xlu0 18
  %843 = vperm.xlu0 %842, %v446
  %v844 = vpop.permute.xlu0 %843
  %845 = vset.pattern.permute.xlu0 18
  %846 = vperm.xlu0 %845, %v447
  %v847 = vpop.permute.xlu0 %846
  %848 = vset.pattern.permute.xlu0 18
  %849 = vperm.xlu0 %848, %v448
  %v850 = vpop.permute.xlu0 %849
  %vm851 = vcmp.eq.s32.totalorder %v844, 1
  %vm852 = vcmp.eq.s32.totalorder %v847, 1
  %vm853 = vcmp.eq.s32.totalorder %v850, 1
  %v854 = vlaneseq
  %v855 = vshrl.u32 %v854, 7
  %v856 = vsub.s32 2, %v855
  %v857 = vrot.slane %v34, %v856
  %v858 = vsel %vm851, %v857, -inf
  %v859 = vsel %vm852, %v857, -inf
  %v860 = vsel %vm853, %v857, -inf
  %v861 = vmax.f32 %v839, %v858
  %v862 = vmax.f32 %v840, %v859
  %v863 = vmax.f32 %v841, %v860
  %864 = vset.pattern.permute.xlu0 19
  %865 = vperm.xlu0 %864, %v446
  %v866 = vpop.permute.xlu0 %865
  %867 = vset.pattern.permute.xlu0 19
  %868 = vperm.xlu0 %867, %v447
  %v869 = vpop.permute.xlu0 %868
  %870 = vset.pattern.permute.xlu0 19
  %871 = vperm.xlu0 %870, %v448
  %v872 = vpop.permute.xlu0 %871
  %vm873 = vcmp.eq.s32.totalorder %v866, 1
  %vm874 = vcmp.eq.s32.totalorder %v869, 1
  %vm875 = vcmp.eq.s32.totalorder %v872, 1
  %v876 = vlaneseq
  %v877 = vshrl.u32 %v876, 7
  %v878 = vsub.s32 3, %v877
  %v879 = vrot.slane %v34, %v878
  %v880 = vsel %vm873, %v879, -inf
  %v881 = vsel %vm874, %v879, -inf
  %v882 = vsel %vm875, %v879, -inf
  %v883 = vmax.f32 %v861, %v880
  %v884 = vmax.f32 %v862, %v881
  %v885 = vmax.f32 %v863, %v882
  %886 = vset.pattern.permute.xlu0 20
  %887 = vperm.xlu0 %886, %v446
  %v888 = vpop.permute.xlu0 %887
  %889 = vset.pattern.permute.xlu0 20
  %890 = vperm.xlu0 %889, %v447
  %v891 = vpop.permute.xlu0 %890
  %892 = vset.pattern.permute.xlu0 20
  %893 = vperm.xlu0 %892, %v448
  %v894 = vpop.permute.xlu0 %893
  %vm895 = vcmp.eq.s32.totalorder %v888, 1
  %vm896 = vcmp.eq.s32.totalorder %v891, 1
  %vm897 = vcmp.eq.s32.totalorder %v894, 1
  %v898 = vlaneseq
  %v899 = vshrl.u32 %v898, 7
  %v900 = vsub.s32 4, %v899
  %v901 = vrot.slane %v34, %v900
  %v902 = vsel %vm895, %v901, -inf
  %v903 = vsel %vm896, %v901, -inf
  %v904 = vsel %vm897, %v901, -inf
  %v905 = vmax.f32 %v883, %v902
  %v906 = vmax.f32 %v884, %v903
  %v907 = vmax.f32 %v885, %v904
  %908 = vset.pattern.permute.xlu0 21
  %909 = vperm.xlu0 %908, %v446
  %v910 = vpop.permute.xlu0 %909
  %911 = vset.pattern.permute.xlu0 21
  %912 = vperm.xlu0 %911, %v447
  %v913 = vpop.permute.xlu0 %912
  %914 = vset.pattern.permute.xlu0 21
  %915 = vperm.xlu0 %914, %v448
  %v916 = vpop.permute.xlu0 %915
  %vm917 = vcmp.eq.s32.totalorder %v910, 1
  %vm918 = vcmp.eq.s32.totalorder %v913, 1
  %vm919 = vcmp.eq.s32.totalorder %v916, 1
  %v920 = vlaneseq
  %v921 = vshrl.u32 %v920, 7
  %v922 = vsub.s32 5, %v921
  %v923 = vrot.slane %v34, %v922
  %v924 = vsel %vm917, %v923, -inf
  %v925 = vsel %vm918, %v923, -inf
  %v926 = vsel %vm919, %v923, -inf
  %v927 = vmax.f32 %v905, %v924
  %v928 = vmax.f32 %v906, %v925
  %v929 = vmax.f32 %v907, %v926
  %930 = vset.pattern.permute.xlu0 22
  %931 = vperm.xlu0 %930, %v446
  %v932 = vpop.permute.xlu0 %931
  %933 = vset.pattern.permute.xlu0 22
  %934 = vperm.xlu0 %933, %v447
  %v935 = vpop.permute.xlu0 %934
  %936 = vset.pattern.permute.xlu0 22
  %937 = vperm.xlu0 %936, %v448
  %v938 = vpop.permute.xlu0 %937
  %vm939 = vcmp.eq.s32.totalorder %v932, 1
  %vm940 = vcmp.eq.s32.totalorder %v935, 1
  %vm941 = vcmp.eq.s32.totalorder %v938, 1
  %v942 = vlaneseq
  %v943 = vshrl.u32 %v942, 7
  %v944 = vsub.s32 6, %v943
  %v945 = vrot.slane %v34, %v944
  %v946 = vsel %vm939, %v945, -inf
  %v947 = vsel %vm940, %v945, -inf
  %v948 = vsel %vm941, %v945, -inf
  %v949 = vmax.f32 %v927, %v946
  %v950 = vmax.f32 %v928, %v947
  %v951 = vmax.f32 %v929, %v948
  %952 = vset.pattern.permute.xlu0 23
  %953 = vperm.xlu0 %952, %v446
  %v954 = vpop.permute.xlu0 %953
  %955 = vset.pattern.permute.xlu0 23
  %956 = vperm.xlu0 %955, %v447
  %v957 = vpop.permute.xlu0 %956
  %958 = vset.pattern.permute.xlu0 23
  %959 = vperm.xlu0 %958, %v448
  %v960 = vpop.permute.xlu0 %959
  %vm961 = vcmp.eq.s32.totalorder %v954, 1
  %vm962 = vcmp.eq.s32.totalorder %v957, 1
  %vm963 = vcmp.eq.s32.totalorder %v960, 1
  %v964 = vlaneseq
  %v965 = vshrl.u32 %v964, 7
  %v966 = vsub.s32 7, %v965
  %v967 = vrot.slane %v34, %v966
  %v968 = vsel %vm961, %v967, -inf
  %v969 = vsel %vm962, %v967, -inf
  %v970 = vsel %vm963, %v967, -inf
  %v971 = vmax.f32 %v949, %v968
  %v972 = vmax.f32 %v950, %v969
  %v973 = vmax.f32 %v951, %v970
  %vm974 = vcmp.eq.f32.partialorder %v971, -inf
  %vm975 = vcmp.eq.f32.partialorder %v972, -inf
  %vm976 = vcmp.eq.f32.partialorder %v973, -inf
  %v977 = vsel %vm974, 0.0, %v971
  %v978 = vsel %vm975, 0.0, %v972
  %v979 = vsel %vm976, 0.0, %v973
  %983 = vrot.lane.b32.xlu0 %v189, 32
  %v984 = vpop.permute.xlu0 %983
  %985 = vrot.lane.b32.xlu0 %v194, 32
  %v986 = vpop.permute.xlu0 %985
  %987 = vrot.lane.b32.xlu0 %v199, 32
  %v988 = vpop.permute.xlu0 %987
  %995 = vrot.lane.b32.xlu0 %v302, 64
  %v996 = vpop.permute.xlu0 %995
  %997 = vrot.lane.b32.xlu0 %v307, 64
  %v998 = vpop.permute.xlu0 %997
  %999 = vrot.lane.b32.xlu0 %v312, 64
  %v1000 = vpop.permute.xlu0 %999
  %1007 = vrot.lane.b32.xlu0 %v32, 96
  %v1008 = vpop.permute.xlu0 %1007
  %1009 = vrot.lane.b32.xlu0 %v33, 96
  %v1010 = vpop.permute.xlu0 %1009
  %1011 = vrot.lane.b32.xlu0 %v34, 96
  %v1012 = vpop.permute.xlu0 %1011
  %vm1016 = vcmask 261120
  %v1017 = vsel %vm1016, %v977, %v984
  %v1018 = vsel %vm1016, %v978, %v986
  %v1019 = vsel %vm1016, %v979, %v988
  %vm1020 = vcmask 523264
  %v1021 = vsel %vm1020, %v1017, %v996
  %v1022 = vsel %vm1020, %v1018, %v998
  %v1023 = vsel %vm1020, %v1019, %v1000
  %vm1024 = vcmask 785408
  %v1025 = vsel %vm1024, %v1021, %v1008
  %v1026 = vsel %vm1024, %v1022, %v1010
  %v1027 = vsel %vm1024, %v1023, %v1012
  %v1028 = vlaneseq
  %v1029 = vshrl.u32 %v1028, 7
  %v1030 = vsub.s32 0, %v1029
  %v1031 = vrot.slane %v102, %v1030
  %1032 = vmatprep.subr.mxu0 0.0
  %1033 = vmatpush1.msra.mxu0 %v62
  %1034 = vmatprep.subr.mxu0 0.0
  %1035 = vmatpush1.msra.mxu0 %v63
  %1036 = vmatprep.subr.mxu0 0.0
  %1037 = vmatpush1.msra.mxu0 %v64
  %1038 = vmatprep.subr.mxu0 0.0
  %1039 = vmatpush1.msra.mxu0 %v65
  %1040 = vmatprep.subr.mxu0 0.0
  %1041 = vmatpush1.msra.mxu0 %v66
  %1042 = vmatprep.subr.mxu0 0.0
  %1043 = vmatpush1.msra.mxu0 %v67
  %1044 = vmatprep.subr.mxu0 0.0
  %1045 = vmatpush1.msra.mxu0 %v68
  %1046 = vmatprep.subr.mxu0 0.0
  %1047 = vmatpush1.msra.mxu0 %v69
  %1048 = vmatprep.subr.mxu0 0.0
  %1049 = vmatpush1.msra.mxu0 %v70
  %1050 = vmatprep.subr.mxu0 0.0
  %1051 = vmatpush1.msra.mxu0 %v71
  %1052 = vmatprep.subr.mxu0 0.0
  %1053 = vmatpush1.msra.mxu0 %v72
  %1054 = vmatprep.subr.mxu0 0.0
  %1055 = vmatpush1.msra.mxu0 %v73
  %1056 = vmatprep.subr.mxu0 0.0
  %1057 = vmatpush1.msra.mxu0 %v74
  %1058 = vmatprep.subr.mxu0 0.0
  %1059 = vmatpush1.msra.mxu0 %v75
  %1060 = vmatprep.subr.mxu0 0.0
  %1061 = vmatpush1.msra.mxu0 %v76
  %1062 = vmatprep.subr.mxu0 0.0
  %1063 = vmatpush1.msra.mxu0 %v77
  %1064 = vmatprep.subr.mxu0 0.0
  %1065 = vmatpush1.msra.mxu0 0.0
  %1066 = vmatprep.subr.mxu0 0.0
  %1067 = vmatpush1.msra.mxu0 0.0
  %1068 = vmatprep.subr.mxu0 0.0
  %1069 = vmatpush1.msra.mxu0 0.0
  %1070 = vmatprep.subr.mxu0 0.0
  %1071 = vmatpush1.msra.mxu0 0.0
  %1072 = vmatprep.subr.mxu0 0.0
  %1073 = vmatpush1.msra.mxu0 0.0
  %1074 = vmatprep.subr.mxu0 0.0
  %1075 = vmatpush1.msra.mxu0 0.0
  %1076 = vmatprep.subr.mxu0 0.0
  %1077 = vmatpush1.msra.mxu0 0.0
  %1078 = vmatprep.subr.mxu0 0.0
  %1079 = vmatpush1.msra.mxu0 0.0
  %1080 = vmatprep.subr.mxu0 0.0
  %1081 = vmatpush1.msra.mxu0 0.0
  %1082 = vmatprep.subr.mxu0 0.0
  %1083 = vmatpush1.msra.mxu0 0.0
  %1084 = vmatprep.subr.mxu0 0.0
  %1085 = vmatpush1.msra.mxu0 0.0
  %1086 = vmatprep.subr.mxu0 0.0
  %1087 = vmatpush1.msra.mxu0 0.0
  %1088 = vmatprep.subr.mxu0 0.0
  %1089 = vmatpush1.msra.mxu0 0.0
  %1090 = vmatprep.subr.mxu0 0.0
  %1091 = vmatpush1.msra.mxu0 0.0
  %1092 = vmatprep.subr.mxu0 0.0
  %1093 = vmatpush1.msra.mxu0 0.0
  %1094 = vmatprep.subr.mxu0 0.0
  %1095 = vmatpush1.msra.mxu0 0.0
  %1096 = vmatprep.mubr.f32.mxu0 0.0
  %1097 = vmatmul.mubr.f32.gmra.mrb[0].mxu0 %v1025
  %v1098 = vpop.f32.mrb[0].mxu0
  %v1099 = vadd.f32 %v1031, %v1098
  %v1100 = vpop.f32.mrb[0].mxu0
  %1101 = vmatprep.mubr.f32.mxu0 0.0
  %1102 = vmatmul.mubr.f32.gmra.mrb[0].mxu0 %v1026
  %v1103 = vpop.f32.mrb[0].mxu0
  %v1104 = vadd.f32 %v1031, %v1103
  %v1105 = vpop.f32.mrb[0].mxu0
  %1106 = vmatprep.mubr.f32.mxu0 0.0
  %1107 = vmatmul.mubr.f32.gmra.mrb[0].mxu0 %v1027
  %v1108 = vpop.f32.mrb[0].mxu0
  %v1109 = vadd.f32 %v1031, %v1108
  %v1110 = vpop.f32.mrb[0].mxu0
  %1111 = vdwg.mxu0
  %v1112 = vmax.f32 %v1099, 0.0
  %v1113 = vmax.f32 %v1104, 0.0
  %v1114 = vmax.f32 %v1109, 0.0
  %1118 = vrot.lane.b32.xlu0 %v415, 32
  %v1119 = vpop.permute.xlu0 %1118
  %1120 = vrot.lane.b32.xlu0 %v420, 32
  %v1121 = vpop.permute.xlu0 %1120
  %1122 = vrot.lane.b32.xlu0 %v425, 32
  %v1123 = vpop.permute.xlu0 %1122
  %1130 = vrot.lane.b32.xlu0 %v35, 64
  %v1131 = vpop.permute.xlu0 %1130
  %1132 = vrot.lane.b32.xlu0 %v36, 64
  %v1133 = vpop.permute.xlu0 %1132
  %1134 = vrot.lane.b32.xlu0 %v37, 64
  %v1135 = vpop.permute.xlu0 %1134
  %v1139 = vsel %vm1016, %v204, %v1119
  %v1140 = vsel %vm1016, %v209, %v1121
  %v1141 = vsel %vm1016, %v214, %v1123
  %v1142 = vsel %vm1020, %v1139, %v1131
  %v1143 = vsel %vm1020, %v1140, %v1133
  %v1144 = vsel %vm1020, %v1141, %v1135
  %v1145 = vlaneseq
  %v1146 = vshrl.u32 %v1145, 7
  %v1147 = vsub.s32 1, %v1146
  %v1148 = vrot.slane %v102, %v1147
  %v1150 = vsel %vm1024, %v1142, 0
  %v1153 = vsel %vm1024, %v1143, 0
  %v1156 = vsel %vm1024, %v1144, 0
  %1158 = vmatprep.subr.mxu0 0.0
  %1159 = vmatpush1.msra.mxu0 %v78
  %1160 = vmatprep.subr.mxu0 0.0
  %1161 = vmatpush1.msra.mxu0 %v79
  %1162 = vmatprep.subr.mxu0 0.0
  %1163 = vmatpush1.msra.mxu0 %v80
  %1164 = vmatprep.subr.mxu0 0.0
  %1165 = vmatpush1.msra.mxu0 %v81
  %1166 = vmatprep.subr.mxu0 0.0
  %1167 = vmatpush1.msra.mxu0 %v82
  %1168 = vmatprep.subr.mxu0 0.0
  %1169 = vmatpush1.msra.mxu0 %v83
  %1170 = vmatprep.subr.mxu0 0.0
  %1171 = vmatpush1.msra.mxu0 %v84
  %1172 = vmatprep.subr.mxu0 0.0
  %1173 = vmatpush1.msra.mxu0 %v85
  %1174 = vmatprep.subr.mxu0 0.0
  %1175 = vmatpush1.msra.mxu0 %v86
  %1176 = vmatprep.subr.mxu0 0.0
  %1177 = vmatpush1.msra.mxu0 %v87
  %1178 = vmatprep.subr.mxu0 0.0
  %1179 = vmatpush1.msra.mxu0 %v88
  %1180 = vmatprep.subr.mxu0 0.0
  %1181 = vmatpush1.msra.mxu0 %v89
  %1182 = vmatprep.subr.mxu0 0.0
  %1183 = vmatpush1.msra.mxu0 0.0
  %1184 = vmatprep.subr.mxu0 0.0
  %1185 = vmatpush1.msra.mxu0 0.0
  %1186 = vmatprep.subr.mxu0 0.0
  %1187 = vmatpush1.msra.mxu0 0.0
  %1188 = vmatprep.subr.mxu0 0.0
  %1189 = vmatpush1.msra.mxu0 0.0
  %1190 = vmatprep.subr.mxu0 0.0
  %1191 = vmatpush1.msra.mxu0 0.0
  %1192 = vmatprep.subr.mxu0 0.0
  %1193 = vmatpush1.msra.mxu0 0.0
  %1194 = vmatprep.subr.mxu0 0.0
  %1195 = vmatpush1.msra.mxu0 0.0
  %1196 = vmatprep.subr.mxu0 0.0
  %1197 = vmatpush1.msra.mxu0 0.0
  %1198 = vmatprep.subr.mxu0 0.0
  %1199 = vmatpush1.msra.mxu0 0.0
  %1200 = vmatprep.subr.mxu0 0.0
  %1201 = vmatpush1.msra.mxu0 0.0
  %1202 = vmatprep.subr.mxu0 0.0
  %1203 = vmatpush1.msra.mxu0 0.0
  %1204 = vmatprep.subr.mxu0 0.0
  %1205 = vmatpush1.msra.mxu0 0.0
  %1206 = vmatprep.subr.mxu0 0.0
  %1207 = vmatpush1.msra.mxu0 0.0
  %1208 = vmatprep.subr.mxu0 0.0
  %1209 = vmatpush1.msra.mxu0 0.0
  %1210 = vmatprep.subr.mxu0 0.0
  %1211 = vmatpush1.msra.mxu0 0.0
  %1212 = vmatprep.subr.mxu0 0.0
  %1213 = vmatpush1.msra.mxu0 0.0
  %1214 = vmatprep.subr.mxu0 0.0
  %1215 = vmatpush1.msra.mxu0 0.0
  %1216 = vmatprep.subr.mxu0 0.0
  %1217 = vmatpush1.msra.mxu0 0.0
  %1218 = vmatprep.subr.mxu0 0.0
  %1219 = vmatpush1.msra.mxu0 0.0
  %1220 = vmatprep.subr.mxu0 0.0
  %1221 = vmatpush1.msra.mxu0 0.0
  %1222 = vmatprep.mubr.f32.mxu0 0.0
  %1223 = vmatmul.mubr.f32.gmra.mrb[0].mxu0 %v1150
  %v1224 = vpop.f32.mrb[0].mxu0
  %v1225 = vadd.f32 %v1148, %v1224
  %v1226 = vpop.f32.mrb[0].mxu0
  %1227 = vmatprep.mubr.f32.mxu0 0.0
  %1228 = vmatmul.mubr.f32.gmra.mrb[0].mxu0 %v1153
  %v1229 = vpop.f32.mrb[0].mxu0
  %v1230 = vadd.f32 %v1148, %v1229
  %v1231 = vpop.f32.mrb[0].mxu0
  %1232 = vmatprep.mubr.f32.mxu0 0.0
  %1233 = vmatmul.mubr.f32.gmra.mrb[0].mxu0 %v1156
  %v1234 = vpop.f32.mrb[0].mxu0
  %v1235 = vadd.f32 %v1148, %v1234
  %v1236 = vpop.f32.mrb[0].mxu0
  %1237 = vdwg.mxu0
  %v1238 = vmax.f32 %v1225, 0.0
  %v1239 = vmax.f32 %v1230, 0.0
  %v1240 = vmax.f32 %v1235, 0.0
  %1244 = vrot.lane.b32.xlu0 %v317, 32
  %v1245 = vpop.permute.xlu0 %1244
  %1246 = vrot.lane.b32.xlu0 %v322, 32
  %v1247 = vpop.permute.xlu0 %1246
  %1248 = vrot.lane.b32.xlu0 %v327, 32
  %v1249 = vpop.permute.xlu0 %1248
  %1256 = vrot.lane.b32.xlu0 %v38, 64
  %v1257 = vpop.permute.xlu0 %1256
  %1258 = vrot.lane.b32.xlu0 %v39, 64
  %v1259 = vpop.permute.xlu0 %1258
  %1260 = vrot.lane.b32.xlu0 %v40, 64
  %v1261 = vpop.permute.xlu0 %1260
  %v1265 = vsel %vm1016, %v430, %v1245
  %v1266 = vsel %vm1016, %v435, %v1247
  %v1267 = vsel %vm1016, %v440, %v1249
  %v1268 = vsel %vm1020, %v1265, %v1257
  %v1269 = vsel %vm1020, %v1266, %v1259
  %v1270 = vsel %vm1020, %v1267, %v1261
  %v1271 = vlaneseq
  %v1272 = vshrl.u32 %v1271, 7
  %v1273 = vsub.s32 2, %v1272
  %v1274 = vrot.slane %v102, %v1273
  %v1276 = vsel %vm1024, %v1268, 0
  %v1279 = vsel %vm1024, %v1269, 0
  %v1282 = vsel %vm1024, %v1270, 0
  %1284 = vmatprep.subr.mxu0 0.0
  %1285 = vmatpush1.msra.mxu0 %v90
  %1286 = vmatprep.subr.mxu0 0.0
  %1287 = vmatpush1.msra.mxu0 %v91
  %1288 = vmatprep.subr.mxu0 0.0
  %1289 = vmatpush1.msra.mxu0 %v92
  %1290 = vmatprep.subr.mxu0 0.0
  %1291 = vmatpush1.msra.mxu0 %v93
  %1292 = vmatprep.subr.mxu0 0.0
  %1293 = vmatpush1.msra.mxu0 %v94
  %1294 = vmatprep.subr.mxu0 0.0
  %1295 = vmatpush1.msra.mxu0 %v95
  %1296 = vmatprep.subr.mxu0 0.0
  %1297 = vmatpush1.msra.mxu0 %v96
  %1298 = vmatprep.subr.mxu0 0.0
  %1299 = vmatpush1.msra.mxu0 %v97
  %1300 = vmatprep.subr.mxu0 0.0
  %1301 = vmatpush1.msra.mxu0 %v98
  %1302 = vmatprep.subr.mxu0 0.0
  %1303 = vmatpush1.msra.mxu0 %v99
  %1304 = vmatprep.subr.mxu0 0.0
  %1305 = vmatpush1.msra.mxu0 %v100
  %1306 = vmatprep.subr.mxu0 0.0
  %1307 = vmatpush1.msra.mxu0 %v101
  %1308 = vmatprep.subr.mxu0 0.0
  %1309 = vmatpush1.msra.mxu0 0.0
  %1310 = vmatprep.subr.mxu0 0.0
  %1311 = vmatpush1.msra.mxu0 0.0
  %1312 = vmatprep.subr.mxu0 0.0
  %1313 = vmatpush1.msra.mxu0 0.0
  %1314 = vmatprep.subr.mxu0 0.0
  %1315 = vmatpush1.msra.mxu0 0.0
  %1316 = vmatprep.subr.mxu0 0.0
  %1317 = vmatpush1.msra.mxu0 0.0
  %1318 = vmatprep.subr.mxu0 0.0
  %1319 = vmatpush1.msra.mxu0 0.0
  %1320 = vmatprep.subr.mxu0 0.0
  %1321 = vmatpush1.msra.mxu0 0.0
  %1322 = vmatprep.subr.mxu0 0.0
  %1323 = vmatpush1.msra.mxu0 0.0
  %1324 = vmatprep.subr.mxu0 0.0
  %1325 = vmatpush1.msra.mxu0 0.0
  %1326 = vmatprep.subr.mxu0 0.0
  %1327 = vmatpush1.msra.mxu0 0.0
  %1328 = vmatprep.subr.mxu0 0.0
  %1329 = vmatpush1.msra.mxu0 0.0
  %1330 = vmatprep.subr.mxu0 0.0
  %1331 = vmatpush1.msra.mxu0 0.0
  %1332 = vmatprep.subr.mxu0 0.0
  %1333 = vmatpush1.msra.mxu0 0.0
  %1334 = vmatprep.subr.mxu0 0.0
  %1335 = vmatpush1.msra.mxu0 0.0
  %1336 = vmatprep.subr.mxu0 0.0
  %1337 = vmatpush1.msra.mxu0 0.0
  %1338 = vmatprep.subr.mxu0 0.0
  %1339 = vmatpush1.msra.mxu0 0.0
  %1340 = vmatprep.subr.mxu0 0.0
  %1341 = vmatpush1.msra.mxu0 0.0
  %1342 = vmatprep.subr.mxu0 0.0
  %1343 = vmatpush1.msra.mxu0 0.0
  %1344 = vmatprep.subr.mxu0 0.0
  %1345 = vmatpush1.msra.mxu0 0.0
  %1346 = vmatprep.subr.mxu0 0.0
  %1347 = vmatpush1.msra.mxu0 0.0
  %1348 = vmatprep.mubr.f32.mxu0 0.0
  %1349 = vmatmul.mubr.f32.gmra.mrb[0].mxu0 %v1276
  %v1350 = vpop.f32.mrb[0].mxu0
  %v1351 = vadd.f32 %v1274, %v1350
  %v1352 = vpop.f32.mrb[0].mxu0
  %1353 = vmatprep.mubr.f32.mxu0 0.0
  %1354 = vmatmul.mubr.f32.gmra.mrb[0].mxu0 %v1279
  %v1355 = vpop.f32.mrb[0].mxu0
  %v1356 = vadd.f32 %v1274, %v1355
  %v1357 = vpop.f32.mrb[0].mxu0
  %1358 = vmatprep.mubr.f32.mxu0 0.0
  %1359 = vmatmul.mubr.f32.gmra.mrb[0].mxu0 %v1282
  %v1360 = vpop.f32.mrb[0].mxu0
  %v1361 = vadd.f32 %v1274, %v1360
  %v1362 = vpop.f32.mrb[0].mxu0
  %1363 = vdwg.mxu0
  %v1364 = vmax.f32 %v1351, 0.0
  %v1365 = vmax.f32 %v1356, 0.0
  %v1366 = vmax.f32 %v1361, 0.0
  %s1367 = scalar_lea.vmem %s5, 320
  %v1368 = vld [vmem:[%s1367] sm:$0xff]
  %v1369 = vld [vmem:[%s1367 + $0x8] sm:$0xff]
  %v1370 = vld [vmem:[%s1367 + $0x10] sm:$0xff]
  %v1371 = vld [vmem:[%s1367 + $0x18] sm:$0xff]
  %v1372 = vld [vmem:[%s1367 + $0x20] sm:$0xff]
  %v1373 = vld [vmem:[%s1367 + $0x28] sm:$0xff]
  %v1374 = vld [vmem:[%s1367 + $0x30] sm:$0xff]
  %v1375 = vld [vmem:[%s1367 + $0x38] sm:$0xff]
  %v1376 = vld [vmem:[%s1367 + $0x40] sm:$0xff]
  %v1377 = vld [vmem:[%s1367 + $0x48] sm:$0xff]
  %v1378 = vld [vmem:[%s1367 + $0x50] sm:$0xff]
  %v1379 = vld [vmem:[%s1367 + $0x58] sm:$0xff]
  %v1380 = vld [vmem:[%s1367 + $0x60] sm:$0xff]
  %v1381 = vld [vmem:[%s1367 + $0x68] sm:$0xff]
  %v1382 = vld [vmem:[%s1367 + $0x70] sm:$0xff]
  %v1383 = vld [vmem:[%s1367 + $0x78] sm:$0xff]
  %v1384 = vld [vmem:[%s1367 + $0x80] sm:$0xff]
  %v1385 = vld [vmem:[%s1367 + $0x88] sm:$0xff]
  %v1386 = vld [vmem:[%s1367 + $0x90] sm:$0xff]
  %v1387 = vld [vmem:[%s1367 + $0x98] sm:$0xff]
  %v1388 = vld [vmem:[%s1367 + $0xa0] sm:$0xff]
  %v1389 = vld [vmem:[%s1367 + $0xa8] sm:$0xff]
  %v1390 = vld [vmem:[%s1367 + $0xb0] sm:$0xff]
  %v1391 = vld [vmem:[%s1367 + $0xb8] sm:$0xff]
  %v1392 = vld [vmem:[%s1367 + $0xc0] sm:$0xff]
  %v1393 = vld [vmem:[%s1367 + $0xc8] sm:$0xff]
  %v1394 = vld [vmem:[%s1367 + $0xd0] sm:$0xff]
  %v1395 = vld [vmem:[%s1367 + $0xd8] sm:$0xff]
  %v1396 = vld [vmem:[%s1367 + $0xe0] sm:$0xff]
  %v1397 = vld [vmem:[%s1367 + $0xe8] sm:$0xff]
  %v1398 = vld [vmem:[%s1367 + $0xf0] sm:$0xff]
  %v1399 = vld [vmem:[%s1367 + $0xf8] sm:$0xff]
  %v1400 = vld [vmem:[%s1367 + $0x100] sm:$0xff]
  %v1401 = vld [vmem:[%s1367 + $0x108] sm:$0xff]
  %v1402 = vld [vmem:[%s1367 + $0x110] sm:$0xff]
  %v1403 = vld [vmem:[%s1367 + $0x118] sm:$0xff]
  %v1404 = vld [vmem:[%s1367 + $0x120] sm:$0xff]
  %v1405 = vld [vmem:[%s1367 + $0x128] sm:$0xff]
  %v1406 = vld [vmem:[%s1367 + $0x130] sm:$0xff]
  %v1407 = vld [vmem:[%s1367 + $0x138] sm:$0xff]
  %s1408 = scalar_lea.vmem %s6, 4
  %v1409 = vld [vmem:[%s1408] sm:$0x7]
  %1410 = vmatprep.subr.mxu0 0.0
  %1411 = vmatpush1.msra.mxu0 %v1112
  %1412 = vmatprep.subr.mxu0 0.0
  %1413 = vmatpush1.msra.mxu0 %v1113
  %1414 = vmatprep.subr.mxu0 0.0
  %1415 = vmatpush1.msra.mxu0 %v1114
  %1416 = vmatprep.subr.mxu0 0.0
  %1417 = vmatpush1.msra.mxu0 0.0
  %1418 = vmatprep.subr.mxu0 0.0
  %1419 = vmatpush1.msra.mxu0 0.0
  %1420 = vmatprep.subr.mxu0 0.0
  %1421 = vmatpush1.msra.mxu0 0.0
  %1422 = vmatprep.subr.mxu0 0.0
  %1423 = vmatpush1.msra.mxu0 0.0
  %1424 = vmatprep.subr.mxu0 0.0
  %1425 = vmatpush1.msra.mxu0 0.0
  %1426 = vmatprep.subr.mxu0 0.0
  %1427 = vmatpush1.msra.mxu0 0.0
  %1428 = vmatprep.subr.mxu0 0.0
  %1429 = vmatpush1.msra.mxu0 0.0
  %1430 = vmatprep.subr.mxu0 0.0
  %1431 = vmatpush1.msra.mxu0 0.0
  %1432 = vmatprep.subr.mxu0 0.0
  %1433 = vmatpush1.msra.mxu0 0.0
  %1434 = vmatprep.subr.mxu0 0.0
  %1435 = vmatpush1.msra.mxu0 0.0
  %1436 = vmatprep.subr.mxu0 0.0
  %1437 = vmatpush1.msra.mxu0 0.0
  %1438 = vmatprep.subr.mxu0 0.0
  %1439 = vmatpush1.msra.mxu0 0.0
  %1440 = vmatprep.subr.mxu0 0.0
  %1441 = vmatpush1.msra.mxu0 0.0
  %1442 = vmatprep.subr.mxu0 0.0
  %1443 = vmatpush1.msra.mxu0 0.0
  %1444 = vmatprep.subr.mxu0 0.0
  %1445 = vmatpush1.msra.mxu0 0.0
  %1446 = vmatprep.subr.mxu0 0.0
  %1447 = vmatpush1.msra.mxu0 0.0
  %1448 = vmatprep.subr.mxu0 0.0
  %1449 = vmatpush1.msra.mxu0 0.0
  %1450 = vmatprep.subr.mxu0 0.0
  %1451 = vmatpush1.msra.mxu0 0.0
  %1452 = vmatprep.subr.mxu0 0.0
  %1453 = vmatpush1.msra.mxu0 0.0
  %1454 = vmatprep.subr.mxu0 0.0
  %1455 = vmatpush1.msra.mxu0 0.0
  %1456 = vmatprep.subr.mxu0 0.0
  %1457 = vmatpush1.msra.mxu0 0.0
  %1458 = vmatprep.subr.mxu0 0.0
  %1459 = vmatpush1.msra.mxu0 0.0
  %1460 = vmatprep.subr.mxu0 0.0
  %1461 = vmatpush1.msra.mxu0 0.0
  %1462 = vmatprep.subr.mxu0 0.0
  %1463 = vmatpush1.msra.mxu0 0.0
  %1464 = vmatprep.subr.mxu0 0.0
  %1465 = vmatpush1.msra.mxu0 0.0
  %1466 = vmatprep.subr.mxu0 0.0
  %1467 = vmatpush1.msra.mxu0 0.0
  %1468 = vmatprep.subr.mxu0 0.0
  %1469 = vmatpush1.msra.mxu0 0.0
  %1470 = vmatprep.subr.mxu0 0.0
  %1471 = vmatpush1.msra.mxu0 0.0
  %1472 = vmatprep.subr.mxu0 0.0
  %1473 = vmatpush1.msra.mxu0 0.0
  %1474 = vmatprep.mubr.f32.mxu0 0.0
  %1475 = vmatmul.mubr.f32.gmra.mrb[0].mxu0 %v105
  %v1476 = vpop.f32.mrb[0].mxu0
  %v1477 = vadd.f32 0.0, %v1476
  %v1478 = vpop.f32.mrb[0].mxu0
  %1479 = vmatprep.mubr.f32.mxu0 0.0
  %1480 = vmatmul.mubr.f32.gmra.mrb[0].mxu0 %v108
  %v1481 = vpop.f32.mrb[0].mxu0
  %v1482 = vadd.f32 0.0, %v1481
  %v1483 = vpop.f32.mrb[0].mxu0
  %1484 = vmatprep.mubr.f32.mxu0 0.0
  %1485 = vmatmul.mubr.f32.gmra.mrb[0].mxu0 %v111
  %v1486 = vpop.f32.mrb[0].mxu0
  %v1487 = vadd.f32 0.0, %v1486
  %v1488 = vpop.f32.mrb[0].mxu0
  %1489 = vmatprep.mubr.f32.mxu0 0.0
  %1490 = vmatmul.mubr.f32.gmra.mrb[0].mxu0 %v114
  %v1491 = vpop.f32.mrb[0].mxu0
  %v1492 = vadd.f32 0.0, %v1491
  %v1493 = vpop.f32.mrb[0].mxu0
  %1494 = vmatprep.mubr.f32.mxu0 0.0
  %1495 = vmatmul.mubr.f32.gmra.mrb[0].mxu0 %v117
  %v1496 = vpop.f32.mrb[0].mxu0
  %v1497 = vadd.f32 0.0, %v1496
  %v1498 = vpop.f32.mrb[0].mxu0
  %1499 = vmatprep.mubr.f32.mxu0 0.0
  %1500 = vmatmul.mubr.f32.gmra.mrb[0].mxu0 %v120
  %v1501 = vpop.f32.mrb[0].mxu0
  %v1502 = vadd.f32 0.0, %v1501
  %v1503 = vpop.f32.mrb[0].mxu0
  %1504 = vdwg.mxu0
  %1505 = vmatprep.subr.mxu0 0.0
  %1506 = vmatpush1.msra.mxu0 %v1238
  %1507 = vmatprep.subr.mxu0 0.0
  %1508 = vmatpush1.msra.mxu0 %v1239
  %1509 = vmatprep.subr.mxu0 0.0
  %1510 = vmatpush1.msra.mxu0 %v1240
  %1511 = vmatprep.subr.mxu0 0.0
  %1512 = vmatpush1.msra.mxu0 0.0
  %1513 = vmatprep.subr.mxu0 0.0
  %1514 = vmatpush1.msra.mxu0 0.0
  %1515 = vmatprep.subr.mxu0 0.0
  %1516 = vmatpush1.msra.mxu0 0.0
  %1517 = vmatprep.subr.mxu0 0.0
  %1518 = vmatpush1.msra.mxu0 0.0
  %1519 = vmatprep.subr.mxu0 0.0
  %1520 = vmatpush1.msra.mxu0 0.0
  %1521 = vmatprep.subr.mxu0 0.0
  %1522 = vmatpush1.msra.mxu0 0.0
  %1523 = vmatprep.subr.mxu0 0.0
  %1524 = vmatpush1.msra.mxu0 0.0
  %1525 = vmatprep.subr.mxu0 0.0
  %1526 = vmatpush1.msra.mxu0 0.0
  %1527 = vmatprep.subr.mxu0 0.0
  %1528 = vmatpush1.msra.mxu0 0.0
  %1529 = vmatprep.subr.mxu0 0.0
  %1530 = vmatpush1.msra.mxu0 0.0
  %1531 = vmatprep.subr.mxu0 0.0
  %1532 = vmatpush1.msra.mxu0 0.0
  %1533 = vmatprep.subr.mxu0 0.0
  %1534 = vmatpush1.msra.mxu0 0.0
  %1535 = vmatprep.subr.mxu0 0.0
  %1536 = vmatpush1.msra.mxu0 0.0
  %1537 = vmatprep.subr.mxu0 0.0
  %1538 = vmatpush1.msra.mxu0 0.0
  %1539 = vmatprep.subr.mxu0 0.0
  %1540 = vmatpush1.msra.mxu0 0.0
  %1541 = vmatprep.subr.mxu0 0.0
  %1542 = vmatpush1.msra.mxu0 0.0
  %1543 = vmatprep.subr.mxu0 0.0
  %1544 = vmatpush1.msra.mxu0 0.0
  %1545 = vmatprep.subr.mxu0 0.0
  %1546 = vmatpush1.msra.mxu0 0.0
  %1547 = vmatprep.subr.mxu0 0.0
  %1548 = vmatpush1.msra.mxu0 0.0
  %1549 = vmatprep.subr.mxu0 0.0
  %1550 = vmatpush1.msra.mxu0 0.0
  %1551 = vmatprep.subr.mxu0 0.0
  %1552 = vmatpush1.msra.mxu0 0.0
  %1553 = vmatprep.subr.mxu0 0.0
  %1554 = vmatpush1.msra.mxu0 0.0
  %1555 = vmatprep.subr.mxu0 0.0
  %1556 = vmatpush1.msra.mxu0 0.0
  %1557 = vmatprep.subr.mxu0 0.0
  %1558 = vmatpush1.msra.mxu0 0.0
  %1559 = vmatprep.subr.mxu0 0.0
  %1560 = vmatpush1.msra.mxu0 0.0
  %1561 = vmatprep.subr.mxu0 0.0
  %1562 = vmatpush1.msra.mxu0 0.0
  %1563 = vmatprep.subr.mxu0 0.0
  %1564 = vmatpush1.msra.mxu0 0.0
  %1565 = vmatprep.subr.mxu0 0.0
  %1566 = vmatpush1.msra.mxu0 0.0
  %1567 = vmatprep.subr.mxu0 0.0
  %1568 = vmatpush1.msra.mxu0 0.0
  %1569 = vmatprep.mubr.f32.mxu0 0.0
  %1570 = vmatmul.mubr.f32.gmra.mrb[0].mxu0 %v218
  %v1571 = vpop.f32.mrb[0].mxu0
  %v1572 = vadd.f32 0.0, %v1571
  %v1573 = vpop.f32.mrb[0].mxu0
  %1574 = vmatprep.mubr.f32.mxu0 0.0
  %1575 = vmatmul.mubr.f32.gmra.mrb[0].mxu0 %v221
  %v1576 = vpop.f32.mrb[0].mxu0
  %v1577 = vadd.f32 0.0, %v1576
  %v1578 = vpop.f32.mrb[0].mxu0
  %1579 = vmatprep.mubr.f32.mxu0 0.0
  %1580 = vmatmul.mubr.f32.gmra.mrb[0].mxu0 %v224
  %v1581 = vpop.f32.mrb[0].mxu0
  %v1582 = vadd.f32 0.0, %v1581
  %v1583 = vpop.f32.mrb[0].mxu0
  %1584 = vmatprep.mubr.f32.mxu0 0.0
  %1585 = vmatmul.mubr.f32.gmra.mrb[0].mxu0 %v227
  %v1586 = vpop.f32.mrb[0].mxu0
  %v1587 = vadd.f32 0.0, %v1586
  %v1588 = vpop.f32.mrb[0].mxu0
  %1589 = vmatprep.mubr.f32.mxu0 0.0
  %1590 = vmatmul.mubr.f32.gmra.mrb[0].mxu0 %v230
  %v1591 = vpop.f32.mrb[0].mxu0
  %v1592 = vadd.f32 0.0, %v1591
  %v1593 = vpop.f32.mrb[0].mxu0
  %1594 = vmatprep.mubr.f32.mxu0 0.0
  %1595 = vmatmul.mubr.f32.gmra.mrb[0].mxu0 %v233
  %v1596 = vpop.f32.mrb[0].mxu0
  %v1597 = vadd.f32 0.0, %v1596
  %v1598 = vpop.f32.mrb[0].mxu0
  %1599 = vdwg.mxu0
  %1600 = vmatprep.subr.mxu0 0.0
  %1601 = vmatpush1.msra.mxu0 %v1364
  %1602 = vmatprep.subr.mxu0 0.0
  %1603 = vmatpush1.msra.mxu0 %v1365
  %1604 = vmatprep.subr.mxu0 0.0
  %1605 = vmatpush1.msra.mxu0 %v1366
  %1606 = vmatprep.subr.mxu0 0.0
  %1607 = vmatpush1.msra.mxu0 0.0
  %1608 = vmatprep.subr.mxu0 0.0
  %1609 = vmatpush1.msra.mxu0 0.0
  %1610 = vmatprep.subr.mxu0 0.0
  %1611 = vmatpush1.msra.mxu0 0.0
  %1612 = vmatprep.subr.mxu0 0.0
  %1613 = vmatpush1.msra.mxu0 0.0
  %1614 = vmatprep.subr.mxu0 0.0
  %1615 = vmatpush1.msra.mxu0 0.0
  %1616 = vmatprep.subr.mxu0 0.0
  %1617 = vmatpush1.msra.mxu0 0.0
  %1618 = vmatprep.subr.mxu0 0.0
  %1619 = vmatpush1.msra.mxu0 0.0
  %1620 = vmatprep.subr.mxu0 0.0
  %1621 = vmatpush1.msra.mxu0 0.0
  %1622 = vmatprep.subr.mxu0 0.0
  %1623 = vmatpush1.msra.mxu0 0.0
  %1624 = vmatprep.subr.mxu0 0.0
  %1625 = vmatpush1.msra.mxu0 0.0
  %1626 = vmatprep.subr.mxu0 0.0
  %1627 = vmatpush1.msra.mxu0 0.0
  %1628 = vmatprep.subr.mxu0 0.0
  %1629 = vmatpush1.msra.mxu0 0.0
  %1630 = vmatprep.subr.mxu0 0.0
  %1631 = vmatpush1.msra.mxu0 0.0
  %1632 = vmatprep.subr.mxu0 0.0
  %1633 = vmatpush1.msra.mxu0 0.0
  %1634 = vmatprep.subr.mxu0 0.0
  %1635 = vmatpush1.msra.mxu0 0.0
  %1636 = vmatprep.subr.mxu0 0.0
  %1637 = vmatpush1.msra.mxu0 0.0
  %1638 = vmatprep.subr.mxu0 0.0
  %1639 = vmatpush1.msra.mxu0 0.0
  %1640 = vmatprep.subr.mxu0 0.0
  %1641 = vmatpush1.msra.mxu0 0.0
  %1642 = vmatprep.subr.mxu0 0.0
  %1643 = vmatpush1.msra.mxu0 0.0
  %1644 = vmatprep.subr.mxu0 0.0
  %1645 = vmatpush1.msra.mxu0 0.0
  %1646 = vmatprep.subr.mxu0 0.0
  %1647 = vmatpush1.msra.mxu0 0.0
  %1648 = vmatprep.subr.mxu0 0.0
  %1649 = vmatpush1.msra.mxu0 0.0
  %1650 = vmatprep.subr.mxu0 0.0
  %1651 = vmatpush1.msra.mxu0 0.0
  %1652 = vmatprep.subr.mxu0 0.0
  %1653 = vmatpush1.msra.mxu0 0.0
  %1654 = vmatprep.subr.mxu0 0.0
  %1655 = vmatpush1.msra.mxu0 0.0
  %1656 = vmatprep.subr.mxu0 0.0
  %1657 = vmatpush1.msra.mxu0 0.0
  %1658 = vmatprep.subr.mxu0 0.0
  %1659 = vmatpush1.msra.mxu0 0.0
  %1660 = vmatprep.subr.mxu0 0.0
  %1661 = vmatpush1.msra.mxu0 0.0
  %1662 = vmatprep.subr.mxu0 0.0
  %1663 = vmatpush1.msra.mxu0 0.0
  %1664 = vmatprep.mubr.f32.mxu0 0.0
  %1665 = vmatmul.mubr.f32.gmra.mrb[0].mxu0 %v331
  %v1666 = vpop.f32.mrb[0].mxu0
  %v1667 = vadd.f32 0.0, %v1666
  %v1668 = vpop.f32.mrb[0].mxu0
  %1669 = vmatprep.mubr.f32.mxu0 0.0
  %1670 = vmatmul.mubr.f32.gmra.mrb[0].mxu0 %v334
  %v1671 = vpop.f32.mrb[0].mxu0
  %v1672 = vadd.f32 0.0, %v1671
  %v1673 = vpop.f32.mrb[0].mxu0
  %1674 = vmatprep.mubr.f32.mxu0 0.0
  %1675 = vmatmul.mubr.f32.gmra.mrb[0].mxu0 %v337
  %v1676 = vpop.f32.mrb[0].mxu0
  %v1677 = vadd.f32 0.0, %v1676
  %v1678 = vpop.f32.mrb[0].mxu0
  %1679 = vmatprep.mubr.f32.mxu0 0.0
  %1680 = vmatmul.mubr.f32.gmra.mrb[0].mxu0 %v340
  %v1681 = vpop.f32.mrb[0].mxu0
  %v1682 = vadd.f32 0.0, %v1681
  %v1683 = vpop.f32.mrb[0].mxu0
  %1684 = vmatprep.mubr.f32.mxu0 0.0
  %1685 = vmatmul.mubr.f32.gmra.mrb[0].mxu0 %v343
  %v1686 = vpop.f32.mrb[0].mxu0
  %v1687 = vadd.f32 0.0, %v1686
  %v1688 = vpop.f32.mrb[0].mxu0
  %1689 = vmatprep.mubr.f32.mxu0 0.0
  %1690 = vmatmul.mubr.f32.gmra.mrb[0].mxu0 %v346
  %v1691 = vpop.f32.mrb[0].mxu0
  %v1692 = vadd.f32 0.0, %v1691
  %v1693 = vpop.f32.mrb[0].mxu0
  %1694 = vdwg.mxu0
  %v1695 = vlaneseq
  %v1696 = vshrl.u32 %v1695, 7
  %v1697 = vsub.s32 0, %v1696
  %v1698 = vrot.slane %v1112, %v1697
  %v1699 = vsel %vm458, %v1698, -inf
  %v1700 = vsel %vm459, %v1698, -inf
  %v1701 = vsel %vm460, %v1698, -inf
  %v1702 = vlaneseq
  %v1703 = vshrl.u32 %v1702, 7
  %v1704 = vsub.s32 1, %v1703
  %v1705 = vrot.slane %v1112, %v1704
  %v1706 = vsel %vm477, %v1705, -inf
  %v1707 = vsel %vm478, %v1705, -inf
  %v1708 = vsel %vm479, %v1705, -inf
  %v1709 = vmax.f32 %v1699, %v1706
  %v1710 = vmax.f32 %v1700, %v1707
  %v1711 = vmax.f32 %v1701, %v1708
  %v1712 = vlaneseq
  %v1713 = vshrl.u32 %v1712, 7
  %v1714 = vsub.s32 2, %v1713
  %v1715 = vrot.slane %v1112, %v1714
  %v1716 = vsel %vm499, %v1715, -inf
  %v1717 = vsel %vm500, %v1715, -inf
  %v1718 = vsel %vm501, %v1715, -inf
  %v1719 = vmax.f32 %v1709, %v1716
  %v1720 = vmax.f32 %v1710, %v1717
  %v1721 = vmax.f32 %v1711, %v1718
  %v1722 = vlaneseq
  %v1723 = vshrl.u32 %v1722, 7
  %v1724 = vsub.s32 3, %v1723
  %v1725 = vrot.slane %v1112, %v1724
  %v1726 = vsel %vm521, %v1725, -inf
  %v1727 = vsel %vm522, %v1725, -inf
  %v1728 = vsel %vm523, %v1725, -inf
  %v1729 = vmax.f32 %v1719, %v1726
  %v1730 = vmax.f32 %v1720, %v1727
  %v1731 = vmax.f32 %v1721, %v1728
  %v1732 = vlaneseq
  %v1733 = vshrl.u32 %v1732, 7
  %v1734 = vsub.s32 4, %v1733
  %v1735 = vrot.slane %v1112, %v1734
  %v1736 = vsel %vm543, %v1735, -inf
  %v1737 = vsel %vm544, %v1735, -inf
  %v1738 = vsel %vm545, %v1735, -inf
  %v1739 = vmax.f32 %v1729, %v1736
  %v1740 = vmax.f32 %v1730, %v1737
  %v1741 = vmax.f32 %v1731, %v1738
  %v1742 = vlaneseq
  %v1743 = vshrl.u32 %v1742, 7
  %v1744 = vsub.s32 5, %v1743
  %v1745 = vrot.slane %v1112, %v1744
  %v1746 = vsel %vm565, %v1745, -inf
  %v1747 = vsel %vm566, %v1745, -inf
  %v1748 = vsel %vm567, %v1745, -inf
  %v1749 = vmax.f32 %v1739, %v1746
  %v1750 = vmax.f32 %v1740, %v1747
  %v1751 = vmax.f32 %v1741, %v1748
  %v1752 = vlaneseq
  %v1753 = vshrl.u32 %v1752, 7
  %v1754 = vsub.s32 6, %v1753
  %v1755 = vrot.slane %v1112, %v1754
  %v1756 = vsel %vm587, %v1755, -inf
  %v1757 = vsel %vm588, %v1755, -inf
  %v1758 = vsel %vm589, %v1755, -inf
  %v1759 = vmax.f32 %v1749, %v1756
  %v1760 = vmax.f32 %v1750, %v1757
  %v1761 = vmax.f32 %v1751, %v1758
  %v1762 = vlaneseq
  %v1763 = vshrl.u32 %v1762, 7
  %v1764 = vsub.s32 7, %v1763
  %v1765 = vrot.slane %v1112, %v1764
  %v1766 = vsel %vm609, %v1765, -inf
  %v1767 = vsel %vm610, %v1765, -inf
  %v1768 = vsel %vm611, %v1765, -inf
  %v1769 = vmax.f32 %v1759, %v1766
  %v1770 = vmax.f32 %v1760, %v1767
  %v1771 = vmax.f32 %v1761, %v1768
  %v1772 = vlaneseq
  %v1773 = vshrl.u32 %v1772, 7
  %v1774 = vsub.s32 0, %v1773
  %v1775 = vrot.slane %v1113, %v1774
  %v1776 = vsel %vm631, %v1775, -inf
  %v1777 = vsel %vm632, %v1775, -inf
  %v1778 = vsel %vm633, %v1775, -inf
  %v1779 = vmax.f32 %v1769, %v1776
  %v1780 = vmax.f32 %v1770, %v1777
  %v1781 = vmax.f32 %v1771, %v1778
  %v1782 = vlaneseq
  %v1783 = vshrl.u32 %v1782, 7
  %v1784 = vsub.s32 1, %v1783
  %v1785 = vrot.slane %v1113, %v1784
  %v1786 = vsel %vm653, %v1785, -inf
  %v1787 = vsel %vm654, %v1785, -inf
  %v1788 = vsel %vm655, %v1785, -inf
  %v1789 = vmax.f32 %v1779, %v1786
  %v1790 = vmax.f32 %v1780, %v1787
  %v1791 = vmax.f32 %v1781, %v1788
  %v1792 = vlaneseq
  %v1793 = vshrl.u32 %v1792, 7
  %v1794 = vsub.s32 2, %v1793
  %v1795 = vrot.slane %v1113, %v1794
  %v1796 = vsel %vm675, %v1795, -inf
  %v1797 = vsel %vm676, %v1795, -inf
  %v1798 = vsel %vm677, %v1795, -inf
  %v1799 = vmax.f32 %v1789, %v1796
  %v1800 = vmax.f32 %v1790, %v1797
  %v1801 = vmax.f32 %v1791, %v1798
  %v1802 = vlaneseq
  %v1803 = vshrl.u32 %v1802, 7
  %v1804 = vsub.s32 3, %v1803
  %v1805 = vrot.slane %v1113, %v1804
  %v1806 = vsel %vm697, %v1805, -inf
  %v1807 = vsel %vm698, %v1805, -inf
  %v1808 = vsel %vm699, %v1805, -inf
  %v1809 = vmax.f32 %v1799, %v1806
  %v1810 = vmax.f32 %v1800, %v1807
  %v1811 = vmax.f32 %v1801, %v1808
  %v1812 = vlaneseq
  %v1813 = vshrl.u32 %v1812, 7
  %v1814 = vsub.s32 4, %v1813
  %v1815 = vrot.slane %v1113, %v1814
  %v1816 = vsel %vm719, %v1815, -inf
  %v1817 = vsel %vm720, %v1815, -inf
  %v1818 = vsel %vm721, %v1815, -inf
  %v1819 = vmax.f32 %v1809, %v1816
  %v1820 = vmax.f32 %v1810, %v1817
  %v1821 = vmax.f32 %v1811, %v1818
  %v1822 = vlaneseq
  %v1823 = vshrl.u32 %v1822, 7
  %v1824 = vsub.s32 5, %v1823
  %v1825 = vrot.slane %v1113, %v1824
  %v1826 = vsel %vm741, %v1825, -inf
  %v1827 = vsel %vm742, %v1825, -inf
  %v1828 = vsel %vm743, %v1825, -inf
  %v1829 = vmax.f32 %v1819, %v1826
  %v1830 = vmax.f32 %v1820, %v1827
  %v1831 = vmax.f32 %v1821, %v1828
  %v1832 = vlaneseq
  %v1833 = vshrl.u32 %v1832, 7
  %v1834 = vsub.s32 6, %v1833
  %v1835 = vrot.slane %v1113, %v1834
  %v1836 = vsel %vm763, %v1835, -inf
  %v1837 = vsel %vm764, %v1835, -inf
  %v1838 = vsel %vm765, %v1835, -inf
  %v1839 = vmax.f32 %v1829, %v1836
  %v1840 = vmax.f32 %v1830, %v1837
  %v1841 = vmax.f32 %v1831, %v1838
  %v1842 = vlaneseq
  %v1843 = vshrl.u32 %v1842, 7
  %v1844 = vsub.s32 7, %v1843
  %v1845 = vrot.slane %v1113, %v1844
  %v1846 = vsel %vm785, %v1845, -inf
  %v1847 = vsel %vm786, %v1845, -inf
  %v1848 = vsel %vm787, %v1845, -inf
  %v1849 = vmax.f32 %v1839, %v1846
  %v1850 = vmax.f32 %v1840, %v1847
  %v1851 = vmax.f32 %v1841, %v1848
  %v1852 = vlaneseq
  %v1853 = vshrl.u32 %v1852, 7
  %v1854 = vsub.s32 0, %v1853
  %v1855 = vrot.slane %v1114, %v1854
  %v1856 = vsel %vm807, %v1855, -inf
  %v1857 = vsel %vm808, %v1855, -inf
  %v1858 = vsel %vm809, %v1855, -inf
  %v1859 = vmax.f32 %v1849, %v1856
  %v1860 = vmax.f32 %v1850, %v1857
  %v1861 = vmax.f32 %v1851, %v1858
  %v1862 = vlaneseq
  %v1863 = vshrl.u32 %v1862, 7
  %v1864 = vsub.s32 1, %v1863
  %v1865 = vrot.slane %v1114, %v1864
  %v1866 = vsel %vm829, %v1865, -inf
  %v1867 = vsel %vm830, %v1865, -inf
  %v1868 = vsel %vm831, %v1865, -inf
  %v1869 = vmax.f32 %v1859, %v1866
  %v1870 = vmax.f32 %v1860, %v1867
  %v1871 = vmax.f32 %v1861, %v1868
  %v1872 = vlaneseq
  %v1873 = vshrl.u32 %v1872, 7
  %v1874 = vsub.s32 2, %v1873
  %v1875 = vrot.slane %v1114, %v1874
  %v1876 = vsel %vm851, %v1875, -inf
  %v1877 = vsel %vm852, %v1875, -inf
  %v1878 = vsel %vm853, %v1875, -inf
  %v1879 = vmax.f32 %v1869, %v1876
  %v1880 = vmax.f32 %v1870, %v1877
  %v1881 = vmax.f32 %v1871, %v1878
  %v1882 = vlaneseq
  %v1883 = vshrl.u32 %v1882, 7
  %v1884 = vsub.s32 3, %v1883
  %v1885 = vrot.slane %v1114, %v1884
  %v1886 = vsel %vm873, %v1885, -inf
  %v1887 = vsel %vm874, %v1885, -inf
  %v1888 = vsel %vm875, %v1885, -inf
  %v1889 = vmax.f32 %v1879, %v1886
  %v1890 = vmax.f32 %v1880, %v1887
  %v1891 = vmax.f32 %v1881, %v1888
  %v1892 = vlaneseq
  %v1893 = vshrl.u32 %v1892, 7
  %v1894 = vsub.s32 4, %v1893
  %v1895 = vrot.slane %v1114, %v1894
  %v1896 = vsel %vm895, %v1895, -inf
  %v1897 = vsel %vm896, %v1895, -inf
  %v1898 = vsel %vm897, %v1895, -inf
  %v1899 = vmax.f32 %v1889, %v1896
  %v1900 = vmax.f32 %v1890, %v1897
  %v1901 = vmax.f32 %v1891, %v1898
  %v1902 = vlaneseq
  %v1903 = vshrl.u32 %v1902, 7
  %v1904 = vsub.s32 5, %v1903
  %v1905 = vrot.slane %v1114, %v1904
  %v1906 = vsel %vm917, %v1905, -inf
  %v1907 = vsel %vm918, %v1905, -inf
  %v1908 = vsel %vm919, %v1905, -inf
  %v1909 = vmax.f32 %v1899, %v1906
  %v1910 = vmax.f32 %v1900, %v1907
  %v1911 = vmax.f32 %v1901, %v1908
  %v1912 = vlaneseq
  %v1913 = vshrl.u32 %v1912, 7
  %v1914 = vsub.s32 6, %v1913
  %v1915 = vrot.slane %v1114, %v1914
  %v1916 = vsel %vm939, %v1915, -inf
  %v1917 = vsel %vm940, %v1915, -inf
  %v1918 = vsel %vm941, %v1915, -inf
  %v1919 = vmax.f32 %v1909, %v1916
  %v1920 = vmax.f32 %v1910, %v1917
  %v1921 = vmax.f32 %v1911, %v1918
  %v1922 = vlaneseq
  %v1923 = vshrl.u32 %v1922, 7
  %v1924 = vsub.s32 7, %v1923
  %v1925 = vrot.slane %v1114, %v1924
  %v1926 = vsel %vm961, %v1925, -inf
  %v1927 = vsel %vm962, %v1925, -inf
  %v1928 = vsel %vm963, %v1925, -inf
  %v1929 = vmax.f32 %v1919, %v1926
  %v1930 = vmax.f32 %v1920, %v1927
  %v1931 = vmax.f32 %v1921, %v1928
  %vm1932 = vcmp.eq.f32.partialorder %v1929, -inf
  %vm1933 = vcmp.eq.f32.partialorder %v1930, -inf
  %vm1934 = vcmp.eq.f32.partialorder %v1931, -inf
  %v1935 = vsel %vm1932, 0.0, %v1929
  %v1936 = vsel %vm1933, 0.0, %v1930
  %v1937 = vsel %vm1934, 0.0, %v1931
  %1941 = vrot.lane.b32.xlu0 %v1477, 32
  %v1942 = vpop.permute.xlu0 %1941
  %1943 = vrot.lane.b32.xlu0 %v1482, 32
  %v1944 = vpop.permute.xlu0 %1943
  %1945 = vrot.lane.b32.xlu0 %v1487, 32
  %v1946 = vpop.permute.xlu0 %1945
  %1953 = vrot.lane.b32.xlu0 %v1572, 64
  %v1954 = vpop.permute.xlu0 %1953
  %1955 = vrot.lane.b32.xlu0 %v1577, 64
  %v1956 = vpop.permute.xlu0 %1955
  %1957 = vrot.lane.b32.xlu0 %v1582, 64
  %v1958 = vpop.permute.xlu0 %1957
  %1965 = vrot.lane.b32.xlu0 %v1112, 96
  %v1966 = vpop.permute.xlu0 %1965
  %1967 = vrot.lane.b32.xlu0 %v1113, 96
  %v1968 = vpop.permute.xlu0 %1967
  %1969 = vrot.lane.b32.xlu0 %v1114, 96
  %v1970 = vpop.permute.xlu0 %1969
  %v1974 = vsel %vm1016, %v1935, %v1942
  %v1975 = vsel %vm1016, %v1936, %v1944
  %v1976 = vsel %vm1016, %v1937, %v1946
  %v1977 = vsel %vm1020, %v1974, %v1954
  %v1978 = vsel %vm1020, %v1975, %v1956
  %v1979 = vsel %vm1020, %v1976, %v1958
  %v1980 = vsel %vm1024, %v1977, %v1966
  %v1981 = vsel %vm1024, %v1978, %v1968
  %v1982 = vsel %vm1024, %v1979, %v1970
  %v1983 = vlaneseq
  %v1984 = vshrl.u32 %v1983, 7
  %v1985 = vsub.s32 0, %v1984
  %v1986 = vrot.slane %v1409, %v1985
  %1987 = vmatprep.subr.mxu0 0.0
  %1988 = vmatpush1.msra.mxu0 %v1368
  %1989 = vmatprep.subr.mxu0 0.0
  %1990 = vmatpush1.msra.mxu0 %v1369
  %1991 = vmatprep.subr.mxu0 0.0
  %1992 = vmatpush1.msra.mxu0 %v1370
  %1993 = vmatprep.subr.mxu0 0.0
  %1994 = vmatpush1.msra.mxu0 %v1371
  %1995 = vmatprep.subr.mxu0 0.0
  %1996 = vmatpush1.msra.mxu0 %v1372
  %1997 = vmatprep.subr.mxu0 0.0
  %1998 = vmatpush1.msra.mxu0 %v1373
  %1999 = vmatprep.subr.mxu0 0.0
  %2000 = vmatpush1.msra.mxu0 %v1374
  %2001 = vmatprep.subr.mxu0 0.0
  %2002 = vmatpush1.msra.mxu0 %v1375
  %2003 = vmatprep.subr.mxu0 0.0
  %2004 = vmatpush1.msra.mxu0 %v1376
  %2005 = vmatprep.subr.mxu0 0.0
  %2006 = vmatpush1.msra.mxu0 %v1377
  %2007 = vmatprep.subr.mxu0 0.0
  %2008 = vmatpush1.msra.mxu0 %v1378
  %2009 = vmatprep.subr.mxu0 0.0
  %2010 = vmatpush1.msra.mxu0 %v1379
  %2011 = vmatprep.subr.mxu0 0.0
  %2012 = vmatpush1.msra.mxu0 %v1380
  %2013 = vmatprep.subr.mxu0 0.0
  %2014 = vmatpush1.msra.mxu0 %v1381
  %2015 = vmatprep.subr.mxu0 0.0
  %2016 = vmatpush1.msra.mxu0 %v1382
  %2017 = vmatprep.subr.mxu0 0.0
  %2018 = vmatpush1.msra.mxu0 %v1383
  %2019 = vmatprep.subr.mxu0 0.0
  %2020 = vmatpush1.msra.mxu0 0.0
  %2021 = vmatprep.subr.mxu0 0.0
  %2022 = vmatpush1.msra.mxu0 0.0
  %2023 = vmatprep.subr.mxu0 0.0
  %2024 = vmatpush1.msra.mxu0 0.0
  %2025 = vmatprep.subr.mxu0 0.0
  %2026 = vmatpush1.msra.mxu0 0.0
  %2027 = vmatprep.subr.mxu0 0.0
  %2028 = vmatpush1.msra.mxu0 0.0
  %2029 = vmatprep.subr.mxu0 0.0
  %2030 = vmatpush1.msra.mxu0 0.0
  %2031 = vmatprep.subr.mxu0 0.0
  %2032 = vmatpush1.msra.mxu0 0.0
  %2033 = vmatprep.subr.mxu0 0.0
  %2034 = vmatpush1.msra.mxu0 0.0
  %2035 = vmatprep.subr.mxu0 0.0
  %2036 = vmatpush1.msra.mxu0 0.0
  %2037 = vmatprep.subr.mxu0 0.0
  %2038 = vmatpush1.msra.mxu0 0.0
  %2039 = vmatprep.subr.mxu0 0.0
  %2040 = vmatpush1.msra.mxu0 0.0
  %2041 = vmatprep.subr.mxu0 0.0
  %2042 = vmatpush1.msra.mxu0 0.0
  %2043 = vmatprep.subr.mxu0 0.0
  %2044 = vmatpush1.msra.mxu0 0.0
  %2045 = vmatprep.subr.mxu0 0.0
  %2046 = vmatpush1.msra.mxu0 0.0
  %2047 = vmatprep.subr.mxu0 0.0
  %2048 = vmatpush1.msra.mxu0 0.0
  %2049 = vmatprep.subr.mxu0 0.0
  %2050 = vmatpush1.msra.mxu0 0.0
  %2051 = vmatprep.mubr.f32.mxu0 0.0
  %2052 = vmatmul.mubr.f32.gmra.mrb[0].mxu0 %v1980
  %v2053 = vpop.f32.mrb[0].mxu0
  %v2054 = vadd.f32 %v1986, %v2053
  %v2055 = vpop.f32.mrb[0].mxu0
  %2056 = vmatprep.mubr.f32.mxu0 0.0
  %2057 = vmatmul.mubr.f32.gmra.mrb[0].mxu0 %v1981
  %v2058 = vpop.f32.mrb[0].mxu0
  %v2059 = vadd.f32 %v1986, %v2058
  %v2060 = vpop.f32.mrb[0].mxu0
  %2061 = vmatprep.mubr.f32.mxu0 0.0
  %2062 = vmatmul.mubr.f32.gmra.mrb[0].mxu0 %v1982
  %v2063 = vpop.f32.mrb[0].mxu0
  %v2064 = vadd.f32 %v1986, %v2063
  %v2065 = vpop.f32.mrb[0].mxu0
  %2066 = vdwg.mxu0
  %v2067 = vmax.f32 %v2054, 0.0
  %v2068 = vmax.f32 %v2059, 0.0
  %v2069 = vmax.f32 %v2064, 0.0
  %2073 = vrot.lane.b32.xlu0 %v1667, 32
  %v2074 = vpop.permute.xlu0 %2073
  %2075 = vrot.lane.b32.xlu0 %v1672, 32
  %v2076 = vpop.permute.xlu0 %2075
  %2077 = vrot.lane.b32.xlu0 %v1677, 32
  %v2078 = vpop.permute.xlu0 %2077
  %2085 = vrot.lane.b32.xlu0 %v1238, 64
  %v2086 = vpop.permute.xlu0 %2085
  %2087 = vrot.lane.b32.xlu0 %v1239, 64
  %v2088 = vpop.permute.xlu0 %2087
  %2089 = vrot.lane.b32.xlu0 %v1240, 64
  %v2090 = vpop.permute.xlu0 %2089
  %v2094 = vsel %vm1016, %v1492, %v2074
  %v2095 = vsel %vm1016, %v1497, %v2076
  %v2096 = vsel %vm1016, %v1502, %v2078
  %v2097 = vsel %vm1020, %v2094, %v2086
  %v2098 = vsel %vm1020, %v2095, %v2088
  %v2099 = vsel %vm1020, %v2096, %v2090
  %v2100 = vlaneseq
  %v2101 = vshrl.u32 %v2100, 7
  %v2102 = vsub.s32 1, %v2101
  %v2103 = vrot.slane %v1409, %v2102
  %v2105 = vsel %vm1024, %v2097, 0
  %v2108 = vsel %vm1024, %v2098, 0
  %v2111 = vsel %vm1024, %v2099, 0
  %2113 = vmatprep.subr.mxu0 0.0
  %2114 = vmatpush1.msra.mxu0 %v1384
  %2115 = vmatprep.subr.mxu0 0.0
  %2116 = vmatpush1.msra.mxu0 %v1385
  %2117 = vmatprep.subr.mxu0 0.0
  %2118 = vmatpush1.msra.mxu0 %v1386
  %2119 = vmatprep.subr.mxu0 0.0
  %2120 = vmatpush1.msra.mxu0 %v1387
  %2121 = vmatprep.subr.mxu0 0.0
  %2122 = vmatpush1.msra.mxu0 %v1388
  %2123 = vmatprep.subr.mxu0 0.0
  %2124 = vmatpush1.msra.mxu0 %v1389
  %2125 = vmatprep.subr.mxu0 0.0
  %2126 = vmatpush1.msra.mxu0 %v1390
  %2127 = vmatprep.subr.mxu0 0.0
  %2128 = vmatpush1.msra.mxu0 %v1391
  %2129 = vmatprep.subr.mxu0 0.0
  %2130 = vmatpush1.msra.mxu0 %v1392
  %2131 = vmatprep.subr.mxu0 0.0
  %2132 = vmatpush1.msra.mxu0 %v1393
  %2133 = vmatprep.subr.mxu0 0.0
  %2134 = vmatpush1.msra.mxu0 %v1394
  %2135 = vmatprep.subr.mxu0 0.0
  %2136 = vmatpush1.msra.mxu0 %v1395
  %2137 = vmatprep.subr.mxu0 0.0
  %2138 = vmatpush1.msra.mxu0 0.0
  %2139 = vmatprep.subr.mxu0 0.0
  %2140 = vmatpush1.msra.mxu0 0.0
  %2141 = vmatprep.subr.mxu0 0.0
  %2142 = vmatpush1.msra.mxu0 0.0
  %2143 = vmatprep.subr.mxu0 0.0
  %2144 = vmatpush1.msra.mxu0 0.0
  %2145 = vmatprep.subr.mxu0 0.0
  %2146 = vmatpush1.msra.mxu0 0.0
  %2147 = vmatprep.subr.mxu0 0.0
  %2148 = vmatpush1.msra.mxu0 0.0
  %2149 = vmatprep.subr.mxu0 0.0
  %2150 = vmatpush1.msra.mxu0 0.0
  %2151 = vmatprep.subr.mxu0 0.0
  %2152 = vmatpush1.msra.mxu0 0.0
  %2153 = vmatprep.subr.mxu0 0.0
  %2154 = vmatpush1.msra.mxu0 0.0
  %2155 = vmatprep.subr.mxu0 0.0
  %2156 = vmatpush1.msra.mxu0 0.0
  %2157 = vmatprep.subr.mxu0 0.0
  %2158 = vmatpush1.msra.mxu0 0.0
  %2159 = vmatprep.subr.mxu0 0.0
  %2160 = vmatpush1.msra.mxu0 0.0
  %2161 = vmatprep.subr.mxu0 0.0
  %2162 = vmatpush1.msra.mxu0 0.0
  %2163 = vmatprep.subr.mxu0 0.0
  %2164 = vmatpush1.msra.mxu0 0.0
  %2165 = vmatprep.subr.mxu0 0.0
  %2166 = vmatpush1.msra.mxu0 0.0
  %2167 = vmatprep.subr.mxu0 0.0
  %2168 = vmatpush1.msra.mxu0 0.0
  %2169 = vmatprep.subr.mxu0 0.0
  %2170 = vmatpush1.msra.mxu0 0.0
  %2171 = vmatprep.subr.mxu0 0.0
  %2172 = vmatpush1.msra.mxu0 0.0
  %2173 = vmatprep.subr.mxu0 0.0
  %2174 = vmatpush1.msra.mxu0 0.0
  %2175 = vmatprep.subr.mxu0 0.0
  %2176 = vmatpush1.msra.mxu0 0.0
  %2177 = vmatprep.mubr.f32.mxu0 0.0
  %2178 = vmatmul.mubr.f32.gmra.mrb[0].mxu0 %v2105
  %v2179 = vpop.f32.mrb[0].mxu0
  %v2180 = vadd.f32 %v2103, %v2179
  %v2181 = vpop.f32.mrb[0].mxu0
  %2182 = vmatprep.mubr.f32.mxu0 0.0
  %2183 = vmatmul.mubr.f32.gmra.mrb[0].mxu0 %v2108
  %v2184 = vpop.f32.mrb[0].mxu0
  %v2185 = vadd.f32 %v2103, %v2184
  %v2186 = vpop.f32.mrb[0].mxu0
  %2187 = vmatprep.mubr.f32.mxu0 0.0
  %2188 = vmatmul.mubr.f32.gmra.mrb[0].mxu0 %v2111
  %v2189 = vpop.f32.mrb[0].mxu0
  %v2190 = vadd.f32 %v2103, %v2189
  %v2191 = vpop.f32.mrb[0].mxu0
  %2192 = vdwg.mxu0
  %v2193 = vmax.f32 %v2180, 0.0
  %v2194 = vmax.f32 %v2185, 0.0
  %v2195 = vmax.f32 %v2190, 0.0
  %2199 = vrot.lane.b32.xlu0 %v1587, 32
  %v2200 = vpop.permute.xlu0 %2199
  %2201 = vrot.lane.b32.xlu0 %v1592, 32
  %v2202 = vpop.permute.xlu0 %2201
  %2203 = vrot.lane.b32.xlu0 %v1597, 32
  %v2204 = vpop.permute.xlu0 %2203
  %2211 = vrot.lane.b32.xlu0 %v1364, 64
  %v2212 = vpop.permute.xlu0 %2211
  %2213 = vrot.lane.b32.xlu0 %v1365, 64
  %v2214 = vpop.permute.xlu0 %2213
  %2215 = vrot.lane.b32.xlu0 %v1366, 64
  %v2216 = vpop.permute.xlu0 %2215
  %v2220 = vsel %vm1016, %v1682, %v2200
  %v2221 = vsel %vm1016, %v1687, %v2202
  %v2222 = vsel %vm1016, %v1692, %v2204
  %v2223 = vsel %vm1020, %v2220, %v2212
  %v2224 = vsel %vm1020, %v2221, %v2214
  %v2225 = vsel %vm1020, %v2222, %v2216
  %v2226 = vlaneseq
  %v2227 = vshrl.u32 %v2226, 7
  %v2228 = vsub.s32 2, %v2227
  %v2229 = vrot.slane %v1409, %v2228
  %v2231 = vsel %vm1024, %v2223, 0
  %v2234 = vsel %vm1024, %v2224, 0
  %v2237 = vsel %vm1024, %v2225, 0
  %2239 = vmatprep.subr.mxu0 0.0
  %2240 = vmatpush1.msra.mxu0 %v1396
  %2241 = vmatprep.subr.mxu0 0.0
  %2242 = vmatpush1.msra.mxu0 %v1397
  %2243 = vmatprep.subr.mxu0 0.0
  %2244 = vmatpush1.msra.mxu0 %v1398
  %2245 = vmatprep.subr.mxu0 0.0
  %2246 = vmatpush1.msra.mxu0 %v1399
  %2247 = vmatprep.subr.mxu0 0.0
  %2248 = vmatpush1.msra.mxu0 %v1400
  %2249 = vmatprep.subr.mxu0 0.0
  %2250 = vmatpush1.msra.mxu0 %v1401
  %2251 = vmatprep.subr.mxu0 0.0
  %2252 = vmatpush1.msra.mxu0 %v1402
  %2253 = vmatprep.subr.mxu0 0.0
  %2254 = vmatpush1.msra.mxu0 %v1403
  %2255 = vmatprep.subr.mxu0 0.0
  %2256 = vmatpush1.msra.mxu0 %v1404
  %2257 = vmatprep.subr.mxu0 0.0
  %2258 = vmatpush1.msra.mxu0 %v1405
  %2259 = vmatprep.subr.mxu0 0.0
  %2260 = vmatpush1.msra.mxu0 %v1406
  %2261 = vmatprep.subr.mxu0 0.0
  %2262 = vmatpush1.msra.mxu0 %v1407
  %2263 = vmatprep.subr.mxu0 0.0
  %2264 = vmatpush1.msra.mxu0 0.0
  %2265 = vmatprep.subr.mxu0 0.0
  %2266 = vmatpush1.msra.mxu0 0.0
  %2267 = vmatprep.subr.mxu0 0.0
  %2268 = vmatpush1.msra.mxu0 0.0
  %2269 = vmatprep.subr.mxu0 0.0
  %2270 = vmatpush1.msra.mxu0 0.0
  %2271 = vmatprep.subr.mxu0 0.0
  %2272 = vmatpush1.msra.mxu0 0.0
  %2273 = vmatprep.subr.mxu0 0.0
  %2274 = vmatpush1.msra.mxu0 0.0
  %2275 = vmatprep.subr.mxu0 0.0
  %2276 = vmatpush1.msra.mxu0 0.0
  %2277 = vmatprep.subr.mxu0 0.0
  %2278 = vmatpush1.msra.mxu0 0.0
  %2279 = vmatprep.subr.mxu0 0.0
  %2280 = vmatpush1.msra.mxu0 0.0
  %2281 = vmatprep.subr.mxu0 0.0
  %2282 = vmatpush1.msra.mxu0 0.0
  %2283 = vmatprep.subr.mxu0 0.0
  %2284 = vmatpush1.msra.mxu0 0.0
  %2285 = vmatprep.subr.mxu0 0.0
  %2286 = vmatpush1.msra.mxu0 0.0
  %2287 = vmatprep.subr.mxu0 0.0
  %2288 = vmatpush1.msra.mxu0 0.0
  %2289 = vmatprep.subr.mxu0 0.0
  %2290 = vmatpush1.msra.mxu0 0.0
  %2291 = vmatprep.subr.mxu0 0.0
  %2292 = vmatpush1.msra.mxu0 0.0
  %2293 = vmatprep.subr.mxu0 0.0
  %2294 = vmatpush1.msra.mxu0 0.0
  %2295 = vmatprep.subr.mxu0 0.0
  %2296 = vmatpush1.msra.mxu0 0.0
  %2297 = vmatprep.subr.mxu0 0.0
  %2298 = vmatpush1.msra.mxu0 0.0
  %2299 = vmatprep.subr.mxu0 0.0
  %2300 = vmatpush1.msra.mxu0 0.0
  %2301 = vmatprep.subr.mxu0 0.0
  %2302 = vmatpush1.msra.mxu0 0.0
  %2303 = vmatprep.mubr.f32.mxu0 0.0
  %2304 = vmatmul.mubr.f32.gmra.mrb[0].mxu0 %v2231
  %v2305 = vpop.f32.mrb[0].mxu0
  %v2306 = vadd.f32 %v2229, %v2305
  %v2307 = vpop.f32.mrb[0].mxu0
  %2308 = vmatprep.mubr.f32.mxu0 0.0
  %2309 = vmatmul.mubr.f32.gmra.mrb[0].mxu0 %v2234
  %v2310 = vpop.f32.mrb[0].mxu0
  %v2311 = vadd.f32 %v2229, %v2310
  %v2312 = vpop.f32.mrb[0].mxu0
  %2313 = vmatprep.mubr.f32.mxu0 0.0
  %2314 = vmatmul.mubr.f32.gmra.mrb[0].mxu0 %v2237
  %v2315 = vpop.f32.mrb[0].mxu0
  %v2316 = vadd.f32 %v2229, %v2315
  %v2317 = vpop.f32.mrb[0].mxu0
  %2318 = vdwg.mxu0
  %v2319 = vmax.f32 %v2306, 0.0
  %v2320 = vmax.f32 %v2311, 0.0
  %v2321 = vmax.f32 %v2316, 0.0
  %v2322 = vld [vmem:[%s7] sm:$0xff]
  %v2323 = vld [vmem:[%s7 + $0x8] sm:$0xff]
  %v2324 = vld [vmem:[%s7 + $0x10] sm:$0xff]
  %v2325 = vld [vmem:[%s7 + $0x18] sm:$0xff]
  %v2326 = vld [vmem:[%s8] sm:$0x1]
  %v2328 = vlaneseq
  %v2329 = vshrl.u32 %v2328, 7
  %v2330 = vsub.s32 0, %v2329
  %v2331 = vrot.slane %v2326, %v2330
  %v2334 = vsel %vm1016, %v2067, 0
  %v2337 = vsel %vm1016, %v2068, 0
  %v2340 = vsel %vm1016, %v2069, 0
  %2342 = vmatprep.subr.mxu0 0.0
  %2343 = vmatpush1.msra.mxu0 %v2322
  %2344 = vmatprep.subr.mxu0 0.0
  %2345 = vmatpush1.msra.mxu0 %v2323
  %2346 = vmatprep.subr.mxu0 0.0
  %2347 = vmatpush1.msra.mxu0 %v2324
  %2348 = vmatprep.subr.mxu0 0.0
  %2349 = vmatpush1.msra.mxu0 %v2325
  %2350 = vmatprep.subr.mxu0 0.0
  %2351 = vmatpush1.msra.mxu0 0.0
  %2352 = vmatprep.subr.mxu0 0.0
  %2353 = vmatpush1.msra.mxu0 0.0
  %2354 = vmatprep.subr.mxu0 0.0
  %2355 = vmatpush1.msra.mxu0 0.0
  %2356 = vmatprep.subr.mxu0 0.0
  %2357 = vmatpush1.msra.mxu0 0.0
  %2358 = vmatprep.subr.mxu0 0.0
  %2359 = vmatpush1.msra.mxu0 0.0
  %2360 = vmatprep.subr.mxu0 0.0
  %2361 = vmatpush1.msra.mxu0 0.0
  %2362 = vmatprep.subr.mxu0 0.0
  %2363 = vmatpush1.msra.mxu0 0.0
  %2364 = vmatprep.subr.mxu0 0.0
  %2365 = vmatpush1.msra.mxu0 0.0
  %2366 = vmatprep.subr.mxu0 0.0
  %2367 = vmatpush1.msra.mxu0 0.0
  %2368 = vmatprep.subr.mxu0 0.0
  %2369 = vmatpush1.msra.mxu0 0.0
  %2370 = vmatprep.subr.mxu0 0.0
  %2371 = vmatpush1.msra.mxu0 0.0
  %2372 = vmatprep.subr.mxu0 0.0
  %2373 = vmatpush1.msra.mxu0 0.0
  %2374 = vmatprep.subr.mxu0 0.0
  %2375 = vmatpush1.msra.mxu0 0.0
  %2376 = vmatprep.subr.mxu0 0.0
  %2377 = vmatpush1.msra.mxu0 0.0
  %2378 = vmatprep.subr.mxu0 0.0
  %2379 = vmatpush1.msra.mxu0 0.0
  %2380 = vmatprep.subr.mxu0 0.0
  %2381 = vmatpush1.msra.mxu0 0.0
  %2382 = vmatprep.subr.mxu0 0.0
  %2383 = vmatpush1.msra.mxu0 0.0
  %2384 = vmatprep.subr.mxu0 0.0
  %2385 = vmatpush1.msra.mxu0 0.0
  %2386 = vmatprep.subr.mxu0 0.0
  %2387 = vmatpush1.msra.mxu0 0.0
  %2388 = vmatprep.subr.mxu0 0.0
  %2389 = vmatpush1.msra.mxu0 0.0
  %2390 = vmatprep.subr.mxu0 0.0
  %2391 = vmatpush1.msra.mxu0 0.0
  %2392 = vmatprep.subr.mxu0 0.0
  %2393 = vmatpush1.msra.mxu0 0.0
  %2394 = vmatprep.subr.mxu0 0.0
  %2395 = vmatpush1.msra.mxu0 0.0
  %2396 = vmatprep.subr.mxu0 0.0
  %2397 = vmatpush1.msra.mxu0 0.0
  %2398 = vmatprep.subr.mxu0 0.0
  %2399 = vmatpush1.msra.mxu0 0.0
  %2400 = vmatprep.subr.mxu0 0.0
  %2401 = vmatpush1.msra.mxu0 0.0
  %2402 = vmatprep.subr.mxu0 0.0
  %2403 = vmatpush1.msra.mxu0 0.0
  %2404 = vmatprep.subr.mxu0 0.0
  %2405 = vmatpush1.msra.mxu0 0.0
  %2406 = vmatprep.mubr.f32.mxu0 0.0
  %2407 = vmatmul.mubr.f32.gmra.mrb[0].mxu0 %v2334
  %v2408 = vpop.f32.mrb[0].mxu0
  %v2409 = vadd.f32 %v2331, %v2408
  %v2410 = vpop.f32.mrb[0].mxu0
  %2411 = vmatprep.mubr.f32.mxu0 0.0
  %2412 = vmatmul.mubr.f32.gmra.mrb[0].mxu0 %v2337
  %v2413 = vpop.f32.mrb[0].mxu0
  %v2414 = vadd.f32 %v2331, %v2413
  %v2415 = vpop.f32.mrb[0].mxu0
  %2416 = vmatprep.mubr.f32.mxu0 0.0
  %2417 = vmatmul.mubr.f32.gmra.mrb[0].mxu0 %v2340
  %v2418 = vpop.f32.mrb[0].mxu0
  %v2419 = vadd.f32 %v2331, %v2418
  %v2420 = vpop.f32.mrb[0].mxu0
  %2421 = vdwg.mxu0
  %v2422 = vmax.f32 %v2409, 0.0
  %v2423 = vmax.f32 %v2414, 0.0
  %v2424 = vmax.f32 %v2419, 0.0
  %s2425 = scalar_lea.vmem %s7, 32
  %v2426 = vld [vmem:[%s2425] sm:$0xff]
  %v2427 = vld [vmem:[%s2425 + $0x8] sm:$0xff]
  %v2428 = vld [vmem:[%s2425 + $0x10] sm:$0xff]
  %v2429 = vld [vmem:[%s2425 + $0x18] sm:$0xff]
  %s2430 = scalar_lea.vmem %s8, 1
  %v2431 = vld [vmem:[%s2430] sm:$0x1]
  %v2433 = vlaneseq
  %v2434 = vshrl.u32 %v2433, 7
  %v2435 = vsub.s32 0, %v2434
  %v2436 = vrot.slane %v2431, %v2435
  %v2439 = vsel %vm1016, %v2422, 0
  %v2442 = vsel %vm1016, %v2423, 0
  %v2445 = vsel %vm1016, %v2424, 0
  %2447 = vmatprep.subr.mxu0 0.0
  %2448 = vmatpush1.msra.mxu0 %v2426
  %2449 = vmatprep.subr.mxu0 0.0
  %2450 = vmatpush1.msra.mxu0 %v2427
  %2451 = vmatprep.subr.mxu0 0.0
  %2452 = vmatpush1.msra.mxu0 %v2428
  %2453 = vmatprep.subr.mxu0 0.0
  %2454 = vmatpush1.msra.mxu0 %v2429
  %2455 = vmatprep.subr.mxu0 0.0
  %2456 = vmatpush1.msra.mxu0 0.0
  %2457 = vmatprep.subr.mxu0 0.0
  %2458 = vmatpush1.msra.mxu0 0.0
  %2459 = vmatprep.subr.mxu0 0.0
  %2460 = vmatpush1.msra.mxu0 0.0
  %2461 = vmatprep.subr.mxu0 0.0
  %2462 = vmatpush1.msra.mxu0 0.0
  %2463 = vmatprep.subr.mxu0 0.0
  %2464 = vmatpush1.msra.mxu0 0.0
  %2465 = vmatprep.subr.mxu0 0.0
  %2466 = vmatpush1.msra.mxu0 0.0
  %2467 = vmatprep.subr.mxu0 0.0
  %2468 = vmatpush1.msra.mxu0 0.0
  %2469 = vmatprep.subr.mxu0 0.0
  %2470 = vmatpush1.msra.mxu0 0.0
  %2471 = vmatprep.subr.mxu0 0.0
  %2472 = vmatpush1.msra.mxu0 0.0
  %2473 = vmatprep.subr.mxu0 0.0
  %2474 = vmatpush1.msra.mxu0 0.0
  %2475 = vmatprep.subr.mxu0 0.0
  %2476 = vmatpush1.msra.mxu0 0.0
  %2477 = vmatprep.subr.mxu0 0.0
  %2478 = vmatpush1.msra.mxu0 0.0
  %2479 = vmatprep.subr.mxu0 0.0
  %2480 = vmatpush1.msra.mxu0 0.0
  %2481 = vmatprep.subr.mxu0 0.0
  %2482 = vmatpush1.msra.mxu0 0.0
  %2483 = vmatprep.subr.mxu0 0.0
  %2484 = vmatpush1.msra.mxu0 0.0
  %2485 = vmatprep.subr.mxu0 0.0
  %2486 = vmatpush1.msra.mxu0 0.0
  %2487 = vmatprep.subr.mxu0 0.0
  %2488 = vmatpush1.msra.mxu0 0.0
  %2489 = vmatprep.subr.mxu0 0.0
  %2490 = vmatpush1.msra.mxu0 0.0
  %2491 = vmatprep.subr.mxu0 0.0
  %2492 = vmatpush1.msra.mxu0 0.0
  %2493 = vmatprep.subr.mxu0 0.0
  %2494 = vmatpush1.msra.mxu0 0.0
  %2495 = vmatprep.subr.mxu0 0.0
  %2496 = vmatpush1.msra.mxu0 0.0
  %2497 = vmatprep.subr.mxu0 0.0
  %2498 = vmatpush1.msra.mxu0 0.0
  %2499 = vmatprep.subr.mxu0 0.0
  %2500 = vmatpush1.msra.mxu0 0.0
  %2501 = vmatprep.subr.mxu0 0.0
  %2502 = vmatpush1.msra.mxu0 0.0
  %2503 = vmatprep.subr.mxu0 0.0
  %2504 = vmatpush1.msra.mxu0 0.0
  %2505 = vmatprep.subr.mxu0 0.0
  %2506 = vmatpush1.msra.mxu0 0.0
  %2507 = vmatprep.subr.mxu0 0.0
  %2508 = vmatpush1.msra.mxu0 0.0
  %2509 = vmatprep.subr.mxu0 0.0
  %2510 = vmatpush1.msra.mxu0 0.0
  %2511 = vmatprep.mubr.f32.mxu0 0.0
  %2512 = vmatmul.mubr.f32.gmra.mrb[0].mxu0 %v2439
  %v2513 = vpop.f32.mrb[0].mxu0
  %v2514 = vadd.f32 %v2436, %v2513
  %v2515 = vpop.f32.mrb[0].mxu0
  %2516 = vmatprep.mubr.f32.mxu0 0.0
  %2517 = vmatmul.mubr.f32.gmra.mrb[0].mxu0 %v2442
  %v2518 = vpop.f32.mrb[0].mxu0
  %v2519 = vadd.f32 %v2436, %v2518
  %v2520 = vpop.f32.mrb[0].mxu0
  %2521 = vmatprep.mubr.f32.mxu0 0.0
  %2522 = vmatmul.mubr.f32.gmra.mrb[0].mxu0 %v2445
  %v2523 = vpop.f32.mrb[0].mxu0
  %v2524 = vadd.f32 %v2436, %v2523
  %v2525 = vpop.f32.mrb[0].mxu0
  %2526 = vdwg.mxu0
  %v2527 = vmax.f32 %v2514, 0.0
  %v2528 = vmax.f32 %v2519, 0.0
  %v2529 = vmax.f32 %v2524, 0.0
  %s2530 = scalar_lea.vmem %s7, 64
  %v2531 = vld [vmem:[%s2530] sm:$0xff]
  %v2532 = vld [vmem:[%s2530 + $0x8] sm:$0xff]
  %v2533 = vld [vmem:[%s2530 + $0x10] sm:$0xff]
  %v2534 = vld [vmem:[%s2530 + $0x18] sm:$0xff]
  %s2535 = scalar_lea.vmem %s8, 2
  %v2536 = vld [vmem:[%s2535] sm:$0x1]
  %v2538 = vlaneseq
  %v2539 = vshrl.u32 %v2538, 7
  %v2540 = vsub.s32 0, %v2539
  %v2541 = vrot.slane %v2536, %v2540
  %v2544 = vsel %vm1016, %v2527, 0
  %v2547 = vsel %vm1016, %v2528, 0
  %v2550 = vsel %vm1016, %v2529, 0
  %2552 = vmatprep.subr.mxu0 0.0
  %2553 = vmatpush1.msra.mxu0 %v2531
  %2554 = vmatprep.subr.mxu0 0.0
  %2555 = vmatpush1.msra.mxu0 %v2532
  %2556 = vmatprep.subr.mxu0 0.0
  %2557 = vmatpush1.msra.mxu0 %v2533
  %2558 = vmatprep.subr.mxu0 0.0
  %2559 = vmatpush1.msra.mxu0 %v2534
  %2560 = vmatprep.subr.mxu0 0.0
  %2561 = vmatpush1.msra.mxu0 0.0
  %2562 = vmatprep.subr.mxu0 0.0
  %2563 = vmatpush1.msra.mxu0 0.0
  %2564 = vmatprep.subr.mxu0 0.0
  %2565 = vmatpush1.msra.mxu0 0.0
  %2566 = vmatprep.subr.mxu0 0.0
  %2567 = vmatpush1.msra.mxu0 0.0
  %2568 = vmatprep.subr.mxu0 0.0
  %2569 = vmatpush1.msra.mxu0 0.0
  %2570 = vmatprep.subr.mxu0 0.0
  %2571 = vmatpush1.msra.mxu0 0.0
  %2572 = vmatprep.subr.mxu0 0.0
  %2573 = vmatpush1.msra.mxu0 0.0
  %2574 = vmatprep.subr.mxu0 0.0
  %2575 = vmatpush1.msra.mxu0 0.0
  %2576 = vmatprep.subr.mxu0 0.0
  %2577 = vmatpush1.msra.mxu0 0.0
  %2578 = vmatprep.subr.mxu0 0.0
  %2579 = vmatpush1.msra.mxu0 0.0
  %2580 = vmatprep.subr.mxu0 0.0
  %2581 = vmatpush1.msra.mxu0 0.0
  %2582 = vmatprep.subr.mxu0 0.0
  %2583 = vmatpush1.msra.mxu0 0.0
  %2584 = vmatprep.subr.mxu0 0.0
  %2585 = vmatpush1.msra.mxu0 0.0
  %2586 = vmatprep.subr.mxu0 0.0
  %2587 = vmatpush1.msra.mxu0 0.0
  %2588 = vmatprep.subr.mxu0 0.0
  %2589 = vmatpush1.msra.mxu0 0.0
  %2590 = vmatprep.subr.mxu0 0.0
  %2591 = vmatpush1.msra.mxu0 0.0
  %2592 = vmatprep.subr.mxu0 0.0
  %2593 = vmatpush1.msra.mxu0 0.0
  %2594 = vmatprep.subr.mxu0 0.0
  %2595 = vmatpush1.msra.mxu0 0.0
  %2596 = vmatprep.subr.mxu0 0.0
  %2597 = vmatpush1.msra.mxu0 0.0
  %2598 = vmatprep.subr.mxu0 0.0
  %2599 = vmatpush1.msra.mxu0 0.0
  %2600 = vmatprep.subr.mxu0 0.0
  %2601 = vmatpush1.msra.mxu0 0.0
  %2602 = vmatprep.subr.mxu0 0.0
  %2603 = vmatpush1.msra.mxu0 0.0
  %2604 = vmatprep.subr.mxu0 0.0
  %2605 = vmatpush1.msra.mxu0 0.0
  %2606 = vmatprep.subr.mxu0 0.0
  %2607 = vmatpush1.msra.mxu0 0.0
  %2608 = vmatprep.subr.mxu0 0.0
  %2609 = vmatpush1.msra.mxu0 0.0
  %2610 = vmatprep.subr.mxu0 0.0
  %2611 = vmatpush1.msra.mxu0 0.0
  %2612 = vmatprep.subr.mxu0 0.0
  %2613 = vmatpush1.msra.mxu0 0.0
  %2614 = vmatprep.subr.mxu0 0.0
  %2615 = vmatpush1.msra.mxu0 0.0
  %2616 = vmatprep.mubr.f32.mxu0 0.0
  %2617 = vmatmul.mubr.f32.gmra.mrb[0].mxu0 %v2544
  %v2618 = vpop.f32.mrb[0].mxu0
  %v2619 = vadd.f32 %v2541, %v2618
  %v2620 = vpop.f32.mrb[0].mxu0
  %2621 = vmatprep.mubr.f32.mxu0 0.0
  %2622 = vmatmul.mubr.f32.gmra.mrb[0].mxu0 %v2547
  %v2623 = vpop.f32.mrb[0].mxu0
  %v2624 = vadd.f32 %v2541, %v2623
  %v2625 = vpop.f32.mrb[0].mxu0
  %2626 = vmatprep.mubr.f32.mxu0 0.0
  %2627 = vmatmul.mubr.f32.gmra.mrb[0].mxu0 %v2550
  %v2628 = vpop.f32.mrb[0].mxu0
  %v2629 = vadd.f32 %v2541, %v2628
  %v2630 = vpop.f32.mrb[0].mxu0
  %2631 = vdwg.mxu0
  %2632 = vst.msk [vmem:[%s9] sm:$0xff] %vm1016, %v2619
  %2633 = vst.msk [vmem:[%s9 + $0x8] sm:$0xff] %vm1016, %v2624
  %2634 = vst.msk [vmem:[%s9 + $0x10] sm:$0xff] %vm1016, %v2629
  %2635 = vst.msk [vmem:[%s9 + $0x18] sm:$0xff] %vm1016, %v2193
  %2636 = vst.msk [vmem:[%s9 + $0x20] sm:$0xff] %vm1016, %v2194
  %2637 = vst.msk [vmem:[%s9 + $0x28] sm:$0xff] %vm1016, %v2195
  %2638 = vst.msk [vmem:[%s9 + $0x30] sm:$0xff] %vm1016, %v2319
  %2639 = vst.msk [vmem:[%s9 + $0x38] sm:$0xff] %vm1016, %v2320
  %2640 = vst.msk [vmem:[%s9 + $0x40] sm:$0xff] %vm1016, %v2321
  // Predicated region
  $region38: #{tpu_custom_call.1} parent=0 // pred_check
    _
  $region39: #{tpu_custom_call.1} parent=0 // pred_check_branch
    %2642 = sbr.rel (0) target = $region41
  $region40: #{tpu_custom_call.1} parent=0 // pred_region
    _
  $region41: #{tpu_custom_call.1} parent=0 // pred_fallthru
    _
  // Predicated region
  $region42: #{tpu_custom_call.1} parent=0 // pred_check
    _
  $region43: #{tpu_custom_call.1} parent=0 // pred_check_branch
    %2644 = sbr.rel (0) target = $region45
  $region44: #{tpu_custom_call.1} parent=0 // pred_region
    _
  $region45: #{tpu_custom_call.1} parent=0 // pred_fallthru
    _

</llo_original>
